<compile_context>
chip_gen: v7x
topology: tpu7x:2x2x1
jax: 0.10.0
libtpu: 0.0.40
codegen_flags: <defaults>
</compile_context>

<pallas_src>
import functools

import jax
import jax.numpy as jnp
from jax.experimental import pallas as pl
from jax.experimental.pallas import tpu as pltpu

LN_EPS = 1e-5  # torch.nn.LayerNorm default


def encoder_layers_kernel(
    x_ref, maskb_ref,
    wq_ref, wk_ref, wv_ref,
    wo_ref, bo_ref,
    g1_ref, b1_ref,
    w1_ref, bf1_ref, w2_ref, bf2_ref,
    g2_ref, b2_ref,
    out_ref,
    *, n_batch, seq, embed, heads, head_dim,
):
    layer = pl.program_id(0)

    # Layer 0: load the embedding activation into the resident output block.
    @pl.when(layer == 0)
    def _():
        out_ref[...] = x_ref[...]

    x2 = out_ref[...]                                  # (N*S, E), resident across layers
    rows = n_batch * seq
    nh = n_batch * heads
    scale = 1.0 / (embed ** 0.5)

    wq = wq_ref[0]                                     # (d, d), shared across heads
    wk = wk_ref[0]
    wv = wv_ref[0]
    wo3 = wo_ref[0]                                    # (heads, d, E)
    bo = bo_ref[0]                                     # (1, E)

    # ---- self-attention -------------------------------------------------
    # Split heads once (static lane slices), stacked along a new leading axis.
    xh = jnp.stack(
        [x2[:, h * head_dim:(h + 1) * head_dim] for h in range(heads)], axis=0)
    xh_flat = xh.reshape(heads * rows, head_dim)       # row = h*(N*S) + n*S + s

    # Shared-per-head projections as single wide matmuls; scale folded into q.
    q = jnp.dot(xh_flat, wq, preferred_element_type=jnp.float32) * scale
    k = jnp.dot(xh_flat, wk, preferred_element_type=jnp.float32)
    v = jnp.dot(xh_flat, wv, preferred_element_type=jnp.float32)

    q3 = q.reshape(nh, seq, head_dim)                  # batch index b = h*N + n
    k3 = k.reshape(nh, seq, head_dim)
    v3 = v.reshape(nh, seq, head_dim)

    scores = jnp.einsum('bqd,bkd->bqk', q3, k3,
                        preferred_element_type=jnp.float32)        # (NH, S, S)

    # masked_fill(-1e20) happens before the /sqrt(E) in torch; since scale is folded
    # into q already, the equivalent fill value is -1e20 * scale.
    keep = maskb_ref[...] != 0.0                                   # (NH, 1, S)
    scores = jnp.where(keep, scores, jnp.float32(-1e20) * scale)

    m = jnp.max(scores, axis=-1, keepdims=True)
    e = jnp.exp(scores - m)
    attn = e * pl.reciprocal(jnp.sum(e, axis=-1, keepdims=True), approx=True)

    ctx = jnp.einsum('bqk,bkd->bqd', attn, v3,
                     preferred_element_type=jnp.float32)           # (NH, S, d)

    # Output projection with the head-concat folded into the contraction:
    # attn_out = sum_h ctx_h @ wo[h*d:(h+1)*d, :]   (no lane-axis concatenate).
    ctx3 = ctx.reshape(heads, rows, head_dim)
    proj = jnp.einsum('hrd,hde->hre', ctx3, wo3,
                      preferred_element_type=jnp.float32)          # (heads, rows, E)
    attn_out = jnp.sum(proj, axis=0) + bo                          # (rows, E)

    # ---- residual + LayerNorm 1 ------------------------------------------
    h1 = attn_out + x2
    mu1 = jnp.mean(h1, axis=-1, keepdims=True)
    var1 = jnp.mean((h1 - mu1) ** 2, axis=-1, keepdims=True)
    n1 = (h1 - mu1) * jax.lax.rsqrt(var1 + LN_EPS) * g1_ref[0] + b1_ref[0]

    # ---- feed-forward: Linear -> ReLU -> Linear ---------------------------
    ff = jnp.dot(n1, w1_ref[0], preferred_element_type=jnp.float32) + bf1_ref[0]
    ff = jnp.maximum(ff, 0.0)
    ff = jnp.dot(ff, w2_ref[0], preferred_element_type=jnp.float32) + bf2_ref[0]

    # ---- residual + LayerNorm 2 --------------------------------------------
    h2 = ff + n1
    mu2 = jnp.mean(h2, axis=-1, keepdims=True)
    var2 = jnp.mean((h2 - mu2) ** 2, axis=-1, keepdims=True)
    n2 = (h2 - mu2) * jax.lax.rsqrt(var2 + LN_EPS) * g2_ref[0] + b2_ref[0]

    out_ref[...] = n2.astype(out_ref.dtype)


def init_encoder_params(key, *, src_vocab_size, embed_size, num_layers, heads,
                        expansion_factor, max_length):
    d = embed_size // heads
    hidden = embed_size * expansion_factor
    keys = jax.random.split(key, 2 + num_layers)

    word_emb = jax.random.normal(keys[0], (src_vocab_size, embed_size), jnp.float32) * 0.02
    pos_emb = jax.random.normal(keys[1], (max_length, embed_size), jnp.float32) * 0.02

    def one_layer(k):
        ks = jax.random.split(k, 8)
        wo = jax.random.normal(ks[3], (embed_size, embed_size), jnp.float32) * 0.1
        return dict(
            wq=jax.random.normal(ks[0], (d, d), jnp.float32) * 0.1,
            wk=jax.random.normal(ks[1], (d, d), jnp.float32) * 0.1,
            wv=jax.random.normal(ks[2], (d, d), jnp.float32) * 0.1,
            # wo stored head-major on the input-feature axis so the kernel can fold
            # the head concat into the contraction.
            wo=wo.reshape(heads, d, embed_size),
            bo=jax.random.normal(ks[4], (1, embed_size), jnp.float32) * 0.01,
            g1=jnp.ones((1, embed_size), jnp.float32),
            b1=jnp.zeros((1, embed_size), jnp.float32),
            w1=jax.random.normal(ks[5], (embed_size, hidden), jnp.float32) * 0.1,
            bf1=jax.random.normal(ks[6], (1, hidden), jnp.float32) * 0.01,
            w2=jax.random.normal(ks[7], (hidden, embed_size), jnp.float32) * 0.1,
            bf2=jnp.zeros((1, embed_size), jnp.float32),
            g2=jnp.ones((1, embed_size), jnp.float32),
            b2=jnp.zeros((1, embed_size), jnp.float32),
        )

    layer_dicts = [one_layer(keys[2 + i]) for i in range(num_layers)]
    stacked = {name: jnp.stack([ld[name] for ld in layer_dicts], axis=0)
               for name in layer_dicts[0]}
    return word_emb, pos_emb, stacked


def encoder_forward(token_ids, mask, word_emb, pos_emb, params, *,
                    heads, embed_size):
    """token_ids: (N, S) int32; mask: (N, 1, S) float32 (1 = keep, 0 = mask)."""
    N, S = token_ids.shape
    E = embed_size
    head_dim = E // heads
    L = params['wq'].shape[0]
    H = params['w1'].shape[-1]
    rows = N * S

    # Embedding gather stays in plain JAX (glue).
    positions = jnp.arange(S, dtype=jnp.int32)[None, :]
    emb = word_emb[token_ids] + pos_emb[positions]               # (N, S, E)
    # TODO(synk): dropout on embeddings treated as identity (eval mode)
    x2 = emb.reshape(rows, E)                                    # flat activation slab

    # Broadcast mask to the in-kernel head-batch layout b = h*N + n (hoisted out of
    # the kernel so only one compare/select happens per layer).
    mask_b = jnp.broadcast_to(mask[None], (heads, N, 1, S)).reshape(heads * N, 1, S)

    kernel = functools.partial(
        encoder_layers_kernel,
        n_batch=N, seq=S, embed=E, heads=heads, head_dim=head_dim)

    act_map = lambda l: (0, 0)            # activation resident across the layer axis
    maskb_map = lambda l: (0, 0, 0)
    layer_map3 = lambda l: (l, 0, 0)
    layer_map4 = lambda l: (l, 0, 0, 0)

    in_specs = [
        pl.BlockSpec((rows, E), act_map),                       # x (embeddings)
        pl.BlockSpec((heads * N, 1, S), maskb_map),             # mask
        pl.BlockSpec((1, head_dim, head_dim), layer_map3),      # wq
        pl.BlockSpec((1, head_dim, head_dim), layer_map3),      # wk
        pl.BlockSpec((1, head_dim, head_dim), layer_map3),      # wv
        pl.BlockSpec((1, heads, head_dim, E), layer_map4),      # wo (heads, d, E)
        pl.BlockSpec((1, 1, E), layer_map3),                    # bo
        pl.BlockSpec((1, 1, E), layer_map3),                    # ln1 gamma
        pl.BlockSpec((1, 1, E), layer_map3),                    # ln1 beta
        pl.BlockSpec((1, E, H), layer_map3),                    # ff w1
        pl.BlockSpec((1, 1, H), layer_map3),                    # ff b1
        pl.BlockSpec((1, H, E), layer_map3),                    # ff w2
        pl.BlockSpec((1, 1, E), layer_map3),                    # ff b2
        pl.BlockSpec((1, 1, E), layer_map3),                    # ln2 gamma
        pl.BlockSpec((1, 1, E), layer_map3),                    # ln2 beta
    ]

    out = pl.pallas_call(
        kernel,
        out_shape=jax.ShapeDtypeStruct((rows, E), jnp.float32),
        grid=(L,),
        in_specs=in_specs,
        out_specs=pl.BlockSpec((rows, E), act_map),
        compiler_params=pltpu.CompilerParams(
            dimension_semantics=("arbitrary",)),                # layers are sequential
    )(x2, mask_b,
      params['wq'], params['wk'], params['wv'],
      params['wo'], params['bo'],
      params['g1'], params['b1'],
      params['w1'], params['bf1'], params['w2'], params['bf2'],
      params['g2'], params['b2'])

    return out.reshape(N, S, E)


if __name__ == "__main__":
    # Small shapes consistent with the module
    batch = 2
    seq = 8
    embed_size = 32
    heads = 4
    num_layers = 2
    expansion_factor = 4
    src_vocab_size = 50
    max_length = 16

    key = jax.random.PRNGKey(0)
    k_param, k_tok = jax.random.split(key)

    word_emb, pos_emb, params = init_encoder_params(
        k_param,
        src_vocab_size=src_vocab_size, embed_size=embed_size,
        num_layers=num_layers, heads=heads,
        expansion_factor=expansion_factor, max_length=max_length,
    )

    token_ids = jax.random.randint(k_tok, (batch, seq), 0, src_vocab_size, jnp.int32)
    # keep everything except mask out the last key position of the 2nd example
    mask = jnp.ones((batch, 1, seq), jnp.float32).at[1, 0, seq - 1].set(0.0)

    out = encoder_forward(token_ids, mask, word_emb, pos_emb, params,
                          heads=heads, embed_size=embed_size)
    out = jax.block_until_ready(out)
    assert out.shape == (batch, seq, embed_size)
    assert bool(jnp.all(jnp.isfinite(out)))
    print("KERNEL_OK")
</pallas_src>

<mosaic_0001>
module attributes {stable_mosaic.version = 11 : i64} {
  func.func @encoder_layers_kernel(%arg0: i32, %arg1: memref<16x32xf32, #tpu.memory_space<vmem>>, %arg2: memref<8x1x8xf32, #tpu.memory_space<vmem>>, %arg3: memref<1x8x8xf32, #tpu.memory_space<vmem>>, %arg4: memref<1x8x8xf32, #tpu.memory_space<vmem>>, %arg5: memref<1x8x8xf32, #tpu.memory_space<vmem>>, %arg6: memref<1x4x8x32xf32, #tpu.memory_space<vmem>>, %arg7: memref<1x1x32xf32, #tpu.memory_space<vmem>>, %arg8: memref<1x1x32xf32, #tpu.memory_space<vmem>>, %arg9: memref<1x1x32xf32, #tpu.memory_space<vmem>>, %arg10: memref<1x32x128xf32, #tpu.memory_space<vmem>>, %arg11: memref<1x1x128xf32, #tpu.memory_space<vmem>>, %arg12: memref<1x128x32xf32, #tpu.memory_space<vmem>>, %arg13: memref<1x1x32xf32, #tpu.memory_space<vmem>>, %arg14: memref<1x1x32xf32, #tpu.memory_space<vmem>>, %arg15: memref<1x1x32xf32, #tpu.memory_space<vmem>>, %arg16: memref<16x32xf32, #tpu.memory_space<vmem>>) attributes {dimension_semantics = [#tpu.dimension_semantics<arbitrary>], iteration_bounds = array<i64: 2>, scalar_prefetch = 0 : i64, scratch_operands = 0 : i64, tpu.core_type = #tpu.core_type<tc>, window_params = [{pipeline_mode = #tpu.pipeline_mode<synchronous>, transform_indices = @transform_0, window_bounds = array<i64: 16, 32>}, {pipeline_mode = #tpu.pipeline_mode<synchronous>, transform_indices = @transform_1, window_bounds = array<i64: 8, 1, 8>}, {transform_indices = @transform_2, window_bounds = array<i64: 1, 8, 8>}, {transform_indices = @transform_3, window_bounds = array<i64: 1, 8, 8>}, {transform_indices = @transform_4, window_bounds = array<i64: 1, 8, 8>}, {transform_indices = @transform_5, window_bounds = array<i64: 1, 4, 8, 32>}, {transform_indices = @transform_6, window_bounds = array<i64: 1, 1, 32>}, {transform_indices = @transform_7, window_bounds = array<i64: 1, 1, 32>}, {transform_indices = @transform_8, window_bounds = array<i64: 1, 1, 32>}, {transform_indices = @transform_9, window_bounds = array<i64: 1, 32, 128>}, {transform_indices = @transform_10, window_bounds = array<i64: 1, 1, 128>}, {transform_indices = @transform_11, window_bounds = array<i64: 1, 128, 32>}, {transform_indices = @transform_12, window_bounds = array<i64: 1, 1, 32>}, {transform_indices = @transform_13, window_bounds = array<i64: 1, 1, 32>}, {transform_indices = @transform_14, window_bounds = array<i64: 1, 1, 32>}, {pipeline_mode = #tpu.pipeline_mode<synchronous>, transform_indices = @transform_15, window_bounds = array<i64: 16, 32>}]} {
    %c0_i32 = arith.constant 0 : i32
    %0 = arith.cmpi eq, %arg0, %c0_i32 : i32
    %1 = arith.extui %0 : i1 to i32
    %c0_i32_0 = arith.constant 0 : i32
    %2 = arith.cmpi ne, %1, %c0_i32_0 : i32
    scf.if %2 {
      %c0_72 = arith.constant 0 : index
      %c0_73 = arith.constant 0 : index
      %128 = vector.load %arg1[%c0_72, %c0_73] : memref<16x32xf32, #tpu.memory_space<vmem>>, vector<16x32xf32>
      %c0_74 = arith.constant 0 : index
      %c0_75 = arith.constant 0 : index
      %129 = vector.load %arg16[%c0_74, %c0_75] : memref<16x32xf32, #tpu.memory_space<vmem>>, vector<16x32xf32>
      tpu.vector_store %arg16[%c0_74, %c0_75], %128 {strides = array<i32>} : memref<16x32xf32, #tpu.memory_space<vmem>>, vector<16x32xf32>,
    } else {
    }
    %c0 = arith.constant 0 : index
    %c0_1 = arith.constant 0 : index
    %3 = vector.load %arg16[%c0, %c0_1] : memref<16x32xf32, #tpu.memory_space<vmem>>, vector<16x32xf32>
    %c0_2 = arith.constant 0 : index
    %c0_3 = arith.constant 0 : index
    %c0_4 = arith.constant 0 : index
    %4 = vector.load %arg3[%c0_2, %c0_3, %c0_4] : memref<1x8x8xf32, #tpu.memory_space<vmem>>, vector<1x8x8xf32>
    %5 = vector.shape_cast %4 : vector<1x8x8xf32> to vector<8x8xf32>
    %c0_5 = arith.constant 0 : index
    %c0_6 = arith.constant 0 : index
    %c0_7 = arith.constant 0 : index
    %6 = vector.load %arg4[%c0_5, %c0_6, %c0_7] : memref<1x8x8xf32, #tpu.memory_space<vmem>>, vector<1x8x8xf32>
    %7 = vector.shape_cast %6 : vector<1x8x8xf32> to vector<8x8xf32>
    %c0_8 = arith.constant 0 : index
    %c0_9 = arith.constant 0 : index
    %c0_10 = arith.constant 0 : index
    %8 = vector.load %arg5[%c0_8, %c0_9, %c0_10] : memref<1x8x8xf32, #tpu.memory_space<vmem>>, vector<1x8x8xf32>
    %9 = vector.shape_cast %8 : vector<1x8x8xf32> to vector<8x8xf32>
    %c0_11 = arith.constant 0 : index
    %c0_12 = arith.constant 0 : index
    %c0_13 = arith.constant 0 : index
    %c0_14 = arith.constant 0 : index
    %10 = vector.load %arg6[%c0_11, %c0_12, %c0_13, %c0_14] : memref<1x4x8x32xf32, #tpu.memory_space<vmem>>, vector<1x4x8x32xf32>
    %11 = vector.shape_cast %10 : vector<1x4x8x32xf32> to vector<4x8x32xf32>
    %c0_15 = arith.constant 0 : index
    %c0_16 = arith.constant 0 : index
    %c0_17 = arith.constant 0 : index
    %12 = vector.load %arg7[%c0_15, %c0_16, %c0_17] : memref<1x1x32xf32, #tpu.memory_space<vmem>>, vector<1x1x32xf32>
    %13 = vector.shape_cast %12 : vector<1x1x32xf32> to vector<1x32xf32>
    %14 = vector.extract_strided_slice %3 {offsets = [0, 0], sizes = [16, 8], strides = [1, 1]} : vector<16x32xf32> to vector<16x8xf32>
    %15 = vector.extract_strided_slice %3 {offsets = [0, 8], sizes = [16, 8], strides = [1, 1]} : vector<16x32xf32> to vector<16x8xf32>
    %16 = vector.extract_strided_slice %3 {offsets = [0, 16], sizes = [16, 8], strides = [1, 1]} : vector<16x32xf32> to vector<16x8xf32>
    %17 = vector.extract_strided_slice %3 {offsets = [0, 24], sizes = [16, 8], strides = [1, 1]} : vector<16x32xf32> to vector<16x8xf32>
    %18 = vector.shape_cast %14 : vector<16x8xf32> to vector<1x16x8xf32>
    %19 = vector.shape_cast %15 : vector<16x8xf32> to vector<1x16x8xf32>
    %20 = vector.shape_cast %16 : vector<16x8xf32> to vector<1x16x8xf32>
    %21 = vector.shape_cast %17 : vector<16x8xf32> to vector<1x16x8xf32>
    %22 = tpu.concatenate %18, %19, %20, %21 in 0 : vector<1x16x8xf32>, vector<1x16x8xf32>, vector<1x16x8xf32>, vector<1x16x8xf32> -> vector<4x16x8xf32>
    %23 = vector.shape_cast %22 : vector<4x16x8xf32> to vector<64x8xf32>
    %cst = arith.constant dense<0.000000e+00> : vector<64x8xf32>
    %24 = tpu.matmul %23, %5, %cst {dimension_numbers = #tpu.dot_dimension_numbers<[1], [0], [0], [1], [0, 0, 1, 1], [], []>} : vector<64x8xf32>, vector<8x8xf32>, vector<64x8xf32> -> vector<64x8xf32>
    %cst_18 = arith.constant 0.176776692 : f32
    %25 = vector.broadcast %cst_18 : f32 to vector<64x8xf32>
    %26 = arith.mulf %24, %25 : vector<64x8xf32>
    %cst_19 = arith.constant dense<0.000000e+00> : vector<64x8xf32>
    %27 = tpu.matmul %23, %7, %cst_19 {dimension_numbers = #tpu.dot_dimension_numbers<[1], [0], [0], [1], [0, 0, 1, 1], [], []>} : vector<64x8xf32>, vector<8x8xf32>, vector<64x8xf32> -> vector<64x8xf32>
    %cst_20 = arith.constant dense<0.000000e+00> : vector<64x8xf32>
    %28 = tpu.matmul %23, %9, %cst_20 {dimension_numbers = #tpu.dot_dimension_numbers<[1], [0], [0], [1], [0, 0, 1, 1], [], []>} : vector<64x8xf32>, vector<8x8xf32>, vector<64x8xf32> -> vector<64x8xf32>
    %29 = vector.shape_cast %26 : vector<64x8xf32> to vector<8x8x8xf32>
    %30 = vector.shape_cast %27 : vector<64x8xf32> to vector<8x8x8xf32>
    %31 = vector.shape_cast %28 : vector<64x8xf32> to vector<8x8x8xf32>
    "tpu.trace_start"() <{level = 10 : i32, message = "bqd,bkd->bqk"}> : () -> ()
    %cst_21 = arith.constant dense<0.000000e+00> : vector<8x8x8xf32>
    %32 = tpu.matmul %29, %30, %cst_21 {dimension_numbers = #tpu.dot_dimension_numbers<[2], [2], [1], [1], [0, 0, 0, 1, 1, 1], [0], [0]>} : vector<8x8x8xf32>, vector<8x8x8xf32>, vector<8x8x8xf32> -> vector<8x8x8xf32>
    "tpu.trace_stop"() : () -> ()
    %c0_22 = arith.constant 0 : index
    %c0_23 = arith.constant 0 : index
    %c0_24 = arith.constant 0 : index
    %33 = vector.load %arg2[%c0_22, %c0_23, %c0_24] : memref<8x1x8xf32, #tpu.memory_space<vmem>>, vector<8x1x8xf32>
    %cst_25 = arith.constant 0.000000e+00 : f32
    %34 = vector.broadcast %cst_25 : f32 to vector<8x1x8xf32>
    %35 = arith.cmpf one, %33, %34 : vector<8x1x8xf32>
    %cst_26 = arith.constant -1.000000e+20 : f32
    %cst_27 = arith.constant 0.176776692 : f32
    %36 = arith.mulf %cst_26, %cst_27 : f32
    %37 = vector.shape_cast %35 : vector<8x1x8xi1> to vector<8x1x8xi1>
    %38 = vector.broadcast %37 : vector<8x1x8xi1> to vector<8x8x8xi1>
    %39 = vector.broadcast %36 : f32 to vector<8x8x8xf32>
    %40 = arith.select %38, %32, %39 : vector<8x8x8xi1>, vector<8x8x8xf32>
    %cst_28 = arith.constant dense<0xFF800000> : vector<8x8xf32>
    %41 = vector.multi_reduction <maximumf>, %40, %cst_28 [2] : vector<8x8x8xf32> to vector<8x8xf32>
    %42 = vector.shape_cast %41 : vector<8x8xf32> to vector<8x8x1xf32>
    %43 = vector.broadcast %42 : vector<8x8x1xf32> to vector<8x8x8xf32>
    %44 = arith.subf %40, %43 : vector<8x8x8xf32>
    %45 = math.exp %44 : vector<8x8x8xf32>
    %cst_29 = arith.constant dense<0.000000e+00> : vector<8x8xf32>
    %46 = vector.multi_reduction <add>, %45, %cst_29 [2] : vector<8x8x8xf32> to vector<8x8xf32>
    %47 = vector.shape_cast %46 : vector<8x8xf32> to vector<8x8x1xf32>
    %48 = tpu.reciprocal %47 {approx = true} : vector<8x8x1xf32> -> vector<8x8x1xf32>
    %49 = vector.broadcast %48 : vector<8x8x1xf32> to vector<8x8x8xf32>
    %50 = arith.mulf %45, %49 : vector<8x8x8xf32>
    "tpu.trace_start"() <{level = 10 : i32, message = "bqk,bkd->bqd"}> : () -> ()
    %cst_30 = arith.constant dense<0.000000e+00> : vector<8x8x8xf32>
    %51 = tpu.matmul %50, %31, %cst_30 {dimension_numbers = #tpu.dot_dimension_numbers<[2], [1], [1], [2], [0, 0, 0, 1, 1, 2], [0], [0]>} : vector<8x8x8xf32>, vector<8x8x8xf32>, vector<8x8x8xf32> -> vector<8x8x8xf32>
    "tpu.trace_stop"() : () -> ()
    %52 = vector.shape_cast %51 : vector<8x8x8xf32> to vector<4x16x8xf32>
    "tpu.trace_start"() <{level = 10 : i32, message = "hrd,hde->hre"}> : () -> ()
    %cst_31 = arith.constant dense<0.000000e+00> : vector<4x16x32xf32>
    %53 = tpu.matmul %52, %11, %cst_31 {dimension_numbers = #tpu.dot_dimension_numbers<[2], [1], [1], [2], [0, 0, 0, 1, 1, 2], [0], [0]>} : vector<4x16x8xf32>, vector<4x8x32xf32>, vector<4x16x32xf32> -> vector<4x16x32xf32>
    "tpu.trace_stop"() : () -> ()
    %cst_32 = arith.constant dense<0.000000e+00> : vector<16x32xf32>
    %54 = vector.multi_reduction <add>, %53, %cst_32 [0] : vector<4x16x32xf32> to vector<16x32xf32>
    %55 = vector.broadcast %13 : vector<1x32xf32> to vector<16x32xf32>
    %56 = arith.addf %54, %55 : vector<16x32xf32>
    %57 = arith.addf %56, %3 : vector<16x32xf32>
    %cst_33 = arith.constant dense<0.000000e+00> : vector<16xf32>
    %58 = vector.multi_reduction <add>, %57, %cst_33 [1] : vector<16x32xf32> to vector<16xf32>
    %59 = vector.shape_cast %58 : vector<16xf32> to vector<16x1xf32>
    %cst_34 = arith.constant 3.200000e+01 : f32
    %60 = vector.broadcast %cst_34 : f32 to vector<16x1xf32>
    %61 = arith.divf %59, %60 : vector<16x1xf32>
    %62 = vector.broadcast %61 : vector<16x1xf32> to vector<16x32xf32>
    %63 = arith.subf %57, %62 : vector<16x32xf32>
    %64 = arith.mulf %63, %63 : vector<16x32xf32>
    %cst_35 = arith.constant dense<0.000000e+00> : vector<16xf32>
    %65 = vector.multi_reduction <add>, %64, %cst_35 [1] : vector<16x32xf32> to vector<16xf32>
    %66 = vector.shape_cast %65 : vector<16xf32> to vector<16x1xf32>
    %cst_36 = arith.constant 3.200000e+01 : f32
    %67 = vector.broadcast %cst_36 : f32 to vector<16x1xf32>
    %68 = arith.divf %66, %67 : vector<16x1xf32>
    %69 = vector.broadcast %61 : vector<16x1xf32> to vector<16x32xf32>
    %70 = arith.subf %57, %69 : vector<16x32xf32>
    %cst_37 = arith.constant 9.99999974E-6 : f32
    %71 = vector.broadcast %cst_37 : f32 to vector<16x1xf32>
    %72 = arith.addf %68, %71 : vector<16x1xf32>
    %73 = math.rsqrt %72 : vector<16x1xf32>
    %74 = vector.broadcast %73 : vector<16x1xf32> to vector<16x32xf32>
    %75 = arith.mulf %70, %74 : vector<16x32xf32>
    %c0_38 = arith.constant 0 : index
    %c0_39 = arith.constant 0 : index
    %c0_40 = arith.constant 0 : index
    %76 = vector.load %arg8[%c0_38, %c0_39, %c0_40] : memref<1x1x32xf32, #tpu.memory_space<vmem>>, vector<1x1x32xf32>
    %77 = vector.shape_cast %76 : vector<1x1x32xf32> to vector<1x32xf32>
    %78 = vector.broadcast %77 : vector<1x32xf32> to vector<16x32xf32>
    %79 = arith.mulf %75, %78 : vector<16x32xf32>
    %c0_41 = arith.constant 0 : index
    %c0_42 = arith.constant 0 : index
    %c0_43 = arith.constant 0 : index
    %80 = vector.load %arg9[%c0_41, %c0_42, %c0_43] : memref<1x1x32xf32, #tpu.memory_space<vmem>>, vector<1x1x32xf32>
    %81 = vector.shape_cast %80 : vector<1x1x32xf32> to vector<1x32xf32>
    %82 = vector.broadcast %81 : vector<1x32xf32> to vector<16x32xf32>
    %83 = arith.addf %79, %82 : vector<16x32xf32>
    %c0_44 = arith.constant 0 : index
    %c0_45 = arith.constant 0 : index
    %c0_46 = arith.constant 0 : index
    %84 = vector.load %arg10[%c0_44, %c0_45, %c0_46] : memref<1x32x128xf32, #tpu.memory_space<vmem>>, vector<1x32x128xf32>
    %85 = vector.shape_cast %84 : vector<1x32x128xf32> to vector<32x128xf32>
    %cst_47 = arith.constant dense<0.000000e+00> : vector<16x128xf32>
    %86 = tpu.matmul %83, %85, %cst_47 {dimension_numbers = #tpu.dot_dimension_numbers<[1], [0], [0], [1], [0, 0, 1, 1], [], []>} : vector<16x32xf32>, vector<32x128xf32>, vector<16x128xf32> -> vector<16x128xf32>
    %c0_48 = arith.constant 0 : index
    %c0_49 = arith.constant 0 : index
    %c0_50 = arith.constant 0 : index
    %87 = vector.load %arg11[%c0_48, %c0_49, %c0_50] : memref<1x1x128xf32, #tpu.memory_space<vmem>>, vector<1x1x128xf32>
    %88 = vector.shape_cast %87 : vector<1x1x128xf32> to vector<1x128xf32>
    %89 = vector.broadcast %88 : vector<1x128xf32> to vector<16x128xf32>
    %90 = arith.addf %86, %89 : vector<16x128xf32>
    %cst_51 = arith.constant 0.000000e+00 : f32
    %91 = vector.broadcast %cst_51 : f32 to vector<16x128xf32>
    %92 = arith.maximumf %90, %91 : vector<16x128xf32>
    %c0_52 = arith.constant 0 : index
    %c0_53 = arith.constant 0 : index
    %c0_54 = arith.constant 0 : index
    %93 = vector.load %arg12[%c0_52, %c0_53, %c0_54] : memref<1x128x32xf32, #tpu.memory_space<vmem>>, vector<1x128x32xf32>
    %94 = vector.shape_cast %93 : vector<1x128x32xf32> to vector<128x32xf32>
    %cst_55 = arith.constant dense<0.000000e+00> : vector<16x32xf32>
    %95 = tpu.matmul %92, %94, %cst_55 {dimension_numbers = #tpu.dot_dimension_numbers<[1], [0], [0], [1], [0, 0, 1, 1], [], []>} : vector<16x128xf32>, vector<128x32xf32>, vector<16x32xf32> -> vector<16x32xf32>
    %c0_56 = arith.constant 0 : index
    %c0_57 = arith.constant 0 : index
    %c0_58 = arith.constant 0 : index
    %96 = vector.load %arg13[%c0_56, %c0_57, %c0_58] : memref<1x1x32xf32, #tpu.memory_space<vmem>>, vector<1x1x32xf32>
    %97 = vector.shape_cast %96 : vector<1x1x32xf32> to vector<1x32xf32>
    %98 = vector.broadcast %97 : vector<1x32xf32> to vector<16x32xf32>
    %99 = arith.addf %95, %98 : vector<16x32xf32>
    %100 = arith.addf %99, %83 : vector<16x32xf32>
    %cst_59 = arith.constant dense<0.000000e+00> : vector<16xf32>
    %101 = vector.multi_reduction <add>, %100, %cst_59 [1] : vector<16x32xf32> to vector<16xf32>
    %102 = vector.shape_cast %101 : vector<16xf32> to vector<16x1xf32>
    %cst_60 = arith.constant 3.200000e+01 : f32
    %103 = vector.broadcast %cst_60 : f32 to vector<16x1xf32>
    %104 = arith.divf %102, %103 : vector<16x1xf32>
    %105 = vector.broadcast %104 : vector<16x1xf32> to vector<16x32xf32>
    %106 = arith.subf %100, %105 : vector<16x32xf32>
    %107 = arith.mulf %106, %106 : vector<16x32xf32>
    %cst_61 = arith.constant dense<0.000000e+00> : vector<16xf32>
    %108 = vector.multi_reduction <add>, %107, %cst_61 [1] : vector<16x32xf32> to vector<16xf32>
    %109 = vector.shape_cast %108 : vector<16xf32> to vector<16x1xf32>
    %cst_62 = arith.constant 3.200000e+01 : f32
    %110 = vector.broadcast %cst_62 : f32 to vector<16x1xf32>
    %111 = arith.divf %109, %110 : vector<16x1xf32>
    %112 = vector.broadcast %104 : vector<16x1xf32> to vector<16x32xf32>
    %113 = arith.subf %100, %112 : vector<16x32xf32>
    %cst_63 = arith.constant 9.99999974E-6 : f32
    %114 = vector.broadcast %cst_63 : f32 to vector<16x1xf32>
    %115 = arith.addf %111, %114 : vector<16x1xf32>
    %116 = math.rsqrt %115 : vector<16x1xf32>
    %117 = vector.broadcast %116 : vector<16x1xf32> to vector<16x32xf32>
    %118 = arith.mulf %113, %117 : vector<16x32xf32>
    %c0_64 = arith.constant 0 : index
    %c0_65 = arith.constant 0 : index
    %c0_66 = arith.constant 0 : index
    %119 = vector.load %arg14[%c0_64, %c0_65, %c0_66] : memref<1x1x32xf32, #tpu.memory_space<vmem>>, vector<1x1x32xf32>
    %120 = vector.shape_cast %119 : vector<1x1x32xf32> to vector<1x32xf32>
    %121 = vector.broadcast %120 : vector<1x32xf32> to vector<16x32xf32>
    %122 = arith.mulf %118, %121 : vector<16x32xf32>
    %c0_67 = arith.constant 0 : index
    %c0_68 = arith.constant 0 : index
    %c0_69 = arith.constant 0 : index
    %123 = vector.load %arg15[%c0_67, %c0_68, %c0_69] : memref<1x1x32xf32, #tpu.memory_space<vmem>>, vector<1x1x32xf32>
    %124 = vector.shape_cast %123 : vector<1x1x32xf32> to vector<1x32xf32>
    %125 = vector.broadcast %124 : vector<1x32xf32> to vector<16x32xf32>
    %126 = arith.addf %122, %125 : vector<16x32xf32>
    %c0_70 = arith.constant 0 : index
    %c0_71 = arith.constant 0 : index
    %127 = vector.load %arg16[%c0_70, %c0_71] : memref<16x32xf32, #tpu.memory_space<vmem>>, vector<16x32xf32>
    tpu.vector_store %arg16[%c0_70, %c0_71], %126 {strides = array<i32>} : memref<16x32xf32, #tpu.memory_space<vmem>>, vector<16x32xf32>,
    return
  }
  func.func @transform_0(%arg0: i32) -> (i32, i32) {
    %c0_i32 = arith.constant 0 : i32
    %c0_i32_0 = arith.constant 0 : i32
    %c0_i32_1 = arith.constant 0 : i32
    return %c0_i32, %c0_i32_0 : i32, i32
  }
  func.func @transform_1(%arg0: i32) -> (i32, i32, i32) {
    %c0_i32 = arith.constant 0 : i32
    %c0_i32_0 = arith.constant 0 : i32
    %c0_i32_1 = arith.constant 0 : i32
    %c0_i32_2 = arith.constant 0 : i32
    return %c0_i32, %c0_i32_0, %c0_i32_1 : i32, i32, i32
  }
  func.func @transform_2(%arg0: i32) -> (i32, i32, i32) {
    %c0_i32 = arith.constant 0 : i32
    %c0_i32_0 = arith.constant 0 : i32
    %c0_i32_1 = arith.constant 0 : i32
    return %arg0, %c0_i32, %c0_i32_0 : i32, i32, i32
  }
  func.func @transform_3(%arg0: i32) -> (i32, i32, i32) {
    %c0_i32 = arith.constant 0 : i32
    %c0_i32_0 = arith.constant 0 : i32
    %c0_i32_1 = arith.constant 0 : i32
    return %arg0, %c0_i32, %c0_i32_0 : i32, i32, i32
  }
  func.func @transform_4(%arg0: i32) -> (i32, i32, i32) {
    %c0_i32 = arith.constant 0 : i32
    %c0_i32_0 = arith.constant 0 : i32
    %c0_i32_1 = arith.constant 0 : i32
    return %arg0, %c0_i32, %c0_i32_0 : i32, i32, i32
  }
  func.func @transform_5(%arg0: i32) -> (i32, i32, i32, i32) {
    %c0_i32 = arith.constant 0 : i32
    %c0_i32_0 = arith.constant 0 : i32
    %c0_i32_1 = arith.constant 0 : i32
    %c0_i32_2 = arith.constant 0 : i32
    return %arg0, %c0_i32, %c0_i32_0, %c0_i32_1 : i32, i32, i32, i32
  }
  func.func @transform_6(%arg0: i32) -> (i32, i32, i32) {
    %c0_i32 = arith.constant 0 : i32
    %c0_i32_0 = arith.constant 0 : i32
    %c0_i32_1 = arith.constant 0 : i32
    return %arg0, %c0_i32, %c0_i32_0 : i32, i32, i32
  }
  func.func @transform_7(%arg0: i32) -> (i32, i32, i32) {
    %c0_i32 = arith.constant 0 : i32
    %c0_i32_0 = arith.constant 0 : i32
    %c0_i32_1 = arith.constant 0 : i32
    return %arg0, %c0_i32, %c0_i32_0 : i32, i32, i32
  }
  func.func @transform_8(%arg0: i32) -> (i32, i32, i32) {
    %c0_i32 = arith.constant 0 : i32
    %c0_i32_0 = arith.constant 0 : i32
    %c0_i32_1 = arith.constant 0 : i32
    return %arg0, %c0_i32, %c0_i32_0 : i32, i32, i32
  }
  func.func @transform_9(%arg0: i32) -> (i32, i32, i32) {
    %c0_i32 = arith.constant 0 : i32
    %c0_i32_0 = arith.constant 0 : i32
    %c0_i32_1 = arith.constant 0 : i32
    return %arg0, %c0_i32, %c0_i32_0 : i32, i32, i32
  }
  func.func @transform_10(%arg0: i32) -> (i32, i32, i32) {
    %c0_i32 = arith.constant 0 : i32
    %c0_i32_0 = arith.constant 0 : i32
    %c0_i32_1 = arith.constant 0 : i32
    return %arg0, %c0_i32, %c0_i32_0 : i32, i32, i32
  }
  func.func @transform_11(%arg0: i32) -> (i32, i32, i32) {
    %c0_i32 = arith.constant 0 : i32
    %c0_i32_0 = arith.constant 0 : i32
    %c0_i32_1 = arith.constant 0 : i32
    return %arg0, %c0_i32, %c0_i32_0 : i32, i32, i32
  }
  func.func @transform_12(%arg0: i32) -> (i32, i32, i32) {
    %c0_i32 = arith.constant 0 : i32
    %c0_i32_0 = arith.constant 0 : i32
    %c0_i32_1 = arith.constant 0 : i32
    return %arg0, %c0_i32, %c0_i32_0 : i32, i32, i32
  }
  func.func @transform_13(%arg0: i32) -> (i32, i32, i32) {
    %c0_i32 = arith.constant 0 : i32
    %c0_i32_0 = arith.constant 0 : i32
    %c0_i32_1 = arith.constant 0 : i32
    return %arg0, %c0_i32, %c0_i32_0 : i32, i32, i32
  }
  func.func @transform_14(%arg0: i32) -> (i32, i32, i32) {
    %c0_i32 = arith.constant 0 : i32
    %c0_i32_0 = arith.constant 0 : i32
    %c0_i32_1 = arith.constant 0 : i32
    return %arg0, %c0_i32, %c0_i32_0 : i32, i32, i32
  }
  func.func @transform_15(%arg0: i32) -> (i32, i32) {
    %c0_i32 = arith.constant 0 : i32
    %c0_i32_0 = arith.constant 0 : i32
    %c0_i32_1 = arith.constant 0 : i32
    return %c0_i32, %c0_i32_0 : i32, i32
  }
}

</mosaic_0001>

<llo_original>
// kernel: tpu_custom_call.1
$region0: #{tpu_custom_call.1}
  #allocation0 [shape = 'u32[]', space=smem, size = 0x4, offset = 0x4, fixed_abs, tag = 'smem constant byte address 0x4 - core index']
  #allocation1 [shape = 'u32[144,128]{1,0:T(1,128)}', space=vmem, size = 0x12000, scoped, tag = 'internal scratch']
  %s0 = inlined_call_operand.vmem [shape: f32[16,32], index: 0, kind: input, shape index: {}]
  %s1 = inlined_call_operand.vmem [shape: f32[8,1,8], index: 1, kind: input, shape index: {}]
  %s2 = inlined_call_operand.vmem [shape: f32[2,8,8], index: 2, kind: input, shape index: {}]
  %s3 = inlined_call_operand.vmem [shape: f32[2,8,8], index: 3, kind: input, shape index: {}]
  %s4 = inlined_call_operand.vmem [shape: f32[2,8,8], index: 4, kind: input, shape index: {}]
  %s5 = inlined_call_operand.vmem [shape: f32[2,4,8,32], index: 5, kind: input, shape index: {}]
  %s6 = inlined_call_operand.vmem [shape: f32[2,1,32], index: 6, kind: input, shape index: {}]
  %s7 = inlined_call_operand.vmem [shape: f32[2,1,32], index: 7, kind: input, shape index: {}]
  %s8 = inlined_call_operand.vmem [shape: f32[2,1,32], index: 8, kind: input, shape index: {}]
  %s9 = inlined_call_operand.vmem [shape: f32[2,32,128], index: 9, kind: input, shape index: {}]
  %s10 = inlined_call_operand.vmem [shape: f32[2,1,128], index: 10, kind: input, shape index: {}]
  %s11 = inlined_call_operand.vmem [shape: f32[2,128,32], index: 11, kind: input, shape index: {}]
  %s12 = inlined_call_operand.vmem [shape: f32[2,1,32], index: 12, kind: input, shape index: {}]
  %s13 = inlined_call_operand.vmem [shape: f32[2,1,32], index: 13, kind: input, shape index: {}]
  %s14 = inlined_call_operand.vmem [shape: f32[2,1,32], index: 14, kind: input, shape index: {}]
  %s15 = inlined_call_operand.hbm [shape: f32[16,32], index: 15, kind: output, shape index: {}]
  %s16 = sld [smem:[#allocation0]]
  $region97: #{tpu_custom_call.1} parent=0
    _
  %s18 = ssub.s32 1, %s16
  %s19 = scalar_select 0, %s18, %s16
  $region1: #{tpu_custom_call.1} parent=0
    #allocation2 [shape = 'u8[8192]{0}', space=vmem, size = 0x2000, scoped, tag = 'output window, operand 0, single buffered']
    #allocation3 [shape = 's32[2]{0}', space=sflag, size = 0x8, scoped, tag = 'scoped memory for tpu_custom_call.1']
    %20 = vsyncpa [#allocation3], 0
    loop: start=0, step=1, limit=4
    $region2: #{tpu_custom_call.1} parent=1 // loop_pre_header
      _
    $region3: #{tpu_custom_call.1} parent=1 // loop_header
      %s22 = sphi 0, %s26
      %p23 = scmp.ge.s32.totalorder %s22, 4
      %s30 = sphi 0, %s30
      %s32 = sphi 0, %s30
      %s33 = sphi 0, %s32
      %s47 = sphi 0, %s33
      %s51 = sphi 0, %s51
      %s53 = sphi 0, %s51
      %s54 = sphi 0, %s53
      %s68 = sphi 0, %s54
      %s74 = sphi 0, %s76
      %s77 = sphi 0, %s74
      %s78 = sphi 0, %s77
      %s94 = sphi 0, %s78
      %s100 = sphi 0, %s102
      %s103 = sphi 0, %s100
      %s104 = sphi 0, %s103
      %s120 = sphi 0, %s104
      %s126 = sphi 0, %s128
      %s129 = sphi 0, %s126
      %s130 = sphi 0, %s129
      %s146 = sphi 0, %s130
      %s152 = sphi 0, %s154
      %s155 = sphi 0, %s152
      %s156 = sphi 0, %s155
      %s172 = sphi 0, %s156
      %s178 = sphi 0, %s180
      %s181 = sphi 0, %s178
      %s182 = sphi 0, %s181
      %s198 = sphi 0, %s182
      %s204 = sphi 0, %s206
      %s207 = sphi 0, %s204
      %s208 = sphi 0, %s207
      %s224 = sphi 0, %s208
      %s230 = sphi 0, %s232
      %s233 = sphi 0, %s230
      %s234 = sphi 0, %s233
      %s250 = sphi 0, %s234
      %s256 = sphi 0, %s258
      %s259 = sphi 0, %s256
      %s260 = sphi 0, %s259
      %s276 = sphi 0, %s260
      %s282 = sphi 0, %s284
      %s285 = sphi 0, %s282
      %s286 = sphi 0, %s285
      %s302 = sphi 0, %s286
      %s308 = sphi 0, %s310
      %s311 = sphi 0, %s308
      %s312 = sphi 0, %s311
      %s328 = sphi 0, %s312
      %s334 = sphi 0, %s336
      %s337 = sphi 0, %s334
      %s338 = sphi 0, %s337
      %s354 = sphi 0, %s338
      %s360 = sphi 0, %s362
      %s363 = sphi 0, %s360
      %s364 = sphi 0, %s363
      %s380 = sphi 0, %s364
      %s386 = sphi 0, %s388
      %s389 = sphi 0, %s386
      %s390 = sphi 0, %s389
      %s406 = sphi 0, %s390
      %s410 = sphi 0, %s410
      %s412 = sphi 0, %s410
      %s413 = sphi 0, %s412
      %s427 = sphi 0, %s413
    $region4: #{tpu_custom_call.1} parent=1 // loop_header_branch
      %25 = sbr.rel (%p23) target = $region8
    $region5: #{tpu_custom_call.1} parent=1 // loop_body
      %s27 = ssub.s32 %s22, 1
      %s28 = ssub.s32 %s22, 2
      %s29 = sadd.s32 %s22, 1
      %s31 = sadd.s32 %s30, 1
      %p34 = scmp.eq.s32.totalorder %s22, 1
      %p35 = scmp.ne.s32.totalorder %s30, %s32
      %p36 = scmp.eq.s32.totalorder %s22, 0
      %p37 = por %p35, %p36
      %p38 = scmp.ne.s32.totalorder %s30, %s32
      %p39 = scmp.eq.s32.totalorder %s27, 1
      %p40 = por %p38, %p39
      %p41 = scmp.ne.s32.totalorder %s32, %s33
      %p42 = scmp.eq.s32.totalorder %s27, 0
      %p43 = por %p41, %p42
      %p44 = scmp.ne.s32.totalorder %s32, %s33
      %p45 = scmp.eq.s32.totalorder %s28, 1
      %p46 = por %p44, %p45
      %p48 = scmp.ne.s32.totalorder %s33, %s47
      %p49 = scmp.eq.s32.totalorder %s28, 0
      %p50 = por %p48, %p49
      %s52 = sadd.s32 %s51, 1
      %p55 = scmp.eq.s32.totalorder %s22, 1
      %p56 = scmp.ne.s32.totalorder %s51, %s53
      %p57 = scmp.eq.s32.totalorder %s22, 0
      %p58 = por %p56, %p57
      %p59 = scmp.ne.s32.totalorder %s51, %s53
      %p60 = scmp.eq.s32.totalorder %s27, 1
      %p61 = por %p59, %p60
      %p62 = scmp.ne.s32.totalorder %s53, %s54
      %p63 = scmp.eq.s32.totalorder %s27, 0
      %p64 = por %p62, %p63
      %p65 = scmp.ne.s32.totalorder %s53, %s54
      %p66 = scmp.eq.s32.totalorder %s28, 1
      %p67 = por %p65, %p66
      %p69 = scmp.ne.s32.totalorder %s54, %s68
      %p70 = scmp.eq.s32.totalorder %s28, 0
      %p71 = por %p69, %p70
      %s72 = ssub.s32 %s22, %s29
      %p73 = scmp.eq.s32.totalorder %s72, 0
      %s75 = sadd.s32 %s74, 1
      %s76 = scalar_select %p73, %s74, %s75
      %p79 = pneg %p73
      %p80 = scmp.eq.s32.totalorder %s22, 1
      %p81 = por %p79, %p80
      %p82 = scmp.ne.s32.totalorder %s74, %s77
      %p83 = scmp.eq.s32.totalorder %s22, 0
      %p84 = por %p82, %p83
      %p85 = scmp.ne.s32.totalorder %s74, %s77
      %p86 = scmp.eq.s32.totalorder %s27, 1
      %p87 = por %p85, %p86
      %p88 = scmp.ne.s32.totalorder %s77, %s78
      %p89 = scmp.eq.s32.totalorder %s27, 0
      %p90 = por %p88, %p89
      %p91 = scmp.ne.s32.totalorder %s77, %s78
      %p92 = scmp.eq.s32.totalorder %s28, 1
      %p93 = por %p91, %p92
      %p95 = scmp.ne.s32.totalorder %s78, %s94
      %p96 = scmp.eq.s32.totalorder %s28, 0
      %p97 = por %p95, %p96
      %s98 = ssub.s32 %s22, %s29
      %p99 = scmp.eq.s32.totalorder %s98, 0
      %s101 = sadd.s32 %s100, 1
      %s102 = scalar_select %p99, %s100, %s101
      %p105 = pneg %p99
      %p106 = scmp.eq.s32.totalorder %s22, 1
      %p107 = por %p105, %p106
      %p108 = scmp.ne.s32.totalorder %s100, %s103
      %p109 = scmp.eq.s32.totalorder %s22, 0
      %p110 = por %p108, %p109
      %p111 = scmp.ne.s32.totalorder %s100, %s103
      %p112 = scmp.eq.s32.totalorder %s27, 1
      %p113 = por %p111, %p112
      %p114 = scmp.ne.s32.totalorder %s103, %s104
      %p115 = scmp.eq.s32.totalorder %s27, 0
      %p116 = por %p114, %p115
      %p117 = scmp.ne.s32.totalorder %s103, %s104
      %p118 = scmp.eq.s32.totalorder %s28, 1
      %p119 = por %p117, %p118
      %p121 = scmp.ne.s32.totalorder %s104, %s120
      %p122 = scmp.eq.s32.totalorder %s28, 0
      %p123 = por %p121, %p122
      %s124 = ssub.s32 %s22, %s29
      %p125 = scmp.eq.s32.totalorder %s124, 0
      %s127 = sadd.s32 %s126, 1
      %s128 = scalar_select %p125, %s126, %s127
      %p131 = pneg %p125
      %p132 = scmp.eq.s32.totalorder %s22, 1
      %p133 = por %p131, %p132
      %p134 = scmp.ne.s32.totalorder %s126, %s129
      %p135 = scmp.eq.s32.totalorder %s22, 0
      %p136 = por %p134, %p135
      %p137 = scmp.ne.s32.totalorder %s126, %s129
      %p138 = scmp.eq.s32.totalorder %s27, 1
      %p139 = por %p137, %p138
      %p140 = scmp.ne.s32.totalorder %s129, %s130
      %p141 = scmp.eq.s32.totalorder %s27, 0
      %p142 = por %p140, %p141
      %p143 = scmp.ne.s32.totalorder %s129, %s130
      %p144 = scmp.eq.s32.totalorder %s28, 1
      %p145 = por %p143, %p144
      %p147 = scmp.ne.s32.totalorder %s130, %s146
      %p148 = scmp.eq.s32.totalorder %s28, 0
      %p149 = por %p147, %p148
      %s150 = ssub.s32 %s22, %s29
      %p151 = scmp.eq.s32.totalorder %s150, 0
      %s153 = sadd.s32 %s152, 1
      %s154 = scalar_select %p151, %s152, %s153
      %p157 = pneg %p151
      %p158 = scmp.eq.s32.totalorder %s22, 1
      %p159 = por %p157, %p158
      %p160 = scmp.ne.s32.totalorder %s152, %s155
      %p161 = scmp.eq.s32.totalorder %s22, 0
      %p162 = por %p160, %p161
      %p163 = scmp.ne.s32.totalorder %s152, %s155
      %p164 = scmp.eq.s32.totalorder %s27, 1
      %p165 = por %p163, %p164
      %p166 = scmp.ne.s32.totalorder %s155, %s156
      %p167 = scmp.eq.s32.totalorder %s27, 0
      %p168 = por %p166, %p167
      %p169 = scmp.ne.s32.totalorder %s155, %s156
      %p170 = scmp.eq.s32.totalorder %s28, 1
      %p171 = por %p169, %p170
      %p173 = scmp.ne.s32.totalorder %s156, %s172
      %p174 = scmp.eq.s32.totalorder %s28, 0
      %p175 = por %p173, %p174
      %s176 = ssub.s32 %s22, %s29
      %p177 = scmp.eq.s32.totalorder %s176, 0
      %s179 = sadd.s32 %s178, 1
      %s180 = scalar_select %p177, %s178, %s179
      %p183 = pneg %p177
      %p184 = scmp.eq.s32.totalorder %s22, 1
      %p185 = por %p183, %p184
      %p186 = scmp.ne.s32.totalorder %s178, %s181
      %p187 = scmp.eq.s32.totalorder %s22, 0
      %p188 = por %p186, %p187
      %p189 = scmp.ne.s32.totalorder %s178, %s181
      %p190 = scmp.eq.s32.totalorder %s27, 1
      %p191 = por %p189, %p190
      %p192 = scmp.ne.s32.totalorder %s181, %s182
      %p193 = scmp.eq.s32.totalorder %s27, 0
      %p194 = por %p192, %p193
      %p195 = scmp.ne.s32.totalorder %s181, %s182
      %p196 = scmp.eq.s32.totalorder %s28, 1
      %p197 = por %p195, %p196
      %p199 = scmp.ne.s32.totalorder %s182, %s198
      %p200 = scmp.eq.s32.totalorder %s28, 0
      %p201 = por %p199, %p200
      %s202 = ssub.s32 %s22, %s29
      %p203 = scmp.eq.s32.totalorder %s202, 0
      %s205 = sadd.s32 %s204, 1
      %s206 = scalar_select %p203, %s204, %s205
      %p209 = pneg %p203
      %p210 = scmp.eq.s32.totalorder %s22, 1
      %p211 = por %p209, %p210
      %p212 = scmp.ne.s32.totalorder %s204, %s207
      %p213 = scmp.eq.s32.totalorder %s22, 0
      %p214 = por %p212, %p213
      %p215 = scmp.ne.s32.totalorder %s204, %s207
      %p216 = scmp.eq.s32.totalorder %s27, 1
      %p217 = por %p215, %p216
      %p218 = scmp.ne.s32.totalorder %s207, %s208
      %p219 = scmp.eq.s32.totalorder %s27, 0
      %p220 = por %p218, %p219
      %p221 = scmp.ne.s32.totalorder %s207, %s208
      %p222 = scmp.eq.s32.totalorder %s28, 1
      %p223 = por %p221, %p222
      %p225 = scmp.ne.s32.totalorder %s208, %s224
      %p226 = scmp.eq.s32.totalorder %s28, 0
      %p227 = por %p225, %p226
      %s228 = ssub.s32 %s22, %s29
      %p229 = scmp.eq.s32.totalorder %s228, 0
      %s231 = sadd.s32 %s230, 1
      %s232 = scalar_select %p229, %s230, %s231
      %p235 = pneg %p229
      %p236 = scmp.eq.s32.totalorder %s22, 1
      %p237 = por %p235, %p236
      %p238 = scmp.ne.s32.totalorder %s230, %s233
      %p239 = scmp.eq.s32.totalorder %s22, 0
      %p240 = por %p238, %p239
      %p241 = scmp.ne.s32.totalorder %s230, %s233
      %p242 = scmp.eq.s32.totalorder %s27, 1
      %p243 = por %p241, %p242
      %p244 = scmp.ne.s32.totalorder %s233, %s234
      %p245 = scmp.eq.s32.totalorder %s27, 0
      %p246 = por %p244, %p245
      %p247 = scmp.ne.s32.totalorder %s233, %s234
      %p248 = scmp.eq.s32.totalorder %s28, 1
      %p249 = por %p247, %p248
      %p251 = scmp.ne.s32.totalorder %s234, %s250
      %p252 = scmp.eq.s32.totalorder %s28, 0
      %p253 = por %p251, %p252
      %s254 = ssub.s32 %s22, %s29
      %p255 = scmp.eq.s32.totalorder %s254, 0
      %s257 = sadd.s32 %s256, 1
      %s258 = scalar_select %p255, %s256, %s257
      %p261 = pneg %p255
      %p262 = scmp.eq.s32.totalorder %s22, 1
      %p263 = por %p261, %p262
      %p264 = scmp.ne.s32.totalorder %s256, %s259
      %p265 = scmp.eq.s32.totalorder %s22, 0
      %p266 = por %p264, %p265
      %p267 = scmp.ne.s32.totalorder %s256, %s259
      %p268 = scmp.eq.s32.totalorder %s27, 1
      %p269 = por %p267, %p268
      %p270 = scmp.ne.s32.totalorder %s259, %s260
      %p271 = scmp.eq.s32.totalorder %s27, 0
      %p272 = por %p270, %p271
      %p273 = scmp.ne.s32.totalorder %s259, %s260
      %p274 = scmp.eq.s32.totalorder %s28, 1
      %p275 = por %p273, %p274
      %p277 = scmp.ne.s32.totalorder %s260, %s276
      %p278 = scmp.eq.s32.totalorder %s28, 0
      %p279 = por %p277, %p278
      %s280 = ssub.s32 %s22, %s29
      %p281 = scmp.eq.s32.totalorder %s280, 0
      %s283 = sadd.s32 %s282, 1
      %s284 = scalar_select %p281, %s282, %s283
      %p287 = pneg %p281
      %p288 = scmp.eq.s32.totalorder %s22, 1
      %p289 = por %p287, %p288
      %p290 = scmp.ne.s32.totalorder %s282, %s285
      %p291 = scmp.eq.s32.totalorder %s22, 0
      %p292 = por %p290, %p291
      %p293 = scmp.ne.s32.totalorder %s282, %s285
      %p294 = scmp.eq.s32.totalorder %s27, 1
      %p295 = por %p293, %p294
      %p296 = scmp.ne.s32.totalorder %s285, %s286
      %p297 = scmp.eq.s32.totalorder %s27, 0
      %p298 = por %p296, %p297
      %p299 = scmp.ne.s32.totalorder %s285, %s286
      %p300 = scmp.eq.s32.totalorder %s28, 1
      %p301 = por %p299, %p300
      %p303 = scmp.ne.s32.totalorder %s286, %s302
      %p304 = scmp.eq.s32.totalorder %s28, 0
      %p305 = por %p303, %p304
      %s306 = ssub.s32 %s22, %s29
      %p307 = scmp.eq.s32.totalorder %s306, 0
      %s309 = sadd.s32 %s308, 1
      %s310 = scalar_select %p307, %s308, %s309
      %p313 = pneg %p307
      %p314 = scmp.eq.s32.totalorder %s22, 1
      %p315 = por %p313, %p314
      %p316 = scmp.ne.s32.totalorder %s308, %s311
      %p317 = scmp.eq.s32.totalorder %s22, 0
      %p318 = por %p316, %p317
      %p319 = scmp.ne.s32.totalorder %s308, %s311
      %p320 = scmp.eq.s32.totalorder %s27, 1
      %p321 = por %p319, %p320
      %p322 = scmp.ne.s32.totalorder %s311, %s312
      %p323 = scmp.eq.s32.totalorder %s27, 0
      %p324 = por %p322, %p323
      %p325 = scmp.ne.s32.totalorder %s311, %s312
      %p326 = scmp.eq.s32.totalorder %s28, 1
      %p327 = por %p325, %p326
      %p329 = scmp.ne.s32.totalorder %s312, %s328
      %p330 = scmp.eq.s32.totalorder %s28, 0
      %p331 = por %p329, %p330
      %s332 = ssub.s32 %s22, %s29
      %p333 = scmp.eq.s32.totalorder %s332, 0
      %s335 = sadd.s32 %s334, 1
      %s336 = scalar_select %p333, %s334, %s335
      %p339 = pneg %p333
      %p340 = scmp.eq.s32.totalorder %s22, 1
      %p341 = por %p339, %p340
      %p342 = scmp.ne.s32.totalorder %s334, %s337
      %p343 = scmp.eq.s32.totalorder %s22, 0
      %p344 = por %p342, %p343
      %p345 = scmp.ne.s32.totalorder %s334, %s337
      %p346 = scmp.eq.s32.totalorder %s27, 1
      %p347 = por %p345, %p346
      %p348 = scmp.ne.s32.totalorder %s337, %s338
      %p349 = scmp.eq.s32.totalorder %s27, 0
      %p350 = por %p348, %p349
      %p351 = scmp.ne.s32.totalorder %s337, %s338
      %p352 = scmp.eq.s32.totalorder %s28, 1
      %p353 = por %p351, %p352
      %p355 = scmp.ne.s32.totalorder %s338, %s354
      %p356 = scmp.eq.s32.totalorder %s28, 0
      %p357 = por %p355, %p356
      %s358 = ssub.s32 %s22, %s29
      %p359 = scmp.eq.s32.totalorder %s358, 0
      %s361 = sadd.s32 %s360, 1
      %s362 = scalar_select %p359, %s360, %s361
      %p365 = pneg %p359
      %p366 = scmp.eq.s32.totalorder %s22, 1
      %p367 = por %p365, %p366
      %p368 = scmp.ne.s32.totalorder %s360, %s363
      %p369 = scmp.eq.s32.totalorder %s22, 0
      %p370 = por %p368, %p369
      %p371 = scmp.ne.s32.totalorder %s360, %s363
      %p372 = scmp.eq.s32.totalorder %s27, 1
      %p373 = por %p371, %p372
      %p374 = scmp.ne.s32.totalorder %s363, %s364
      %p375 = scmp.eq.s32.totalorder %s27, 0
      %p376 = por %p374, %p375
      %p377 = scmp.ne.s32.totalorder %s363, %s364
      %p378 = scmp.eq.s32.totalorder %s28, 1
      %p379 = por %p377, %p378
      %p381 = scmp.ne.s32.totalorder %s364, %s380
      %p382 = scmp.eq.s32.totalorder %s28, 0
      %p383 = por %p381, %p382
      %s384 = ssub.s32 %s22, %s29
      %p385 = scmp.eq.s32.totalorder %s384, 0
      %s387 = sadd.s32 %s386, 1
      %s388 = scalar_select %p385, %s386, %s387
      %p391 = pneg %p385
      %p392 = scmp.eq.s32.totalorder %s22, 1
      %p393 = por %p391, %p392
      %p394 = scmp.ne.s32.totalorder %s386, %s389
      %p395 = scmp.eq.s32.totalorder %s22, 0
      %p396 = por %p394, %p395
      %p397 = scmp.ne.s32.totalorder %s386, %s389
      %p398 = scmp.eq.s32.totalorder %s27, 1
      %p399 = por %p397, %p398
      %p400 = scmp.ne.s32.totalorder %s389, %s390
      %p401 = scmp.eq.s32.totalorder %s27, 0
      %p402 = por %p400, %p401
      %p403 = scmp.ne.s32.totalorder %s389, %s390
      %p404 = scmp.eq.s32.totalorder %s28, 1
      %p405 = por %p403, %p404
      %p407 = scmp.ne.s32.totalorder %s390, %s406
      %p408 = scmp.eq.s32.totalorder %s28, 0
      %p409 = por %p407, %p408
      %s411 = sadd.s32 %s410, 1
      %p414 = scmp.eq.s32.totalorder %s22, 1
      %p415 = scmp.ne.s32.totalorder %s410, %s412
      %p416 = scmp.eq.s32.totalorder %s22, 0
      %p417 = por %p415, %p416
      %p418 = scmp.ne.s32.totalorder %s410, %s412
      %p419 = scmp.eq.s32.totalorder %s27, 1
      %p420 = por %p418, %p419
      %p421 = scmp.ne.s32.totalorder %s412, %s413
      %p422 = scmp.eq.s32.totalorder %s27, 0
      %p423 = por %p421, %p422
      %p424 = scmp.ne.s32.totalorder %s412, %s413
      %p425 = scmp.eq.s32.totalorder %s28, 1
      %p426 = por %p424, %p425
      %p428 = scmp.ne.s32.totalorder %s413, %s427
      %p429 = scmp.eq.s32.totalorder %s28, 0
      %p430 = por %p428, %p429
      %p431 = scmp.le.s32.totalorder 1, %s22
      %p432 = scmp.lt.s32.totalorder %s22, 3
      %p433 = pnand %p431, %p432
      %p434 = pneg %p433
      // Predicated region
      $region9: #{tpu_custom_call.1} parent=5 // pred_check
        _
      $region10: #{tpu_custom_call.1} parent=5 // pred_check_branch
        %436 = sbr.rel (%p433) target = $region12
      $region11: #{tpu_custom_call.1} parent=5 // pred_region
        %s437 = ssub.s32 %s22, 1
        // Predicated region
        $region13: #{tpu_custom_call.1} parent=11 // pred_check
          %p438 = pneg %p43
        $region14: #{tpu_custom_call.1} parent=11 // pred_check_branch
          %440 = sbr.rel (%p438) target = $region16
        $region15: #{tpu_custom_call.1} parent=11 // pred_region
          _
        $region16: #{tpu_custom_call.1} parent=11 // pred_fallthru
          _
        // Predicated region
        $region17: #{tpu_custom_call.1} parent=11 // pred_check
          %p441 = pneg %p64
        $region18: #{tpu_custom_call.1} parent=11 // pred_check_branch
          %443 = sbr.rel (%p441) target = $region20
        $region19: #{tpu_custom_call.1} parent=11 // pred_region
          _
        $region20: #{tpu_custom_call.1} parent=11 // pred_fallthru
          _
      $region12: #{tpu_custom_call.1} parent=5 // pred_fallthru
        _
      %p444 = scmp.lt.s32.totalorder %s22, 2
      // Predicated region
      $region21: #{tpu_custom_call.1} parent=5 // pred_check
        %p445 = pneg %p444
      $region22: #{tpu_custom_call.1} parent=5 // pred_check_branch
        %447 = sbr.rel (%p445) target = $region24
      $region23: #{tpu_custom_call.1} parent=5 // pred_region
        // Predicated region
        $region25: #{tpu_custom_call.1} parent=23 // pred_check
          %p448 = pneg %p84
        $region26: #{tpu_custom_call.1} parent=23 // pred_check_branch
          %450 = sbr.rel (%p448) target = $region28
        $region27: #{tpu_custom_call.1} parent=23 // pred_region
          %p451 = scmp.lt.s32.totalorder %s22, 1
          %s452 = scalar_select %p451, %s22, 1
          %s453 = smul.addr %s452, 8
          %s454 = scalar_lea.vmem %s2, %s453
        $region28: #{tpu_custom_call.1} parent=23 // pred_fallthru
          _
        // Predicated region
        $region29: #{tpu_custom_call.1} parent=23 // pred_check
          %p455 = pneg %p110
        $region30: #{tpu_custom_call.1} parent=23 // pred_check_branch
          %457 = sbr.rel (%p455) target = $region32
        $region31: #{tpu_custom_call.1} parent=23 // pred_region
          %p458 = scmp.lt.s32.totalorder %s22, 1
          %s459 = scalar_select %p458, %s22, 1
          %s460 = smul.addr %s459, 8
          %s461 = scalar_lea.vmem %s3, %s460
        $region32: #{tpu_custom_call.1} parent=23 // pred_fallthru
          _
        // Predicated region
        $region33: #{tpu_custom_call.1} parent=23 // pred_check
          %p462 = pneg %p136
        $region34: #{tpu_custom_call.1} parent=23 // pred_check_branch
          %464 = sbr.rel (%p462) target = $region36
        $region35: #{tpu_custom_call.1} parent=23 // pred_region
          %p465 = scmp.lt.s32.totalorder %s22, 1
          %s466 = scalar_select %p465, %s22, 1
          %s467 = smul.addr %s466, 8
          %s468 = scalar_lea.vmem %s4, %s467
        $region36: #{tpu_custom_call.1} parent=23 // pred_fallthru
          _
        // Predicated region
        $region37: #{tpu_custom_call.1} parent=23 // pred_check
          %p469 = pneg %p162
        $region38: #{tpu_custom_call.1} parent=23 // pred_check_branch
          %471 = sbr.rel (%p469) target = $region40
        $region39: #{tpu_custom_call.1} parent=23 // pred_region
          %p472 = scmp.lt.s32.totalorder %s22, 1
          %s473 = scalar_select %p472, %s22, 1
          %s474 = smul.addr %s473, 4
          %s475 = smul.addr %s474, 8
          %s476 = scalar_lea.vmem %s5, %s475
        $region40: #{tpu_custom_call.1} parent=23 // pred_fallthru
          _
        // Predicated region
        $region41: #{tpu_custom_call.1} parent=23 // pred_check
          %p477 = pneg %p188
        $region42: #{tpu_custom_call.1} parent=23 // pred_check_branch
          %479 = sbr.rel (%p477) target = $region44
        $region43: #{tpu_custom_call.1} parent=23 // pred_region
          %p480 = scmp.lt.s32.totalorder %s22, 1
          %s481 = scalar_select %p480, %s22, 1
          %s482 = scalar_lea.vmem %s6, %s481
        $region44: #{tpu_custom_call.1} parent=23 // pred_fallthru
          _
        // Predicated region
        $region45: #{tpu_custom_call.1} parent=23 // pred_check
          %p483 = pneg %p214
        $region46: #{tpu_custom_call.1} parent=23 // pred_check_branch
          %485 = sbr.rel (%p483) target = $region48
        $region47: #{tpu_custom_call.1} parent=23 // pred_region
          %p486 = scmp.lt.s32.totalorder %s22, 1
          %s487 = scalar_select %p486, %s22, 1
          %s488 = scalar_lea.vmem %s7, %s487
        $region48: #{tpu_custom_call.1} parent=23 // pred_fallthru
          _
        // Predicated region
        $region49: #{tpu_custom_call.1} parent=23 // pred_check
          %p489 = pneg %p240
        $region50: #{tpu_custom_call.1} parent=23 // pred_check_branch
          %491 = sbr.rel (%p489) target = $region52
        $region51: #{tpu_custom_call.1} parent=23 // pred_region
          %p492 = scmp.lt.s32.totalorder %s22, 1
          %s493 = scalar_select %p492, %s22, 1
          %s494 = scalar_lea.vmem %s8, %s493
        $region52: #{tpu_custom_call.1} parent=23 // pred_fallthru
          _
        // Predicated region
        $region53: #{tpu_custom_call.1} parent=23 // pred_check
          %p495 = pneg %p266
        $region54: #{tpu_custom_call.1} parent=23 // pred_check_branch
          %497 = sbr.rel (%p495) target = $region56
        $region55: #{tpu_custom_call.1} parent=23 // pred_region
          %p498 = scmp.lt.s32.totalorder %s22, 1
          %s499 = scalar_select %p498, %s22, 1
          %s500 = smul.addr %s499, 4
          %s501 = smul.addr %s500, 8
          %s502 = scalar_lea.vmem %s9, %s501
        $region56: #{tpu_custom_call.1} parent=23 // pred_fallthru
          _
        // Predicated region
        $region57: #{tpu_custom_call.1} parent=23 // pred_check
          %p503 = pneg %p292
        $region58: #{tpu_custom_call.1} parent=23 // pred_check_branch
          %505 = sbr.rel (%p503) target = $region60
        $region59: #{tpu_custom_call.1} parent=23 // pred_region
          %p506 = scmp.lt.s32.totalorder %s22, 1
          %s507 = scalar_select %p506, %s22, 1
          %s508 = scalar_lea.vmem %s10, %s507
        $region60: #{tpu_custom_call.1} parent=23 // pred_fallthru
          _
        // Predicated region
        $region61: #{tpu_custom_call.1} parent=23 // pred_check
          %p509 = pneg %p318
        $region62: #{tpu_custom_call.1} parent=23 // pred_check_branch
          %511 = sbr.rel (%p509) target = $region64
        $region63: #{tpu_custom_call.1} parent=23 // pred_region
          %p512 = scmp.lt.s32.totalorder %s22, 1
          %s513 = scalar_select %p512, %s22, 1
          %s514 = smul.addr %s513, 16
          %s515 = smul.addr %s514, 8
          %s516 = scalar_lea.vmem %s11, %s515
        $region64: #{tpu_custom_call.1} parent=23 // pred_fallthru
          _
        // Predicated region
        $region65: #{tpu_custom_call.1} parent=23 // pred_check
          %p517 = pneg %p344
        $region66: #{tpu_custom_call.1} parent=23 // pred_check_branch
          %519 = sbr.rel (%p517) target = $region68
        $region67: #{tpu_custom_call.1} parent=23 // pred_region
          %p520 = scmp.lt.s32.totalorder %s22, 1
          %s521 = scalar_select %p520, %s22, 1
          %s522 = scalar_lea.vmem %s12, %s521
        $region68: #{tpu_custom_call.1} parent=23 // pred_fallthru
          _
        // Predicated region
        $region69: #{tpu_custom_call.1} parent=23 // pred_check
          %p523 = pneg %p370
        $region70: #{tpu_custom_call.1} parent=23 // pred_check_branch
          %525 = sbr.rel (%p523) target = $region72
        $region71: #{tpu_custom_call.1} parent=23 // pred_region
          %p526 = scmp.lt.s32.totalorder %s22, 1
          %s527 = scalar_select %p526, %s22, 1
          %s528 = scalar_lea.vmem %s13, %s527
        $region72: #{tpu_custom_call.1} parent=23 // pred_fallthru
          _
        // Predicated region
        $region73: #{tpu_custom_call.1} parent=23 // pred_check
          %p529 = pneg %p396
        $region74: #{tpu_custom_call.1} parent=23 // pred_check_branch
          %531 = sbr.rel (%p529) target = $region76
        $region75: #{tpu_custom_call.1} parent=23 // pred_region
          %p532 = scmp.lt.s32.totalorder %s22, 1
          %s533 = scalar_select %p532, %s22, 1
          %s534 = scalar_lea.vmem %s14, %s533
        $region76: #{tpu_custom_call.1} parent=23 // pred_fallthru
          _
      $region24: #{tpu_custom_call.1} parent=5 // pred_fallthru
        _
      %p535 = scmp.le.s32.totalorder 1, %s22
      %p536 = scmp.lt.s32.totalorder %s22, 3
      %p537 = pnand %p535, %p536
      %p538 = pneg %p537
      // Predicated region
      $region77: #{tpu_custom_call.1} parent=5 // pred_check
        _
      $region78: #{tpu_custom_call.1} parent=5 // pred_check_branch
        %540 = sbr.rel (%p537) target = $region80
      $region79: #{tpu_custom_call.1} parent=5 // pred_region
        %s541 = ssub.s32 %s22, 1
        %p542 = pneg %p43
        %p543 = pneg %p40
        %p544 = pneg %p64
        %p545 = pneg %p61
        %p546 = scmp.lt.s32.totalorder %s27, 1
        %s547 = scalar_select %p546, %s27, 1
        %s548 = smul.addr %s547, 8
        %s549 = scalar_lea.vmem %s2, %s548
        %p550 = pneg %p90
        %p551 = pneg %p87
        %p552 = scmp.lt.s32.totalorder %s27, 1
        %s553 = scalar_select %p552, %s27, 1
        %s554 = smul.addr %s553, 8
        %s555 = scalar_lea.vmem %s3, %s554
        %p556 = pneg %p116
        %p557 = pneg %p113
        %p558 = scmp.lt.s32.totalorder %s27, 1
        %s559 = scalar_select %p558, %s27, 1
        %s560 = smul.addr %s559, 8
        %s561 = scalar_lea.vmem %s4, %s560
        %p562 = pneg %p142
        %p563 = pneg %p139
        %p564 = scmp.lt.s32.totalorder %s27, 1
        %s565 = scalar_select %p564, %s27, 1
        %s566 = smul.addr %s565, 4
        %s567 = smul.addr %s566, 8
        %s568 = scalar_lea.vmem %s5, %s567
        %p569 = pneg %p168
        %p570 = pneg %p165
        %p571 = scmp.lt.s32.totalorder %s27, 1
        %s572 = scalar_select %p571, %s27, 1
        %s573 = scalar_lea.vmem %s6, %s572
        %p574 = pneg %p194
        %p575 = pneg %p191
        %p576 = scmp.lt.s32.totalorder %s27, 1
        %s577 = scalar_select %p576, %s27, 1
        %s578 = scalar_lea.vmem %s7, %s577
        %p579 = pneg %p220
        %p580 = pneg %p217
        %p581 = scmp.lt.s32.totalorder %s27, 1
        %s582 = scalar_select %p581, %s27, 1
        %s583 = scalar_lea.vmem %s8, %s582
        %p584 = pneg %p246
        %p585 = pneg %p243
        %p586 = scmp.lt.s32.totalorder %s27, 1
        %s587 = scalar_select %p586, %s27, 1
        %s588 = smul.addr %s587, 4
        %s589 = smul.addr %s588, 8
        %s590 = scalar_lea.vmem %s9, %s589
        %p591 = pneg %p272
        %p592 = pneg %p269
        %p593 = scmp.lt.s32.totalorder %s27, 1
        %s594 = scalar_select %p593, %s27, 1
        %s595 = scalar_lea.vmem %s10, %s594
        %p596 = pneg %p298
        %p597 = pneg %p295
        %p598 = scmp.lt.s32.totalorder %s27, 1
        %s599 = scalar_select %p598, %s27, 1
        %s600 = smul.addr %s599, 16
        %s601 = smul.addr %s600, 8
        %s602 = scalar_lea.vmem %s11, %s601
        %p603 = pneg %p324
        %p604 = pneg %p321
        %p605 = scmp.lt.s32.totalorder %s27, 1
        %s606 = scalar_select %p605, %s27, 1
        %s607 = scalar_lea.vmem %s12, %s606
        %p608 = pneg %p350
        %p609 = pneg %p347
        %p610 = scmp.lt.s32.totalorder %s27, 1
        %s611 = scalar_select %p610, %s27, 1
        %s612 = scalar_lea.vmem %s13, %s611
        %p613 = pneg %p376
        %p614 = pneg %p373
        %p615 = scmp.lt.s32.totalorder %s27, 1
        %s616 = scalar_select %p615, %s27, 1
        %s617 = scalar_lea.vmem %s14, %s616
        %p618 = pneg %p402
        %p619 = pneg %p399
        %p620 = pneg %p423
        %p621 = pneg %p420
        %p622 = scmp.lt.s32.totalorder %s27, 1
        %s623 = scalar_select %p622, %s27, 1
        %s624 = smul.addr %s623, 8
        %s625 = scalar_lea.vmem %s2, %s624
        %p626 = scmp.lt.s32.totalorder %s27, 1
        %s627 = scalar_select %p626, %s27, 1
        %s628 = smul.addr %s627, 8
        %s629 = scalar_lea.vmem %s3, %s628
        %p630 = scmp.lt.s32.totalorder %s27, 1
        %s631 = scalar_select %p630, %s27, 1
        %s632 = smul.addr %s631, 8
        %s633 = scalar_lea.vmem %s4, %s632
        %p634 = scmp.lt.s32.totalorder %s27, 1
        %s635 = scalar_select %p634, %s27, 1
        %s636 = smul.addr %s635, 4
        %s637 = smul.addr %s636, 8
        %s638 = scalar_lea.vmem %s5, %s637
        %p639 = scmp.lt.s32.totalorder %s27, 1
        %s640 = scalar_select %p639, %s27, 1
        %s641 = scalar_lea.vmem %s6, %s640
        %p642 = scmp.lt.s32.totalorder %s27, 1
        %s643 = scalar_select %p642, %s27, 1
        %s644 = scalar_lea.vmem %s7, %s643
        %p645 = scmp.lt.s32.totalorder %s27, 1
        %s646 = scalar_select %p645, %s27, 1
        %s647 = scalar_lea.vmem %s8, %s646
        %p648 = scmp.lt.s32.totalorder %s27, 1
        %s649 = scalar_select %p648, %s27, 1
        %s650 = smul.addr %s649, 4
        %s651 = smul.addr %s650, 8
        %s652 = scalar_lea.vmem %s9, %s651
        %p653 = scmp.lt.s32.totalorder %s27, 1
        %s654 = scalar_select %p653, %s27, 1
        %s655 = scalar_lea.vmem %s10, %s654
        %p656 = scmp.lt.s32.totalorder %s27, 1
        %s657 = scalar_select %p656, %s27, 1
        %s658 = smul.addr %s657, 16
        %s659 = smul.addr %s658, 8
        %s660 = scalar_lea.vmem %s11, %s659
        %p661 = scmp.lt.s32.totalorder %s27, 1
        %s662 = scalar_select %p661, %s27, 1
        %s663 = scalar_lea.vmem %s12, %s662
        %p664 = scmp.lt.s32.totalorder %s27, 1
        %s665 = scalar_select %p664, %s27, 1
        %s666 = scalar_lea.vmem %s13, %s665
        %p667 = scmp.lt.s32.totalorder %s27, 1
        %s668 = scalar_select %p667, %s27, 1
        %s669 = scalar_lea.vmem %s14, %s668
        %p670 = scmp.eq.s32.totalorder %s27, 0
        // Predicated region
        $region81: #{tpu_custom_call.1} parent=79 // pred_check
          %p671 = pneg %p670
        $region82: #{tpu_custom_call.1} parent=79 // pred_check_branch
          %673 = sbr.rel (%p671) target = $region84
        $region83: #{tpu_custom_call.1} parent=79 // pred_region
          %v674 = vld [vmem:[%s0] sm:$0xff]
          %v675 = vld [vmem:[%s0 + $0x8] sm:$0xff]
          %vm676 = vcmask 261120
          %677 = vst.msk [vmem:[#allocation2] sm:$0xff] %vm676, %v674
          %678 = vst.msk [vmem:[#allocation2 + $0x8] sm:$0xff] %vm676, %v675
        $region84: #{tpu_custom_call.1} parent=79 // pred_fallthru
          _
        %v679 = vld [vmem:[#allocation2] sm:$0xff]
        %v680 = vld [vmem:[#allocation2 + $0x8] sm:$0xff]
        %v681 = vld [vmem:[%s625] sm:$0xff]
        %v682 = vld [vmem:[%s629] sm:$0xff]
        %v683 = vld [vmem:[%s633] sm:$0xff]
        %v684 = vld [vmem:[%s638] sm:$0xff]
        %v685 = vld [vmem:[%s638 + $0x8] sm:$0xff]
        %v686 = vld [vmem:[%s638 + $0x10] sm:$0xff]
        %v687 = vld [vmem:[%s638 + $0x18] sm:$0xff]
        %v688 = vld [vmem:[%s641] sm:$0x1]
        %691 = vrot.lane.b32.xlu0 %v679, 120
        %v692 = vpop.permute.xlu0 %691
        %693 = vrot.lane.b32.xlu0 %v680, 120
        %v694 = vpop.permute.xlu0 %693
        %695 = vrot.lane.b32.xlu0 %v679, 112
        %v696 = vpop.permute.xlu0 %695
        %697 = vrot.lane.b32.xlu0 %v680, 112
        %v698 = vpop.permute.xlu0 %697
        %699 = vrot.lane.b32.xlu0 %v679, 104
        %v700 = vpop.permute.xlu0 %699
        %701 = vrot.lane.b32.xlu0 %v680, 104
        %v702 = vpop.permute.xlu0 %701
        %vm703 = vcmask 64512
        %v704 = vsel %vm703, %v679, 0
        %v706 = vsel %vm703, %v680, 0
        %v708 = vsel %vm703, %v692, 0
        %v710 = vsel %vm703, %v694, 0
        %v712 = vsel %vm703, %v696, 0
        %v714 = vsel %vm703, %v698, 0
        %v716 = vsel %vm703, %v700, 0
        %v718 = vsel %vm703, %v702, 0
        %720 = vmatprep.subr.mxu0 0.0
        %721 = vmatpush1.msra.mxu0 %v681
        %722 = vmatprep.subr.mxu0 0.0
        %723 = vmatpush1.msra.mxu0 0.0
        %724 = vmatprep.subr.mxu0 0.0
        %725 = vmatpush1.msra.mxu0 0.0
        %726 = vmatprep.subr.mxu0 0.0
        %727 = vmatpush1.msra.mxu0 0.0
        %728 = vmatprep.subr.mxu0 0.0
        %729 = vmatpush1.msra.mxu0 0.0
        %730 = vmatprep.subr.mxu0 0.0
        %731 = vmatpush1.msra.mxu0 0.0
        %732 = vmatprep.subr.mxu0 0.0
        %733 = vmatpush1.msra.mxu0 0.0
        %734 = vmatprep.subr.mxu0 0.0
        %735 = vmatpush1.msra.mxu0 0.0
        %736 = vmatprep.subr.mxu0 0.0
        %737 = vmatpush1.msra.mxu0 0.0
        %738 = vmatprep.subr.mxu0 0.0
        %739 = vmatpush1.msra.mxu0 0.0
        %740 = vmatprep.subr.mxu0 0.0
        %741 = vmatpush1.msra.mxu0 0.0
        %742 = vmatprep.subr.mxu0 0.0
        %743 = vmatpush1.msra.mxu0 0.0
        %744 = vmatprep.subr.mxu0 0.0
        %745 = vmatpush1.msra.mxu0 0.0
        %746 = vmatprep.subr.mxu0 0.0
        %747 = vmatpush1.msra.mxu0 0.0
        %748 = vmatprep.subr.mxu0 0.0
        %749 = vmatpush1.msra.mxu0 0.0
        %750 = vmatprep.subr.mxu0 0.0
        %751 = vmatpush1.msra.mxu0 0.0
        %752 = vmatprep.subr.mxu0 0.0
        %753 = vmatpush1.msra.mxu0 0.0
        %754 = vmatprep.subr.mxu0 0.0
        %755 = vmatpush1.msra.mxu0 0.0
        %756 = vmatprep.subr.mxu0 0.0
        %757 = vmatpush1.msra.mxu0 0.0
        %758 = vmatprep.subr.mxu0 0.0
        %759 = vmatpush1.msra.mxu0 0.0
        %760 = vmatprep.subr.mxu0 0.0
        %761 = vmatpush1.msra.mxu0 0.0
        %762 = vmatprep.subr.mxu0 0.0
        %763 = vmatpush1.msra.mxu0 0.0
        %764 = vmatprep.subr.mxu0 0.0
        %765 = vmatpush1.msra.mxu0 0.0
        %766 = vmatprep.subr.mxu0 0.0
        %767 = vmatpush1.msra.mxu0 0.0
        %768 = vmatprep.subr.mxu0 0.0
        %769 = vmatpush1.msra.mxu0 0.0
        %770 = vmatprep.subr.mxu0 0.0
        %771 = vmatpush1.msra.mxu0 0.0
        %772 = vmatprep.subr.mxu0 0.0
        %773 = vmatpush1.msra.mxu0 0.0
        %774 = vmatprep.subr.mxu0 0.0
        %775 = vmatpush1.msra.mxu0 0.0
        %776 = vmatprep.subr.mxu0 0.0
        %777 = vmatpush1.msra.mxu0 0.0
        %778 = vmatprep.subr.mxu0 0.0
        %779 = vmatpush1.msra.mxu0 0.0
        %780 = vmatprep.subr.mxu0 0.0
        %781 = vmatpush1.msra.mxu0 0.0
        %782 = vmatprep.subr.mxu0 0.0
        %783 = vmatpush1.msra.mxu0 0.0
        %784 = vmatprep.mubr.f32.mxu0 0.0
        %785 = vmatmul.mubr.f32.gmra.mrb[0].mxu0 %v704
        %v786 = vpop.f32.mrb[0].mxu0
        %v787 = vadd.f32 0.0, %v786
        %v788 = vpop.f32.mrb[0].mxu0
        %789 = vmatprep.mubr.f32.mxu0 0.0
        %790 = vmatmul.mubr.f32.gmra.mrb[0].mxu0 %v706
        %v791 = vpop.f32.mrb[0].mxu0
        %v792 = vadd.f32 0.0, %v791
        %v793 = vpop.f32.mrb[0].mxu0
        %794 = vmatprep.mubr.f32.mxu0 0.0
        %795 = vmatmul.mubr.f32.gmra.mrb[0].mxu0 %v708
        %v796 = vpop.f32.mrb[0].mxu0
        %v797 = vadd.f32 0.0, %v796
        %v798 = vpop.f32.mrb[0].mxu0
        %799 = vmatprep.mubr.f32.mxu0 0.0
        %800 = vmatmul.mubr.f32.gmra.mrb[0].mxu0 %v710
        %v801 = vpop.f32.mrb[0].mxu0
        %v802 = vadd.f32 0.0, %v801
        %v803 = vpop.f32.mrb[0].mxu0
        %804 = vmatprep.mubr.f32.mxu0 0.0
        %805 = vmatmul.mubr.f32.gmra.mrb[0].mxu0 %v712
        %v806 = vpop.f32.mrb[0].mxu0
        %v807 = vadd.f32 0.0, %v806
        %v808 = vpop.f32.mrb[0].mxu0
        %809 = vmatprep.mubr.f32.mxu0 0.0
        %810 = vmatmul.mubr.f32.gmra.mrb[0].mxu0 %v714
        %v811 = vpop.f32.mrb[0].mxu0
        %v812 = vadd.f32 0.0, %v811
        %v813 = vpop.f32.mrb[0].mxu0
        %814 = vmatprep.mubr.f32.mxu0 0.0
        %815 = vmatmul.mubr.f32.gmra.mrb[0].mxu0 %v716
        %v816 = vpop.f32.mrb[0].mxu0
        %v817 = vadd.f32 0.0, %v816
        %v818 = vpop.f32.mrb[0].mxu0
        %819 = vmatprep.mubr.f32.mxu0 0.0
        %820 = vmatmul.mubr.f32.gmra.mrb[0].mxu0 %v718
        %v821 = vpop.f32.mrb[0].mxu0
        %v822 = vadd.f32 0.0, %v821
        %v823 = vpop.f32.mrb[0].mxu0
        %824 = vdwg.mxu0
        %v825 = vmul.f32 %v787, 0.17677669
        %v826 = vmul.f32 %v792, 0.17677669
        %v827 = vmul.f32 %v797, 0.17677669
        %v828 = vmul.f32 %v802, 0.17677669
        %v829 = vmul.f32 %v807, 0.17677669
        %v830 = vmul.f32 %v812, 0.17677669
        %v831 = vmul.f32 %v817, 0.17677669
        %v832 = vmul.f32 %v822, 0.17677669
        %833 = vmatprep.subr.mxu0 0.0
        %834 = vmatpush1.msra.mxu0 %v682
        %835 = vmatprep.subr.mxu0 0.0
        %836 = vmatpush1.msra.mxu0 0.0
        %837 = vmatprep.subr.mxu0 0.0
        %838 = vmatpush1.msra.mxu0 0.0
        %839 = vmatprep.subr.mxu0 0.0
        %840 = vmatpush1.msra.mxu0 0.0
        %841 = vmatprep.subr.mxu0 0.0
        %842 = vmatpush1.msra.mxu0 0.0
        %843 = vmatprep.subr.mxu0 0.0
        %844 = vmatpush1.msra.mxu0 0.0
        %845 = vmatprep.subr.mxu0 0.0
        %846 = vmatpush1.msra.mxu0 0.0
        %847 = vmatprep.subr.mxu0 0.0
        %848 = vmatpush1.msra.mxu0 0.0
        %849 = vmatprep.subr.mxu0 0.0
        %850 = vmatpush1.msra.mxu0 0.0
        %851 = vmatprep.subr.mxu0 0.0
        %852 = vmatpush1.msra.mxu0 0.0
        %853 = vmatprep.subr.mxu0 0.0
        %854 = vmatpush1.msra.mxu0 0.0
        %855 = vmatprep.subr.mxu0 0.0
        %856 = vmatpush1.msra.mxu0 0.0
        %857 = vmatprep.subr.mxu0 0.0
        %858 = vmatpush1.msra.mxu0 0.0
        %859 = vmatprep.subr.mxu0 0.0
        %860 = vmatpush1.msra.mxu0 0.0
        %861 = vmatprep.subr.mxu0 0.0
        %862 = vmatpush1.msra.mxu0 0.0
        %863 = vmatprep.subr.mxu0 0.0
        %864 = vmatpush1.msra.mxu0 0.0
        %865 = vmatprep.subr.mxu0 0.0
        %866 = vmatpush1.msra.mxu0 0.0
        %867 = vmatprep.subr.mxu0 0.0
        %868 = vmatpush1.msra.mxu0 0.0
        %869 = vmatprep.subr.mxu0 0.0
        %870 = vmatpush1.msra.mxu0 0.0
        %871 = vmatprep.subr.mxu0 0.0
        %872 = vmatpush1.msra.mxu0 0.0
        %873 = vmatprep.subr.mxu0 0.0
        %874 = vmatpush1.msra.mxu0 0.0
        %875 = vmatprep.subr.mxu0 0.0
        %876 = vmatpush1.msra.mxu0 0.0
        %877 = vmatprep.subr.mxu0 0.0
        %878 = vmatpush1.msra.mxu0 0.0
        %879 = vmatprep.subr.mxu0 0.0
        %880 = vmatpush1.msra.mxu0 0.0
        %881 = vmatprep.subr.mxu0 0.0
        %882 = vmatpush1.msra.mxu0 0.0
        %883 = vmatprep.subr.mxu0 0.0
        %884 = vmatpush1.msra.mxu0 0.0
        %885 = vmatprep.subr.mxu0 0.0
        %886 = vmatpush1.msra.mxu0 0.0
        %887 = vmatprep.subr.mxu0 0.0
        %888 = vmatpush1.msra.mxu0 0.0
        %889 = vmatprep.subr.mxu0 0.0
        %890 = vmatpush1.msra.mxu0 0.0
        %891 = vmatprep.subr.mxu0 0.0
        %892 = vmatpush1.msra.mxu0 0.0
        %893 = vmatprep.subr.mxu0 0.0
        %894 = vmatpush1.msra.mxu0 0.0
        %895 = vmatprep.subr.mxu0 0.0
        %896 = vmatpush1.msra.mxu0 0.0
        %897 = vmatprep.mubr.f32.mxu0 0.0
        %898 = vmatmul.mubr.f32.gmra.mrb[0].mxu0 %v704
        %v899 = vpop.f32.mrb[0].mxu0
        %v900 = vadd.f32 0.0, %v899
        %v901 = vpop.f32.mrb[0].mxu0
        %902 = vmatprep.mubr.f32.mxu0 0.0
        %903 = vmatmul.mubr.f32.gmra.mrb[0].mxu0 %v706
        %v904 = vpop.f32.mrb[0].mxu0
        %v905 = vadd.f32 0.0, %v904
        %v906 = vpop.f32.mrb[0].mxu0
        %907 = vmatprep.mubr.f32.mxu0 0.0
        %908 = vmatmul.mubr.f32.gmra.mrb[0].mxu0 %v708
        %v909 = vpop.f32.mrb[0].mxu0
        %v910 = vadd.f32 0.0, %v909
        %v911 = vpop.f32.mrb[0].mxu0
        %912 = vmatprep.mubr.f32.mxu0 0.0
        %913 = vmatmul.mubr.f32.gmra.mrb[0].mxu0 %v710
        %v914 = vpop.f32.mrb[0].mxu0
        %v915 = vadd.f32 0.0, %v914
        %v916 = vpop.f32.mrb[0].mxu0
        %917 = vmatprep.mubr.f32.mxu0 0.0
        %918 = vmatmul.mubr.f32.gmra.mrb[0].mxu0 %v712
        %v919 = vpop.f32.mrb[0].mxu0
        %v920 = vadd.f32 0.0, %v919
        %v921 = vpop.f32.mrb[0].mxu0
        %922 = vmatprep.mubr.f32.mxu0 0.0
        %923 = vmatmul.mubr.f32.gmra.mrb[0].mxu0 %v714
        %v924 = vpop.f32.mrb[0].mxu0
        %v925 = vadd.f32 0.0, %v924
        %v926 = vpop.f32.mrb[0].mxu0
        %927 = vmatprep.mubr.f32.mxu0 0.0
        %928 = vmatmul.mubr.f32.gmra.mrb[0].mxu0 %v716
        %v929 = vpop.f32.mrb[0].mxu0
        %v930 = vadd.f32 0.0, %v929
        %v931 = vpop.f32.mrb[0].mxu0
        %932 = vmatprep.mubr.f32.mxu0 0.0
        %933 = vmatmul.mubr.f32.gmra.mrb[0].mxu0 %v718
        %v934 = vpop.f32.mrb[0].mxu0
        %v935 = vadd.f32 0.0, %v934
        %v936 = vpop.f32.mrb[0].mxu0
        %937 = vdwg.mxu0
        %938 = vmatprep.subr.mxu0 0.0
        %939 = vmatpush1.msra.mxu0 %v683
        %940 = vmatprep.subr.mxu0 0.0
        %941 = vmatpush1.msra.mxu0 0.0
        %942 = vmatprep.subr.mxu0 0.0
        %943 = vmatpush1.msra.mxu0 0.0
        %944 = vmatprep.subr.mxu0 0.0
        %945 = vmatpush1.msra.mxu0 0.0
        %946 = vmatprep.subr.mxu0 0.0
        %947 = vmatpush1.msra.mxu0 0.0
        %948 = vmatprep.subr.mxu0 0.0
        %949 = vmatpush1.msra.mxu0 0.0
        %950 = vmatprep.subr.mxu0 0.0
        %951 = vmatpush1.msra.mxu0 0.0
        %952 = vmatprep.subr.mxu0 0.0
        %953 = vmatpush1.msra.mxu0 0.0
        %954 = vmatprep.subr.mxu0 0.0
        %955 = vmatpush1.msra.mxu0 0.0
        %956 = vmatprep.subr.mxu0 0.0
        %957 = vmatpush1.msra.mxu0 0.0
        %958 = vmatprep.subr.mxu0 0.0
        %959 = vmatpush1.msra.mxu0 0.0
        %960 = vmatprep.subr.mxu0 0.0
        %961 = vmatpush1.msra.mxu0 0.0
        %962 = vmatprep.subr.mxu0 0.0
        %963 = vmatpush1.msra.mxu0 0.0
        %964 = vmatprep.subr.mxu0 0.0
        %965 = vmatpush1.msra.mxu0 0.0
        %966 = vmatprep.subr.mxu0 0.0
        %967 = vmatpush1.msra.mxu0 0.0
        %968 = vmatprep.subr.mxu0 0.0
        %969 = vmatpush1.msra.mxu0 0.0
        %970 = vmatprep.subr.mxu0 0.0
        %971 = vmatpush1.msra.mxu0 0.0
        %972 = vmatprep.subr.mxu0 0.0
        %973 = vmatpush1.msra.mxu0 0.0
        %974 = vmatprep.subr.mxu0 0.0
        %975 = vmatpush1.msra.mxu0 0.0
        %976 = vmatprep.subr.mxu0 0.0
        %977 = vmatpush1.msra.mxu0 0.0
        %978 = vmatprep.subr.mxu0 0.0
        %979 = vmatpush1.msra.mxu0 0.0
        %980 = vmatprep.subr.mxu0 0.0
        %981 = vmatpush1.msra.mxu0 0.0
        %982 = vmatprep.subr.mxu0 0.0
        %983 = vmatpush1.msra.mxu0 0.0
        %984 = vmatprep.subr.mxu0 0.0
        %985 = vmatpush1.msra.mxu0 0.0
        %986 = vmatprep.subr.mxu0 0.0
        %987 = vmatpush1.msra.mxu0 0.0
        %988 = vmatprep.subr.mxu0 0.0
        %989 = vmatpush1.msra.mxu0 0.0
        %990 = vmatprep.subr.mxu0 0.0
        %991 = vmatpush1.msra.mxu0 0.0
        %992 = vmatprep.subr.mxu0 0.0
        %993 = vmatpush1.msra.mxu0 0.0
        %994 = vmatprep.subr.mxu0 0.0
        %995 = vmatpush1.msra.mxu0 0.0
        %996 = vmatprep.subr.mxu0 0.0
        %997 = vmatpush1.msra.mxu0 0.0
        %998 = vmatprep.subr.mxu0 0.0
        %999 = vmatpush1.msra.mxu0 0.0
        %1000 = vmatprep.subr.mxu0 0.0
        %1001 = vmatpush1.msra.mxu0 0.0
        %1002 = vmatprep.mubr.f32.mxu0 0.0
        %1003 = vmatmul.mubr.f32.gmra.mrb[0].mxu0 %v704
        %v1004 = vpop.f32.mrb[0].mxu0
        %v1005 = vadd.f32 0.0, %v1004
        %v1006 = vpop.f32.mrb[0].mxu0
        %1007 = vmatprep.mubr.f32.mxu0 0.0
        %1008 = vmatmul.mubr.f32.gmra.mrb[0].mxu0 %v706
        %v1009 = vpop.f32.mrb[0].mxu0
        %v1010 = vadd.f32 0.0, %v1009
        %v1011 = vpop.f32.mrb[0].mxu0
        %1012 = vmatprep.mubr.f32.mxu0 0.0
        %1013 = vmatmul.mubr.f32.gmra.mrb[0].mxu0 %v708
        %v1014 = vpop.f32.mrb[0].mxu0
        %v1015 = vadd.f32 0.0, %v1014
        %v1016 = vpop.f32.mrb[0].mxu0
        %1017 = vmatprep.mubr.f32.mxu0 0.0
        %1018 = vmatmul.mubr.f32.gmra.mrb[0].mxu0 %v710
        %v1019 = vpop.f32.mrb[0].mxu0
        %v1020 = vadd.f32 0.0, %v1019
        %v1021 = vpop.f32.mrb[0].mxu0
        %1022 = vmatprep.mubr.f32.mxu0 0.0
        %1023 = vmatmul.mubr.f32.gmra.mrb[0].mxu0 %v712
        %v1024 = vpop.f32.mrb[0].mxu0
        %v1025 = vadd.f32 0.0, %v1024
        %v1026 = vpop.f32.mrb[0].mxu0
        %1027 = vmatprep.mubr.f32.mxu0 0.0
        %1028 = vmatmul.mubr.f32.gmra.mrb[0].mxu0 %v714
        %v1029 = vpop.f32.mrb[0].mxu0
        %v1030 = vadd.f32 0.0, %v1029
        %v1031 = vpop.f32.mrb[0].mxu0
        %1032 = vmatprep.mubr.f32.mxu0 0.0
        %1033 = vmatmul.mubr.f32.gmra.mrb[0].mxu0 %v716
        %v1034 = vpop.f32.mrb[0].mxu0
        %v1035 = vadd.f32 0.0, %v1034
        %v1036 = vpop.f32.mrb[0].mxu0
        %1037 = vmatprep.mubr.f32.mxu0 0.0
        %1038 = vmatmul.mubr.f32.gmra.mrb[0].mxu0 %v718
        %v1039 = vpop.f32.mrb[0].mxu0
        %v1040 = vadd.f32 0.0, %v1039
        %v1041 = vpop.f32.mrb[0].mxu0
        %1042 = vdwg.mxu0
        %v1044 = vsel %vm703, %v825, 0
        %v1047 = vsel %vm703, %v900, 0
        %1049 = vmatprep.subr.mxu0 0.0
        %1050 = vmatpush1.xpose.msra.mxu0 %v1047
        %1051 = vmatprep.subr.mxu0 0.0
        %1052 = vmatpush1.xpose.msra.mxu0 0.0
        %1053 = vmatprep.subr.mxu0 0.0
        %1054 = vmatpush1.xpose.msra.mxu0 0.0
        %1055 = vmatprep.subr.mxu0 0.0
        %1056 = vmatpush1.xpose.msra.mxu0 0.0
        %1057 = vmatprep.subr.mxu0 0.0
        %1058 = vmatpush1.xpose.msra.mxu0 0.0
        %1059 = vmatprep.subr.mxu0 0.0
        %1060 = vmatpush1.xpose.msra.mxu0 0.0
        %1061 = vmatprep.subr.mxu0 0.0
        %1062 = vmatpush1.xpose.msra.mxu0 0.0
        %1063 = vmatprep.subr.mxu0 0.0
        %1064 = vmatpush1.xpose.msra.mxu0 0.0
        %1065 = vmatprep.subr.mxu0 0.0
        %1066 = vmatpush1.xpose.msra.mxu0 0.0
        %1067 = vmatprep.subr.mxu0 0.0
        %1068 = vmatpush1.xpose.msra.mxu0 0.0
        %1069 = vmatprep.subr.mxu0 0.0
        %1070 = vmatpush1.xpose.msra.mxu0 0.0
        %1071 = vmatprep.subr.mxu0 0.0
        %1072 = vmatpush1.xpose.msra.mxu0 0.0
        %1073 = vmatprep.subr.mxu0 0.0
        %1074 = vmatpush1.xpose.msra.mxu0 0.0
        %1075 = vmatprep.subr.mxu0 0.0
        %1076 = vmatpush1.xpose.msra.mxu0 0.0
        %1077 = vmatprep.subr.mxu0 0.0
        %1078 = vmatpush1.xpose.msra.mxu0 0.0
        %1079 = vmatprep.subr.mxu0 0.0
        %1080 = vmatpush1.xpose.msra.mxu0 0.0
        %1081 = vmatprep.subr.mxu0 0.0
        %1082 = vmatpush1.xpose.msra.mxu0 0.0
        %1083 = vmatprep.subr.mxu0 0.0
        %1084 = vmatpush1.xpose.msra.mxu0 0.0
        %1085 = vmatprep.subr.mxu0 0.0
        %1086 = vmatpush1.xpose.msra.mxu0 0.0
        %1087 = vmatprep.subr.mxu0 0.0
        %1088 = vmatpush1.xpose.msra.mxu0 0.0
        %1089 = vmatprep.subr.mxu0 0.0
        %1090 = vmatpush1.xpose.msra.mxu0 0.0
        %1091 = vmatprep.subr.mxu0 0.0
        %1092 = vmatpush1.xpose.msra.mxu0 0.0
        %1093 = vmatprep.subr.mxu0 0.0
        %1094 = vmatpush1.xpose.msra.mxu0 0.0
        %1095 = vmatprep.subr.mxu0 0.0
        %1096 = vmatpush1.xpose.msra.mxu0 0.0
        %1097 = vmatprep.subr.mxu0 0.0
        %1098 = vmatpush1.xpose.msra.mxu0 0.0
        %1099 = vmatprep.subr.mxu0 0.0
        %1100 = vmatpush1.xpose.msra.mxu0 0.0
        %1101 = vmatprep.subr.mxu0 0.0
        %1102 = vmatpush1.xpose.msra.mxu0 0.0
        %1103 = vmatprep.subr.mxu0 0.0
        %1104 = vmatpush1.xpose.msra.mxu0 0.0
        %1105 = vmatprep.subr.mxu0 0.0
        %1106 = vmatpush1.xpose.msra.mxu0 0.0
        %1107 = vmatprep.subr.mxu0 0.0
        %1108 = vmatpush1.xpose.msra.mxu0 0.0
        %1109 = vmatprep.subr.mxu0 0.0
        %1110 = vmatpush1.xpose.msra.mxu0 0.0
        %1111 = vmatprep.subr.mxu0 0.0
        %1112 = vmatpush1.xpose.msra.mxu0 0.0
        %1113 = vmatprep.mubr.f32.mxu0 0.0
        %1114 = vmatmul.mubr.f32.gmra.mrb[0].mxu0 %v1044
        %v1115 = vpop.f32.mrb[0].mxu0
        %v1116 = vadd.f32 0.0, %v1115
        %v1117 = vpop.f32.mrb[0].mxu0
        %1118 = vdwg.mxu0
        %v1120 = vsel %vm703, %v826, 0
        %v1123 = vsel %vm703, %v905, 0
        %1125 = vmatprep.subr.mxu0 0.0
        %1126 = vmatpush1.xpose.msra.mxu0 %v1123
        %1127 = vmatprep.subr.mxu0 0.0
        %1128 = vmatpush1.xpose.msra.mxu0 0.0
        %1129 = vmatprep.subr.mxu0 0.0
        %1130 = vmatpush1.xpose.msra.mxu0 0.0
        %1131 = vmatprep.subr.mxu0 0.0
        %1132 = vmatpush1.xpose.msra.mxu0 0.0
        %1133 = vmatprep.subr.mxu0 0.0
        %1134 = vmatpush1.xpose.msra.mxu0 0.0
        %1135 = vmatprep.subr.mxu0 0.0
        %1136 = vmatpush1.xpose.msra.mxu0 0.0
        %1137 = vmatprep.subr.mxu0 0.0
        %1138 = vmatpush1.xpose.msra.mxu0 0.0
        %1139 = vmatprep.subr.mxu0 0.0
        %1140 = vmatpush1.xpose.msra.mxu0 0.0
        %1141 = vmatprep.subr.mxu0 0.0
        %1142 = vmatpush1.xpose.msra.mxu0 0.0
        %1143 = vmatprep.subr.mxu0 0.0
        %1144 = vmatpush1.xpose.msra.mxu0 0.0
        %1145 = vmatprep.subr.mxu0 0.0
        %1146 = vmatpush1.xpose.msra.mxu0 0.0
        %1147 = vmatprep.subr.mxu0 0.0
        %1148 = vmatpush1.xpose.msra.mxu0 0.0
        %1149 = vmatprep.subr.mxu0 0.0
        %1150 = vmatpush1.xpose.msra.mxu0 0.0
        %1151 = vmatprep.subr.mxu0 0.0
        %1152 = vmatpush1.xpose.msra.mxu0 0.0
        %1153 = vmatprep.subr.mxu0 0.0
        %1154 = vmatpush1.xpose.msra.mxu0 0.0
        %1155 = vmatprep.subr.mxu0 0.0
        %1156 = vmatpush1.xpose.msra.mxu0 0.0
        %1157 = vmatprep.subr.mxu0 0.0
        %1158 = vmatpush1.xpose.msra.mxu0 0.0
        %1159 = vmatprep.subr.mxu0 0.0
        %1160 = vmatpush1.xpose.msra.mxu0 0.0
        %1161 = vmatprep.subr.mxu0 0.0
        %1162 = vmatpush1.xpose.msra.mxu0 0.0
        %1163 = vmatprep.subr.mxu0 0.0
        %1164 = vmatpush1.xpose.msra.mxu0 0.0
        %1165 = vmatprep.subr.mxu0 0.0
        %1166 = vmatpush1.xpose.msra.mxu0 0.0
        %1167 = vmatprep.subr.mxu0 0.0
        %1168 = vmatpush1.xpose.msra.mxu0 0.0
        %1169 = vmatprep.subr.mxu0 0.0
        %1170 = vmatpush1.xpose.msra.mxu0 0.0
        %1171 = vmatprep.subr.mxu0 0.0
        %1172 = vmatpush1.xpose.msra.mxu0 0.0
        %1173 = vmatprep.subr.mxu0 0.0
        %1174 = vmatpush1.xpose.msra.mxu0 0.0
        %1175 = vmatprep.subr.mxu0 0.0
        %1176 = vmatpush1.xpose.msra.mxu0 0.0
        %1177 = vmatprep.subr.mxu0 0.0
        %1178 = vmatpush1.xpose.msra.mxu0 0.0
        %1179 = vmatprep.subr.mxu0 0.0
        %1180 = vmatpush1.xpose.msra.mxu0 0.0
        %1181 = vmatprep.subr.mxu0 0.0
        %1182 = vmatpush1.xpose.msra.mxu0 0.0
        %1183 = vmatprep.subr.mxu0 0.0
        %1184 = vmatpush1.xpose.msra.mxu0 0.0
        %1185 = vmatprep.subr.mxu0 0.0
        %1186 = vmatpush1.xpose.msra.mxu0 0.0
        %1187 = vmatprep.subr.mxu0 0.0
        %1188 = vmatpush1.xpose.msra.mxu0 0.0
        %1189 = vmatprep.mubr.f32.mxu0 0.0
        %1190 = vmatmul.mubr.f32.gmra.mrb[0].mxu0 %v1120
        %v1191 = vpop.f32.mrb[0].mxu0
        %v1192 = vadd.f32 0.0, %v1191
        %v1193 = vpop.f32.mrb[0].mxu0
        %1194 = vdwg.mxu0
        %v1196 = vsel %vm703, %v827, 0
        %v1199 = vsel %vm703, %v910, 0
        %1201 = vmatprep.subr.mxu0 0.0
        %1202 = vmatpush1.xpose.msra.mxu0 %v1199
        %1203 = vmatprep.subr.mxu0 0.0
        %1204 = vmatpush1.xpose.msra.mxu0 0.0
        %1205 = vmatprep.subr.mxu0 0.0
        %1206 = vmatpush1.xpose.msra.mxu0 0.0
        %1207 = vmatprep.subr.mxu0 0.0
        %1208 = vmatpush1.xpose.msra.mxu0 0.0
        %1209 = vmatprep.subr.mxu0 0.0
        %1210 = vmatpush1.xpose.msra.mxu0 0.0
        %1211 = vmatprep.subr.mxu0 0.0
        %1212 = vmatpush1.xpose.msra.mxu0 0.0
        %1213 = vmatprep.subr.mxu0 0.0
        %1214 = vmatpush1.xpose.msra.mxu0 0.0
        %1215 = vmatprep.subr.mxu0 0.0
        %1216 = vmatpush1.xpose.msra.mxu0 0.0
        %1217 = vmatprep.subr.mxu0 0.0
        %1218 = vmatpush1.xpose.msra.mxu0 0.0
        %1219 = vmatprep.subr.mxu0 0.0
        %1220 = vmatpush1.xpose.msra.mxu0 0.0
        %1221 = vmatprep.subr.mxu0 0.0
        %1222 = vmatpush1.xpose.msra.mxu0 0.0
        %1223 = vmatprep.subr.mxu0 0.0
        %1224 = vmatpush1.xpose.msra.mxu0 0.0
        %1225 = vmatprep.subr.mxu0 0.0
        %1226 = vmatpush1.xpose.msra.mxu0 0.0
        %1227 = vmatprep.subr.mxu0 0.0
        %1228 = vmatpush1.xpose.msra.mxu0 0.0
        %1229 = vmatprep.subr.mxu0 0.0
        %1230 = vmatpush1.xpose.msra.mxu0 0.0
        %1231 = vmatprep.subr.mxu0 0.0
        %1232 = vmatpush1.xpose.msra.mxu0 0.0
        %1233 = vmatprep.subr.mxu0 0.0
        %1234 = vmatpush1.xpose.msra.mxu0 0.0
        %1235 = vmatprep.subr.mxu0 0.0
        %1236 = vmatpush1.xpose.msra.mxu0 0.0
        %1237 = vmatprep.subr.mxu0 0.0
        %1238 = vmatpush1.xpose.msra.mxu0 0.0
        %1239 = vmatprep.subr.mxu0 0.0
        %1240 = vmatpush1.xpose.msra.mxu0 0.0
        %1241 = vmatprep.subr.mxu0 0.0
        %1242 = vmatpush1.xpose.msra.mxu0 0.0
        %1243 = vmatprep.subr.mxu0 0.0
        %1244 = vmatpush1.xpose.msra.mxu0 0.0
        %1245 = vmatprep.subr.mxu0 0.0
        %1246 = vmatpush1.xpose.msra.mxu0 0.0
        %1247 = vmatprep.subr.mxu0 0.0
        %1248 = vmatpush1.xpose.msra.mxu0 0.0
        %1249 = vmatprep.subr.mxu0 0.0
        %1250 = vmatpush1.xpose.msra.mxu0 0.0
        %1251 = vmatprep.subr.mxu0 0.0
        %1252 = vmatpush1.xpose.msra.mxu0 0.0
        %1253 = vmatprep.subr.mxu0 0.0
        %1254 = vmatpush1.xpose.msra.mxu0 0.0
        %1255 = vmatprep.subr.mxu0 0.0
        %1256 = vmatpush1.xpose.msra.mxu0 0.0
        %1257 = vmatprep.subr.mxu0 0.0
        %1258 = vmatpush1.xpose.msra.mxu0 0.0
        %1259 = vmatprep.subr.mxu0 0.0
        %1260 = vmatpush1.xpose.msra.mxu0 0.0
        %1261 = vmatprep.subr.mxu0 0.0
        %1262 = vmatpush1.xpose.msra.mxu0 0.0
        %1263 = vmatprep.subr.mxu0 0.0
        %1264 = vmatpush1.xpose.msra.mxu0 0.0
        %1265 = vmatprep.mubr.f32.mxu0 0.0
        %1266 = vmatmul.mubr.f32.gmra.mrb[0].mxu0 %v1196
        %v1267 = vpop.f32.mrb[0].mxu0
        %v1268 = vadd.f32 0.0, %v1267
        %v1269 = vpop.f32.mrb[0].mxu0
        %1270 = vdwg.mxu0
        %v1272 = vsel %vm703, %v828, 0
        %v1275 = vsel %vm703, %v915, 0
        %1277 = vmatprep.subr.mxu0 0.0
        %1278 = vmatpush1.xpose.msra.mxu0 %v1275
        %1279 = vmatprep.subr.mxu0 0.0
        %1280 = vmatpush1.xpose.msra.mxu0 0.0
        %1281 = vmatprep.subr.mxu0 0.0
        %1282 = vmatpush1.xpose.msra.mxu0 0.0
        %1283 = vmatprep.subr.mxu0 0.0
        %1284 = vmatpush1.xpose.msra.mxu0 0.0
        %1285 = vmatprep.subr.mxu0 0.0
        %1286 = vmatpush1.xpose.msra.mxu0 0.0
        %1287 = vmatprep.subr.mxu0 0.0
        %1288 = vmatpush1.xpose.msra.mxu0 0.0
        %1289 = vmatprep.subr.mxu0 0.0
        %1290 = vmatpush1.xpose.msra.mxu0 0.0
        %1291 = vmatprep.subr.mxu0 0.0
        %1292 = vmatpush1.xpose.msra.mxu0 0.0
        %1293 = vmatprep.subr.mxu0 0.0
        %1294 = vmatpush1.xpose.msra.mxu0 0.0
        %1295 = vmatprep.subr.mxu0 0.0
        %1296 = vmatpush1.xpose.msra.mxu0 0.0
        %1297 = vmatprep.subr.mxu0 0.0
        %1298 = vmatpush1.xpose.msra.mxu0 0.0
        %1299 = vmatprep.subr.mxu0 0.0
        %1300 = vmatpush1.xpose.msra.mxu0 0.0
        %1301 = vmatprep.subr.mxu0 0.0
        %1302 = vmatpush1.xpose.msra.mxu0 0.0
        %1303 = vmatprep.subr.mxu0 0.0
        %1304 = vmatpush1.xpose.msra.mxu0 0.0
        %1305 = vmatprep.subr.mxu0 0.0
        %1306 = vmatpush1.xpose.msra.mxu0 0.0
        %1307 = vmatprep.subr.mxu0 0.0
        %1308 = vmatpush1.xpose.msra.mxu0 0.0
        %1309 = vmatprep.subr.mxu0 0.0
        %1310 = vmatpush1.xpose.msra.mxu0 0.0
        %1311 = vmatprep.subr.mxu0 0.0
        %1312 = vmatpush1.xpose.msra.mxu0 0.0
        %1313 = vmatprep.subr.mxu0 0.0
        %1314 = vmatpush1.xpose.msra.mxu0 0.0
        %1315 = vmatprep.subr.mxu0 0.0
        %1316 = vmatpush1.xpose.msra.mxu0 0.0
        %1317 = vmatprep.subr.mxu0 0.0
        %1318 = vmatpush1.xpose.msra.mxu0 0.0
        %1319 = vmatprep.subr.mxu0 0.0
        %1320 = vmatpush1.xpose.msra.mxu0 0.0
        %1321 = vmatprep.subr.mxu0 0.0
        %1322 = vmatpush1.xpose.msra.mxu0 0.0
        %1323 = vmatprep.subr.mxu0 0.0
        %1324 = vmatpush1.xpose.msra.mxu0 0.0
        %1325 = vmatprep.subr.mxu0 0.0
        %1326 = vmatpush1.xpose.msra.mxu0 0.0
        %1327 = vmatprep.subr.mxu0 0.0
        %1328 = vmatpush1.xpose.msra.mxu0 0.0
        %1329 = vmatprep.subr.mxu0 0.0
        %1330 = vmatpush1.xpose.msra.mxu0 0.0
        %1331 = vmatprep.subr.mxu0 0.0
        %1332 = vmatpush1.xpose.msra.mxu0 0.0
        %1333 = vmatprep.subr.mxu0 0.0
        %1334 = vmatpush1.xpose.msra.mxu0 0.0
        %1335 = vmatprep.subr.mxu0 0.0
        %1336 = vmatpush1.xpose.msra.mxu0 0.0
        %1337 = vmatprep.subr.mxu0 0.0
        %1338 = vmatpush1.xpose.msra.mxu0 0.0
        %1339 = vmatprep.subr.mxu0 0.0
        %1340 = vmatpush1.xpose.msra.mxu0 0.0
        %1341 = vmatprep.mubr.f32.mxu0 0.0
        %1342 = vmatmul.mubr.f32.gmra.mrb[0].mxu0 %v1272
        %v1343 = vpop.f32.mrb[0].mxu0
        %v1344 = vadd.f32 0.0, %v1343
        %v1345 = vpop.f32.mrb[0].mxu0
        %1346 = vdwg.mxu0
        %v1348 = vsel %vm703, %v829, 0
        %v1351 = vsel %vm703, %v920, 0
        %1353 = vmatprep.subr.mxu0 0.0
        %1354 = vmatpush1.xpose.msra.mxu0 %v1351
        %1355 = vmatprep.subr.mxu0 0.0
        %1356 = vmatpush1.xpose.msra.mxu0 0.0
        %1357 = vmatprep.subr.mxu0 0.0
        %1358 = vmatpush1.xpose.msra.mxu0 0.0
        %1359 = vmatprep.subr.mxu0 0.0
        %1360 = vmatpush1.xpose.msra.mxu0 0.0
        %1361 = vmatprep.subr.mxu0 0.0
        %1362 = vmatpush1.xpose.msra.mxu0 0.0
        %1363 = vmatprep.subr.mxu0 0.0
        %1364 = vmatpush1.xpose.msra.mxu0 0.0
        %1365 = vmatprep.subr.mxu0 0.0
        %1366 = vmatpush1.xpose.msra.mxu0 0.0
        %1367 = vmatprep.subr.mxu0 0.0
        %1368 = vmatpush1.xpose.msra.mxu0 0.0
        %1369 = vmatprep.subr.mxu0 0.0
        %1370 = vmatpush1.xpose.msra.mxu0 0.0
        %1371 = vmatprep.subr.mxu0 0.0
        %1372 = vmatpush1.xpose.msra.mxu0 0.0
        %1373 = vmatprep.subr.mxu0 0.0
        %1374 = vmatpush1.xpose.msra.mxu0 0.0
        %1375 = vmatprep.subr.mxu0 0.0
        %1376 = vmatpush1.xpose.msra.mxu0 0.0
        %1377 = vmatprep.subr.mxu0 0.0
        %1378 = vmatpush1.xpose.msra.mxu0 0.0
        %1379 = vmatprep.subr.mxu0 0.0
        %1380 = vmatpush1.xpose.msra.mxu0 0.0
        %1381 = vmatprep.subr.mxu0 0.0
        %1382 = vmatpush1.xpose.msra.mxu0 0.0
        %1383 = vmatprep.subr.mxu0 0.0
        %1384 = vmatpush1.xpose.msra.mxu0 0.0
        %1385 = vmatprep.subr.mxu0 0.0
        %1386 = vmatpush1.xpose.msra.mxu0 0.0
        %1387 = vmatprep.subr.mxu0 0.0
        %1388 = vmatpush1.xpose.msra.mxu0 0.0
        %1389 = vmatprep.subr.mxu0 0.0
        %1390 = vmatpush1.xpose.msra.mxu0 0.0
        %1391 = vmatprep.subr.mxu0 0.0
        %1392 = vmatpush1.xpose.msra.mxu0 0.0
        %1393 = vmatprep.subr.mxu0 0.0
        %1394 = vmatpush1.xpose.msra.mxu0 0.0
        %1395 = vmatprep.subr.mxu0 0.0
        %1396 = vmatpush1.xpose.msra.mxu0 0.0
        %1397 = vmatprep.subr.mxu0 0.0
        %1398 = vmatpush1.xpose.msra.mxu0 0.0
        %1399 = vmatprep.subr.mxu0 0.0
        %1400 = vmatpush1.xpose.msra.mxu0 0.0
        %1401 = vmatprep.subr.mxu0 0.0
        %1402 = vmatpush1.xpose.msra.mxu0 0.0
        %1403 = vmatprep.subr.mxu0 0.0
        %1404 = vmatpush1.xpose.msra.mxu0 0.0
        %1405 = vmatprep.subr.mxu0 0.0
        %1406 = vmatpush1.xpose.msra.mxu0 0.0
        %1407 = vmatprep.subr.mxu0 0.0
        %1408 = vmatpush1.xpose.msra.mxu0 0.0
        %1409 = vmatprep.subr.mxu0 0.0
        %1410 = vmatpush1.xpose.msra.mxu0 0.0
        %1411 = vmatprep.subr.mxu0 0.0
        %1412 = vmatpush1.xpose.msra.mxu0 0.0
        %1413 = vmatprep.subr.mxu0 0.0
        %1414 = vmatpush1.xpose.msra.mxu0 0.0
        %1415 = vmatprep.subr.mxu0 0.0
        %1416 = vmatpush1.xpose.msra.mxu0 0.0
        %1417 = vmatprep.mubr.f32.mxu0 0.0
        %1418 = vmatmul.mubr.f32.gmra.mrb[0].mxu0 %v1348
        %v1419 = vpop.f32.mrb[0].mxu0
        %v1420 = vadd.f32 0.0, %v1419
        %v1421 = vpop.f32.mrb[0].mxu0
        %1422 = vdwg.mxu0
        %v1424 = vsel %vm703, %v830, 0
        %v1427 = vsel %vm703, %v925, 0
        %1429 = vmatprep.subr.mxu0 0.0
        %1430 = vmatpush1.xpose.msra.mxu0 %v1427
        %1431 = vmatprep.subr.mxu0 0.0
        %1432 = vmatpush1.xpose.msra.mxu0 0.0
        %1433 = vmatprep.subr.mxu0 0.0
        %1434 = vmatpush1.xpose.msra.mxu0 0.0
        %1435 = vmatprep.subr.mxu0 0.0
        %1436 = vmatpush1.xpose.msra.mxu0 0.0
        %1437 = vmatprep.subr.mxu0 0.0
        %1438 = vmatpush1.xpose.msra.mxu0 0.0
        %1439 = vmatprep.subr.mxu0 0.0
        %1440 = vmatpush1.xpose.msra.mxu0 0.0
        %1441 = vmatprep.subr.mxu0 0.0
        %1442 = vmatpush1.xpose.msra.mxu0 0.0
        %1443 = vmatprep.subr.mxu0 0.0
        %1444 = vmatpush1.xpose.msra.mxu0 0.0
        %1445 = vmatprep.subr.mxu0 0.0
        %1446 = vmatpush1.xpose.msra.mxu0 0.0
        %1447 = vmatprep.subr.mxu0 0.0
        %1448 = vmatpush1.xpose.msra.mxu0 0.0
        %1449 = vmatprep.subr.mxu0 0.0
        %1450 = vmatpush1.xpose.msra.mxu0 0.0
        %1451 = vmatprep.subr.mxu0 0.0
        %1452 = vmatpush1.xpose.msra.mxu0 0.0
        %1453 = vmatprep.subr.mxu0 0.0
        %1454 = vmatpush1.xpose.msra.mxu0 0.0
        %1455 = vmatprep.subr.mxu0 0.0
        %1456 = vmatpush1.xpose.msra.mxu0 0.0
        %1457 = vmatprep.subr.mxu0 0.0
        %1458 = vmatpush1.xpose.msra.mxu0 0.0
        %1459 = vmatprep.subr.mxu0 0.0
        %1460 = vmatpush1.xpose.msra.mxu0 0.0
        %1461 = vmatprep.subr.mxu0 0.0
        %1462 = vmatpush1.xpose.msra.mxu0 0.0
        %1463 = vmatprep.subr.mxu0 0.0
        %1464 = vmatpush1.xpose.msra.mxu0 0.0
        %1465 = vmatprep.subr.mxu0 0.0
        %1466 = vmatpush1.xpose.msra.mxu0 0.0
        %1467 = vmatprep.subr.mxu0 0.0
        %1468 = vmatpush1.xpose.msra.mxu0 0.0
        %1469 = vmatprep.subr.mxu0 0.0
        %1470 = vmatpush1.xpose.msra.mxu0 0.0
        %1471 = vmatprep.subr.mxu0 0.0
        %1472 = vmatpush1.xpose.msra.mxu0 0.0
        %1473 = vmatprep.subr.mxu0 0.0
        %1474 = vmatpush1.xpose.msra.mxu0 0.0
        %1475 = vmatprep.subr.mxu0 0.0
        %1476 = vmatpush1.xpose.msra.mxu0 0.0
        %1477 = vmatprep.subr.mxu0 0.0
        %1478 = vmatpush1.xpose.msra.mxu0 0.0
        %1479 = vmatprep.subr.mxu0 0.0
        %1480 = vmatpush1.xpose.msra.mxu0 0.0
        %1481 = vmatprep.subr.mxu0 0.0
        %1482 = vmatpush1.xpose.msra.mxu0 0.0
        %1483 = vmatprep.subr.mxu0 0.0
        %1484 = vmatpush1.xpose.msra.mxu0 0.0
        %1485 = vmatprep.subr.mxu0 0.0
        %1486 = vmatpush1.xpose.msra.mxu0 0.0
        %1487 = vmatprep.subr.mxu0 0.0
        %1488 = vmatpush1.xpose.msra.mxu0 0.0
        %1489 = vmatprep.subr.mxu0 0.0
        %1490 = vmatpush1.xpose.msra.mxu0 0.0
        %1491 = vmatprep.subr.mxu0 0.0
        %1492 = vmatpush1.xpose.msra.mxu0 0.0
        %1493 = vmatprep.mubr.f32.mxu0 0.0
        %1494 = vmatmul.mubr.f32.gmra.mrb[0].mxu0 %v1424
        %v1495 = vpop.f32.mrb[0].mxu0
        %v1496 = vadd.f32 0.0, %v1495
        %v1497 = vpop.f32.mrb[0].mxu0
        %1498 = vdwg.mxu0
        %v1500 = vsel %vm703, %v831, 0
        %v1503 = vsel %vm703, %v930, 0
        %1505 = vmatprep.subr.mxu0 0.0
        %1506 = vmatpush1.xpose.msra.mxu0 %v1503
        %1507 = vmatprep.subr.mxu0 0.0
        %1508 = vmatpush1.xpose.msra.mxu0 0.0
        %1509 = vmatprep.subr.mxu0 0.0
        %1510 = vmatpush1.xpose.msra.mxu0 0.0
        %1511 = vmatprep.subr.mxu0 0.0
        %1512 = vmatpush1.xpose.msra.mxu0 0.0
        %1513 = vmatprep.subr.mxu0 0.0
        %1514 = vmatpush1.xpose.msra.mxu0 0.0
        %1515 = vmatprep.subr.mxu0 0.0
        %1516 = vmatpush1.xpose.msra.mxu0 0.0
        %1517 = vmatprep.subr.mxu0 0.0
        %1518 = vmatpush1.xpose.msra.mxu0 0.0
        %1519 = vmatprep.subr.mxu0 0.0
        %1520 = vmatpush1.xpose.msra.mxu0 0.0
        %1521 = vmatprep.subr.mxu0 0.0
        %1522 = vmatpush1.xpose.msra.mxu0 0.0
        %1523 = vmatprep.subr.mxu0 0.0
        %1524 = vmatpush1.xpose.msra.mxu0 0.0
        %1525 = vmatprep.subr.mxu0 0.0
        %1526 = vmatpush1.xpose.msra.mxu0 0.0
        %1527 = vmatprep.subr.mxu0 0.0
        %1528 = vmatpush1.xpose.msra.mxu0 0.0
        %1529 = vmatprep.subr.mxu0 0.0
        %1530 = vmatpush1.xpose.msra.mxu0 0.0
        %1531 = vmatprep.subr.mxu0 0.0
        %1532 = vmatpush1.xpose.msra.mxu0 0.0
        %1533 = vmatprep.subr.mxu0 0.0
        %1534 = vmatpush1.xpose.msra.mxu0 0.0
        %1535 = vmatprep.subr.mxu0 0.0
        %1536 = vmatpush1.xpose.msra.mxu0 0.0
        %1537 = vmatprep.subr.mxu0 0.0
        %1538 = vmatpush1.xpose.msra.mxu0 0.0
        %1539 = vmatprep.subr.mxu0 0.0
        %1540 = vmatpush1.xpose.msra.mxu0 0.0
        %1541 = vmatprep.subr.mxu0 0.0
        %1542 = vmatpush1.xpose.msra.mxu0 0.0
        %1543 = vmatprep.subr.mxu0 0.0
        %1544 = vmatpush1.xpose.msra.mxu0 0.0
        %1545 = vmatprep.subr.mxu0 0.0
        %1546 = vmatpush1.xpose.msra.mxu0 0.0
        %1547 = vmatprep.subr.mxu0 0.0
        %1548 = vmatpush1.xpose.msra.mxu0 0.0
        %1549 = vmatprep.subr.mxu0 0.0
        %1550 = vmatpush1.xpose.msra.mxu0 0.0
        %1551 = vmatprep.subr.mxu0 0.0
        %1552 = vmatpush1.xpose.msra.mxu0 0.0
        %1553 = vmatprep.subr.mxu0 0.0
        %1554 = vmatpush1.xpose.msra.mxu0 0.0
        %1555 = vmatprep.subr.mxu0 0.0
        %1556 = vmatpush1.xpose.msra.mxu0 0.0
        %1557 = vmatprep.subr.mxu0 0.0
        %1558 = vmatpush1.xpose.msra.mxu0 0.0
        %1559 = vmatprep.subr.mxu0 0.0
        %1560 = vmatpush1.xpose.msra.mxu0 0.0
        %1561 = vmatprep.subr.mxu0 0.0
        %1562 = vmatpush1.xpose.msra.mxu0 0.0
        %1563 = vmatprep.subr.mxu0 0.0
        %1564 = vmatpush1.xpose.msra.mxu0 0.0
        %1565 = vmatprep.subr.mxu0 0.0
        %1566 = vmatpush1.xpose.msra.mxu0 0.0
        %1567 = vmatprep.subr.mxu0 0.0
        %1568 = vmatpush1.xpose.msra.mxu0 0.0
        %1569 = vmatprep.mubr.f32.mxu0 0.0
        %1570 = vmatmul.mubr.f32.gmra.mrb[0].mxu0 %v1500
        %v1571 = vpop.f32.mrb[0].mxu0
        %v1572 = vadd.f32 0.0, %v1571
        %v1573 = vpop.f32.mrb[0].mxu0
        %1574 = vdwg.mxu0
        %v1576 = vsel %vm703, %v832, 0
        %v1579 = vsel %vm703, %v935, 0
        %1581 = vmatprep.subr.mxu0 0.0
        %1582 = vmatpush1.xpose.msra.mxu0 %v1579
        %1583 = vmatprep.subr.mxu0 0.0
        %1584 = vmatpush1.xpose.msra.mxu0 0.0
        %1585 = vmatprep.subr.mxu0 0.0
        %1586 = vmatpush1.xpose.msra.mxu0 0.0
        %1587 = vmatprep.subr.mxu0 0.0
        %1588 = vmatpush1.xpose.msra.mxu0 0.0
        %1589 = vmatprep.subr.mxu0 0.0
        %1590 = vmatpush1.xpose.msra.mxu0 0.0
        %1591 = vmatprep.subr.mxu0 0.0
        %1592 = vmatpush1.xpose.msra.mxu0 0.0
        %1593 = vmatprep.subr.mxu0 0.0
        %1594 = vmatpush1.xpose.msra.mxu0 0.0
        %1595 = vmatprep.subr.mxu0 0.0
        %1596 = vmatpush1.xpose.msra.mxu0 0.0
        %1597 = vmatprep.subr.mxu0 0.0
        %1598 = vmatpush1.xpose.msra.mxu0 0.0
        %1599 = vmatprep.subr.mxu0 0.0
        %1600 = vmatpush1.xpose.msra.mxu0 0.0
        %1601 = vmatprep.subr.mxu0 0.0
        %1602 = vmatpush1.xpose.msra.mxu0 0.0
        %1603 = vmatprep.subr.mxu0 0.0
        %1604 = vmatpush1.xpose.msra.mxu0 0.0
        %1605 = vmatprep.subr.mxu0 0.0
        %1606 = vmatpush1.xpose.msra.mxu0 0.0
        %1607 = vmatprep.subr.mxu0 0.0
        %1608 = vmatpush1.xpose.msra.mxu0 0.0
        %1609 = vmatprep.subr.mxu0 0.0
        %1610 = vmatpush1.xpose.msra.mxu0 0.0
        %1611 = vmatprep.subr.mxu0 0.0
        %1612 = vmatpush1.xpose.msra.mxu0 0.0
        %1613 = vmatprep.subr.mxu0 0.0
        %1614 = vmatpush1.xpose.msra.mxu0 0.0
        %1615 = vmatprep.subr.mxu0 0.0
        %1616 = vmatpush1.xpose.msra.mxu0 0.0
        %1617 = vmatprep.subr.mxu0 0.0
        %1618 = vmatpush1.xpose.msra.mxu0 0.0
        %1619 = vmatprep.subr.mxu0 0.0
        %1620 = vmatpush1.xpose.msra.mxu0 0.0
        %1621 = vmatprep.subr.mxu0 0.0
        %1622 = vmatpush1.xpose.msra.mxu0 0.0
        %1623 = vmatprep.subr.mxu0 0.0
        %1624 = vmatpush1.xpose.msra.mxu0 0.0
        %1625 = vmatprep.subr.mxu0 0.0
        %1626 = vmatpush1.xpose.msra.mxu0 0.0
        %1627 = vmatprep.subr.mxu0 0.0
        %1628 = vmatpush1.xpose.msra.mxu0 0.0
        %1629 = vmatprep.subr.mxu0 0.0
        %1630 = vmatpush1.xpose.msra.mxu0 0.0
        %1631 = vmatprep.subr.mxu0 0.0
        %1632 = vmatpush1.xpose.msra.mxu0 0.0
        %1633 = vmatprep.subr.mxu0 0.0
        %1634 = vmatpush1.xpose.msra.mxu0 0.0
        %1635 = vmatprep.subr.mxu0 0.0
        %1636 = vmatpush1.xpose.msra.mxu0 0.0
        %1637 = vmatprep.subr.mxu0 0.0
        %1638 = vmatpush1.xpose.msra.mxu0 0.0
        %1639 = vmatprep.subr.mxu0 0.0
        %1640 = vmatpush1.xpose.msra.mxu0 0.0
        %1641 = vmatprep.subr.mxu0 0.0
        %1642 = vmatpush1.xpose.msra.mxu0 0.0
        %1643 = vmatprep.subr.mxu0 0.0
        %1644 = vmatpush1.xpose.msra.mxu0 0.0
        %1645 = vmatprep.mubr.f32.mxu0 0.0
        %1646 = vmatmul.mubr.f32.gmra.mrb[0].mxu0 %v1576
        %v1647 = vpop.f32.mrb[0].mxu0
        %v1648 = vadd.f32 0.0, %v1647
        %v1649 = vpop.f32.mrb[0].mxu0
        %1650 = vdwg.mxu0
        %v1651 = vld [vmem:[%s1] sm:$0x1]
        %v1652 = vld [vmem:[%s1 + $0x1] sm:$0x1]
        %v1653 = vld [vmem:[%s1 + $0x2] sm:$0x1]
        %v1654 = vld [vmem:[%s1 + $0x3] sm:$0x1]
        %v1655 = vld [vmem:[%s1 + $0x4] sm:$0x1]
        %v1656 = vld [vmem:[%s1 + $0x5] sm:$0x1]
        %v1657 = vld [vmem:[%s1 + $0x6] sm:$0x1]
        %v1658 = vld [vmem:[%s1 + $0x7] sm:$0x1]
        %vm1659 = vcmp.ne.f32.partialorder %v1651, 0.0
        %vm1660 = vcmp.ne.f32.partialorder %v1652, 0.0
        %vm1661 = vcmp.ne.f32.partialorder %v1653, 0.0
        %vm1662 = vcmp.ne.f32.partialorder %v1654, 0.0
        %vm1663 = vcmp.ne.f32.partialorder %v1655, 0.0
        %vm1664 = vcmp.ne.f32.partialorder %v1656, 0.0
        %vm1665 = vcmp.ne.f32.partialorder %v1657, 0.0
        %vm1666 = vcmp.ne.f32.partialorder %v1658, 0.0
        %v1667 = vsel %vm1659, 1, 0
        %v1668 = vsel %vm1660, 1, 0
        %v1669 = vsel %vm1661, 1, 0
        %v1670 = vsel %vm1662, 1, 0
        %v1671 = vsel %vm1663, 1, 0
        %v1672 = vsel %vm1664, 1, 0
        %v1673 = vsel %vm1665, 1, 0
        %v1674 = vsel %vm1666, 1, 0
        %v1675 = vlaneseq
        %v1676 = vshrl.u32 %v1675, 7
        %v1677 = vsub.s32 0, %v1676
        %v1678 = vrot.slane %v1667, %v1677
        %v1679 = vlaneseq
        %v1680 = vshrl.u32 %v1679, 7
        %v1681 = vsub.s32 0, %v1680
        %v1682 = vrot.slane %v1668, %v1681
        %v1683 = vlaneseq
        %v1684 = vshrl.u32 %v1683, 7
        %v1685 = vsub.s32 0, %v1684
        %v1686 = vrot.slane %v1669, %v1685
        %v1687 = vlaneseq
        %v1688 = vshrl.u32 %v1687, 7
        %v1689 = vsub.s32 0, %v1688
        %v1690 = vrot.slane %v1670, %v1689
        %v1691 = vlaneseq
        %v1692 = vshrl.u32 %v1691, 7
        %v1693 = vsub.s32 0, %v1692
        %v1694 = vrot.slane %v1671, %v1693
        %v1695 = vlaneseq
        %v1696 = vshrl.u32 %v1695, 7
        %v1697 = vsub.s32 0, %v1696
        %v1698 = vrot.slane %v1672, %v1697
        %v1699 = vlaneseq
        %v1700 = vshrl.u32 %v1699, 7
        %v1701 = vsub.s32 0, %v1700
        %v1702 = vrot.slane %v1673, %v1701
        %v1703 = vlaneseq
        %v1704 = vshrl.u32 %v1703, 7
        %v1705 = vsub.s32 0, %v1704
        %v1706 = vrot.slane %v1674, %v1705
        %vm1707 = vcmp.eq.s32.totalorder %v1678, 1
        %vm1708 = vcmp.eq.s32.totalorder %v1682, 1
        %vm1709 = vcmp.eq.s32.totalorder %v1686, 1
        %vm1710 = vcmp.eq.s32.totalorder %v1690, 1
        %vm1711 = vcmp.eq.s32.totalorder %v1694, 1
        %vm1712 = vcmp.eq.s32.totalorder %v1698, 1
        %vm1713 = vcmp.eq.s32.totalorder %v1702, 1
        %vm1714 = vcmp.eq.s32.totalorder %v1706, 1
        %v1715 = vsel %vm1707, %v1116, -1.767767e+19
        %v1716 = vsel %vm1708, %v1192, -1.767767e+19
        %v1717 = vsel %vm1709, %v1268, -1.767767e+19
        %v1718 = vsel %vm1710, %v1344, -1.767767e+19
        %v1719 = vsel %vm1711, %v1420, -1.767767e+19
        %v1720 = vsel %vm1712, %v1496, -1.767767e+19
        %v1721 = vsel %vm1713, %v1572, -1.767767e+19
        %v1722 = vsel %vm1714, %v1648, -1.767767e+19
        %v1723 = vsel %vm703, %v1715, -inf
        %1724 = vmax.xlane.f32.xlu0 %v1723
        %v1725 = vpop.xlane.xlu0 %1724
        %v1726 = vsel %vm703, %v1716, -inf
        %1727 = vmax.xlane.f32.xlu0 %v1726
        %v1728 = vpop.xlane.xlu0 %1727
        %v1729 = vsel %vm703, %v1717, -inf
        %1730 = vmax.xlane.f32.xlu0 %v1729
        %v1731 = vpop.xlane.xlu0 %1730
        %v1732 = vsel %vm703, %v1718, -inf
        %1733 = vmax.xlane.f32.xlu0 %v1732
        %v1734 = vpop.xlane.xlu0 %1733
        %v1735 = vsel %vm703, %v1719, -inf
        %1736 = vmax.xlane.f32.xlu0 %v1735
        %v1737 = vpop.xlane.xlu0 %1736
        %v1738 = vsel %vm703, %v1720, -inf
        %1739 = vmax.xlane.f32.xlu0 %v1738
        %v1740 = vpop.xlane.xlu0 %1739
        %v1741 = vsel %vm703, %v1721, -inf
        %1742 = vmax.xlane.f32.xlu0 %v1741
        %v1743 = vpop.xlane.xlu0 %1742
        %v1744 = vsel %vm703, %v1722, -inf
        %1745 = vmax.xlane.f32.xlu0 %v1744
        %v1746 = vpop.xlane.xlu0 %1745
        %v1747 = vsub.f32 %v1715, %v1725
        %v1748 = vsub.f32 %v1716, %v1728
        %v1749 = vsub.f32 %v1717, %v1731
        %v1750 = vsub.f32 %v1718, %v1734
        %v1751 = vsub.f32 %v1719, %v1737
        %v1752 = vsub.f32 %v1720, %v1740
        %v1753 = vsub.f32 %v1721, %v1743
        %v1754 = vsub.f32 %v1722, %v1746
        %v1755 = vmul.f32 %v1747, 1.442695
        %v1756 = vpow.pop %v1755
        %v1757 = vmul.f32 %v1748, 1.442695
        %v1758 = vpow.pop %v1757
        %v1759 = vmul.f32 %v1749, 1.442695
        %v1760 = vpow.pop %v1759
        %v1761 = vmul.f32 %v1750, 1.442695
        %v1762 = vpow.pop %v1761
        %v1763 = vmul.f32 %v1751, 1.442695
        %v1764 = vpow.pop %v1763
        %v1765 = vmul.f32 %v1752, 1.442695
        %v1766 = vpow.pop %v1765
        %v1767 = vmul.f32 %v1753, 1.442695
        %v1768 = vpow.pop %v1767
        %v1769 = vmul.f32 %v1754, 1.442695
        %v1770 = vpow.pop %v1769
        %v1771 = vsel %vm703, %v1756, 0.0
        %1772 = vadd.xlane.f32.xlu0 %v1771
        %v1773 = vpop.xlane.xlu0 %1772
        %v1774 = vsel %vm703, %v1758, 0.0
        %1775 = vadd.xlane.f32.xlu0 %v1774
        %v1776 = vpop.xlane.xlu0 %1775
        %v1777 = vsel %vm703, %v1760, 0.0
        %1778 = vadd.xlane.f32.xlu0 %v1777
        %v1779 = vpop.xlane.xlu0 %1778
        %v1780 = vsel %vm703, %v1762, 0.0
        %1781 = vadd.xlane.f32.xlu0 %v1780
        %v1782 = vpop.xlane.xlu0 %1781
        %v1783 = vsel %vm703, %v1764, 0.0
        %1784 = vadd.xlane.f32.xlu0 %v1783
        %v1785 = vpop.xlane.xlu0 %1784
        %v1786 = vsel %vm703, %v1766, 0.0
        %1787 = vadd.xlane.f32.xlu0 %v1786
        %v1788 = vpop.xlane.xlu0 %1787
        %v1789 = vsel %vm703, %v1768, 0.0
        %1790 = vadd.xlane.f32.xlu0 %v1789
        %v1791 = vpop.xlane.xlu0 %1790
        %v1792 = vsel %vm703, %v1770, 0.0
        %1793 = vadd.xlane.f32.xlu0 %v1792
        %v1794 = vpop.xlane.xlu0 %1793
        %v1795 = vrcp.pop %v1773
        %v1796 = vrcp.pop %v1776
        %v1797 = vrcp.pop %v1779
        %v1798 = vrcp.pop %v1782
        %v1799 = vrcp.pop %v1785
        %v1800 = vrcp.pop %v1788
        %v1801 = vrcp.pop %v1791
        %v1802 = vrcp.pop %v1794
        %v1803 = vmul.f32 %v1756, %v1795
        %v1804 = vmul.f32 %v1758, %v1796
        %v1805 = vmul.f32 %v1760, %v1797
        %v1806 = vmul.f32 %v1762, %v1798
        %v1807 = vmul.f32 %v1764, %v1799
        %v1808 = vmul.f32 %v1766, %v1800
        %v1809 = vmul.f32 %v1768, %v1801
        %v1810 = vmul.f32 %v1770, %v1802
        %v1812 = vsel %vm703, %v1803, 0
        %1814 = vmatprep.subr.mxu0 0.0
        %1815 = vmatpush1.msra.mxu0 %v1005
        %1816 = vmatprep.subr.mxu0 0.0
        %1817 = vmatpush1.msra.mxu0 0.0
        %1818 = vmatprep.subr.mxu0 0.0
        %1819 = vmatpush1.msra.mxu0 0.0
        %1820 = vmatprep.subr.mxu0 0.0
        %1821 = vmatpush1.msra.mxu0 0.0
        %1822 = vmatprep.subr.mxu0 0.0
        %1823 = vmatpush1.msra.mxu0 0.0
        %1824 = vmatprep.subr.mxu0 0.0
        %1825 = vmatpush1.msra.mxu0 0.0
        %1826 = vmatprep.subr.mxu0 0.0
        %1827 = vmatpush1.msra.mxu0 0.0
        %1828 = vmatprep.subr.mxu0 0.0
        %1829 = vmatpush1.msra.mxu0 0.0
        %1830 = vmatprep.subr.mxu0 0.0
        %1831 = vmatpush1.msra.mxu0 0.0
        %1832 = vmatprep.subr.mxu0 0.0
        %1833 = vmatpush1.msra.mxu0 0.0
        %1834 = vmatprep.subr.mxu0 0.0
        %1835 = vmatpush1.msra.mxu0 0.0
        %1836 = vmatprep.subr.mxu0 0.0
        %1837 = vmatpush1.msra.mxu0 0.0
        %1838 = vmatprep.subr.mxu0 0.0
        %1839 = vmatpush1.msra.mxu0 0.0
        %1840 = vmatprep.subr.mxu0 0.0
        %1841 = vmatpush1.msra.mxu0 0.0
        %1842 = vmatprep.subr.mxu0 0.0
        %1843 = vmatpush1.msra.mxu0 0.0
        %1844 = vmatprep.subr.mxu0 0.0
        %1845 = vmatpush1.msra.mxu0 0.0
        %1846 = vmatprep.subr.mxu0 0.0
        %1847 = vmatpush1.msra.mxu0 0.0
        %1848 = vmatprep.subr.mxu0 0.0
        %1849 = vmatpush1.msra.mxu0 0.0
        %1850 = vmatprep.subr.mxu0 0.0
        %1851 = vmatpush1.msra.mxu0 0.0
        %1852 = vmatprep.subr.mxu0 0.0
        %1853 = vmatpush1.msra.mxu0 0.0
        %1854 = vmatprep.subr.mxu0 0.0
        %1855 = vmatpush1.msra.mxu0 0.0
        %1856 = vmatprep.subr.mxu0 0.0
        %1857 = vmatpush1.msra.mxu0 0.0
        %1858 = vmatprep.subr.mxu0 0.0
        %1859 = vmatpush1.msra.mxu0 0.0
        %1860 = vmatprep.subr.mxu0 0.0
        %1861 = vmatpush1.msra.mxu0 0.0
        %1862 = vmatprep.subr.mxu0 0.0
        %1863 = vmatpush1.msra.mxu0 0.0
        %1864 = vmatprep.subr.mxu0 0.0
        %1865 = vmatpush1.msra.mxu0 0.0
        %1866 = vmatprep.subr.mxu0 0.0
        %1867 = vmatpush1.msra.mxu0 0.0
        %1868 = vmatprep.subr.mxu0 0.0
        %1869 = vmatpush1.msra.mxu0 0.0
        %1870 = vmatprep.subr.mxu0 0.0
        %1871 = vmatpush1.msra.mxu0 0.0
        %1872 = vmatprep.subr.mxu0 0.0
        %1873 = vmatpush1.msra.mxu0 0.0
        %1874 = vmatprep.subr.mxu0 0.0
        %1875 = vmatpush1.msra.mxu0 0.0
        %1876 = vmatprep.subr.mxu0 0.0
        %1877 = vmatpush1.msra.mxu0 0.0
        %1878 = vmatprep.mubr.f32.mxu0 0.0
        %1879 = vmatmul.mubr.f32.gmra.mrb[0].mxu0 %v1812
        %v1880 = vpop.f32.mrb[0].mxu0
        %v1881 = vadd.f32 0.0, %v1880
        %v1882 = vpop.f32.mrb[0].mxu0
        %1883 = vdwg.mxu0
        %v1885 = vsel %vm703, %v1804, 0
        %1887 = vmatprep.subr.mxu0 0.0
        %1888 = vmatpush1.msra.mxu0 %v1010
        %1889 = vmatprep.subr.mxu0 0.0
        %1890 = vmatpush1.msra.mxu0 0.0
        %1891 = vmatprep.subr.mxu0 0.0
        %1892 = vmatpush1.msra.mxu0 0.0
        %1893 = vmatprep.subr.mxu0 0.0
        %1894 = vmatpush1.msra.mxu0 0.0
        %1895 = vmatprep.subr.mxu0 0.0
        %1896 = vmatpush1.msra.mxu0 0.0
        %1897 = vmatprep.subr.mxu0 0.0
        %1898 = vmatpush1.msra.mxu0 0.0
        %1899 = vmatprep.subr.mxu0 0.0
        %1900 = vmatpush1.msra.mxu0 0.0
        %1901 = vmatprep.subr.mxu0 0.0
        %1902 = vmatpush1.msra.mxu0 0.0
        %1903 = vmatprep.subr.mxu0 0.0
        %1904 = vmatpush1.msra.mxu0 0.0
        %1905 = vmatprep.subr.mxu0 0.0
        %1906 = vmatpush1.msra.mxu0 0.0
        %1907 = vmatprep.subr.mxu0 0.0
        %1908 = vmatpush1.msra.mxu0 0.0
        %1909 = vmatprep.subr.mxu0 0.0
        %1910 = vmatpush1.msra.mxu0 0.0
        %1911 = vmatprep.subr.mxu0 0.0
        %1912 = vmatpush1.msra.mxu0 0.0
        %1913 = vmatprep.subr.mxu0 0.0
        %1914 = vmatpush1.msra.mxu0 0.0
        %1915 = vmatprep.subr.mxu0 0.0
        %1916 = vmatpush1.msra.mxu0 0.0
        %1917 = vmatprep.subr.mxu0 0.0
        %1918 = vmatpush1.msra.mxu0 0.0
        %1919 = vmatprep.subr.mxu0 0.0
        %1920 = vmatpush1.msra.mxu0 0.0
        %1921 = vmatprep.subr.mxu0 0.0
        %1922 = vmatpush1.msra.mxu0 0.0
        %1923 = vmatprep.subr.mxu0 0.0
        %1924 = vmatpush1.msra.mxu0 0.0
        %1925 = vmatprep.subr.mxu0 0.0
        %1926 = vmatpush1.msra.mxu0 0.0
        %1927 = vmatprep.subr.mxu0 0.0
        %1928 = vmatpush1.msra.mxu0 0.0
        %1929 = vmatprep.subr.mxu0 0.0
        %1930 = vmatpush1.msra.mxu0 0.0
        %1931 = vmatprep.subr.mxu0 0.0
        %1932 = vmatpush1.msra.mxu0 0.0
        %1933 = vmatprep.subr.mxu0 0.0
        %1934 = vmatpush1.msra.mxu0 0.0
        %1935 = vmatprep.subr.mxu0 0.0
        %1936 = vmatpush1.msra.mxu0 0.0
        %1937 = vmatprep.subr.mxu0 0.0
        %1938 = vmatpush1.msra.mxu0 0.0
        %1939 = vmatprep.subr.mxu0 0.0
        %1940 = vmatpush1.msra.mxu0 0.0
        %1941 = vmatprep.subr.mxu0 0.0
        %1942 = vmatpush1.msra.mxu0 0.0
        %1943 = vmatprep.subr.mxu0 0.0
        %1944 = vmatpush1.msra.mxu0 0.0
        %1945 = vmatprep.subr.mxu0 0.0
        %1946 = vmatpush1.msra.mxu0 0.0
        %1947 = vmatprep.subr.mxu0 0.0
        %1948 = vmatpush1.msra.mxu0 0.0
        %1949 = vmatprep.subr.mxu0 0.0
        %1950 = vmatpush1.msra.mxu0 0.0
        %1951 = vmatprep.mubr.f32.mxu0 0.0
        %1952 = vmatmul.mubr.f32.gmra.mrb[0].mxu0 %v1885
        %v1953 = vpop.f32.mrb[0].mxu0
        %v1954 = vadd.f32 0.0, %v1953
        %v1955 = vpop.f32.mrb[0].mxu0
        %1956 = vdwg.mxu0
        %v1958 = vsel %vm703, %v1805, 0
        %1960 = vmatprep.subr.mxu0 0.0
        %1961 = vmatpush1.msra.mxu0 %v1015
        %1962 = vmatprep.subr.mxu0 0.0
        %1963 = vmatpush1.msra.mxu0 0.0
        %1964 = vmatprep.subr.mxu0 0.0
        %1965 = vmatpush1.msra.mxu0 0.0
        %1966 = vmatprep.subr.mxu0 0.0
        %1967 = vmatpush1.msra.mxu0 0.0
        %1968 = vmatprep.subr.mxu0 0.0
        %1969 = vmatpush1.msra.mxu0 0.0
        %1970 = vmatprep.subr.mxu0 0.0
        %1971 = vmatpush1.msra.mxu0 0.0
        %1972 = vmatprep.subr.mxu0 0.0
        %1973 = vmatpush1.msra.mxu0 0.0
        %1974 = vmatprep.subr.mxu0 0.0
        %1975 = vmatpush1.msra.mxu0 0.0
        %1976 = vmatprep.subr.mxu0 0.0
        %1977 = vmatpush1.msra.mxu0 0.0
        %1978 = vmatprep.subr.mxu0 0.0
        %1979 = vmatpush1.msra.mxu0 0.0
        %1980 = vmatprep.subr.mxu0 0.0
        %1981 = vmatpush1.msra.mxu0 0.0
        %1982 = vmatprep.subr.mxu0 0.0
        %1983 = vmatpush1.msra.mxu0 0.0
        %1984 = vmatprep.subr.mxu0 0.0
        %1985 = vmatpush1.msra.mxu0 0.0
        %1986 = vmatprep.subr.mxu0 0.0
        %1987 = vmatpush1.msra.mxu0 0.0
        %1988 = vmatprep.subr.mxu0 0.0
        %1989 = vmatpush1.msra.mxu0 0.0
        %1990 = vmatprep.subr.mxu0 0.0
        %1991 = vmatpush1.msra.mxu0 0.0
        %1992 = vmatprep.subr.mxu0 0.0
        %1993 = vmatpush1.msra.mxu0 0.0
        %1994 = vmatprep.subr.mxu0 0.0
        %1995 = vmatpush1.msra.mxu0 0.0
        %1996 = vmatprep.subr.mxu0 0.0
        %1997 = vmatpush1.msra.mxu0 0.0
        %1998 = vmatprep.subr.mxu0 0.0
        %1999 = vmatpush1.msra.mxu0 0.0
        %2000 = vmatprep.subr.mxu0 0.0
        %2001 = vmatpush1.msra.mxu0 0.0
        %2002 = vmatprep.subr.mxu0 0.0
        %2003 = vmatpush1.msra.mxu0 0.0
        %2004 = vmatprep.subr.mxu0 0.0
        %2005 = vmatpush1.msra.mxu0 0.0
        %2006 = vmatprep.subr.mxu0 0.0
        %2007 = vmatpush1.msra.mxu0 0.0
        %2008 = vmatprep.subr.mxu0 0.0
        %2009 = vmatpush1.msra.mxu0 0.0
        %2010 = vmatprep.subr.mxu0 0.0
        %2011 = vmatpush1.msra.mxu0 0.0
        %2012 = vmatprep.subr.mxu0 0.0
        %2013 = vmatpush1.msra.mxu0 0.0
        %2014 = vmatprep.subr.mxu0 0.0
        %2015 = vmatpush1.msra.mxu0 0.0
        %2016 = vmatprep.subr.mxu0 0.0
        %2017 = vmatpush1.msra.mxu0 0.0
        %2018 = vmatprep.subr.mxu0 0.0
        %2019 = vmatpush1.msra.mxu0 0.0
        %2020 = vmatprep.subr.mxu0 0.0
        %2021 = vmatpush1.msra.mxu0 0.0
        %2022 = vmatprep.subr.mxu0 0.0
        %2023 = vmatpush1.msra.mxu0 0.0
        %2024 = vmatprep.mubr.f32.mxu0 0.0
        %2025 = vmatmul.mubr.f32.gmra.mrb[0].mxu0 %v1958
        %v2026 = vpop.f32.mrb[0].mxu0
        %v2027 = vadd.f32 0.0, %v2026
        %v2028 = vpop.f32.mrb[0].mxu0
        %2029 = vdwg.mxu0
        %v2031 = vsel %vm703, %v1806, 0
        %2033 = vmatprep.subr.mxu0 0.0
        %2034 = vmatpush1.msra.mxu0 %v1020
        %2035 = vmatprep.subr.mxu0 0.0
        %2036 = vmatpush1.msra.mxu0 0.0
        %2037 = vmatprep.subr.mxu0 0.0
        %2038 = vmatpush1.msra.mxu0 0.0
        %2039 = vmatprep.subr.mxu0 0.0
        %2040 = vmatpush1.msra.mxu0 0.0
        %2041 = vmatprep.subr.mxu0 0.0
        %2042 = vmatpush1.msra.mxu0 0.0
        %2043 = vmatprep.subr.mxu0 0.0
        %2044 = vmatpush1.msra.mxu0 0.0
        %2045 = vmatprep.subr.mxu0 0.0
        %2046 = vmatpush1.msra.mxu0 0.0
        %2047 = vmatprep.subr.mxu0 0.0
        %2048 = vmatpush1.msra.mxu0 0.0
        %2049 = vmatprep.subr.mxu0 0.0
        %2050 = vmatpush1.msra.mxu0 0.0
        %2051 = vmatprep.subr.mxu0 0.0
        %2052 = vmatpush1.msra.mxu0 0.0
        %2053 = vmatprep.subr.mxu0 0.0
        %2054 = vmatpush1.msra.mxu0 0.0
        %2055 = vmatprep.subr.mxu0 0.0
        %2056 = vmatpush1.msra.mxu0 0.0
        %2057 = vmatprep.subr.mxu0 0.0
        %2058 = vmatpush1.msra.mxu0 0.0
        %2059 = vmatprep.subr.mxu0 0.0
        %2060 = vmatpush1.msra.mxu0 0.0
        %2061 = vmatprep.subr.mxu0 0.0
        %2062 = vmatpush1.msra.mxu0 0.0
        %2063 = vmatprep.subr.mxu0 0.0
        %2064 = vmatpush1.msra.mxu0 0.0
        %2065 = vmatprep.subr.mxu0 0.0
        %2066 = vmatpush1.msra.mxu0 0.0
        %2067 = vmatprep.subr.mxu0 0.0
        %2068 = vmatpush1.msra.mxu0 0.0
        %2069 = vmatprep.subr.mxu0 0.0
        %2070 = vmatpush1.msra.mxu0 0.0
        %2071 = vmatprep.subr.mxu0 0.0
        %2072 = vmatpush1.msra.mxu0 0.0
        %2073 = vmatprep.subr.mxu0 0.0
        %2074 = vmatpush1.msra.mxu0 0.0
        %2075 = vmatprep.subr.mxu0 0.0
        %2076 = vmatpush1.msra.mxu0 0.0
        %2077 = vmatprep.subr.mxu0 0.0
        %2078 = vmatpush1.msra.mxu0 0.0
        %2079 = vmatprep.subr.mxu0 0.0
        %2080 = vmatpush1.msra.mxu0 0.0
        %2081 = vmatprep.subr.mxu0 0.0
        %2082 = vmatpush1.msra.mxu0 0.0
        %2083 = vmatprep.subr.mxu0 0.0
        %2084 = vmatpush1.msra.mxu0 0.0
        %2085 = vmatprep.subr.mxu0 0.0
        %2086 = vmatpush1.msra.mxu0 0.0
        %2087 = vmatprep.subr.mxu0 0.0
        %2088 = vmatpush1.msra.mxu0 0.0
        %2089 = vmatprep.subr.mxu0 0.0
        %2090 = vmatpush1.msra.mxu0 0.0
        %2091 = vmatprep.subr.mxu0 0.0
        %2092 = vmatpush1.msra.mxu0 0.0
        %2093 = vmatprep.subr.mxu0 0.0
        %2094 = vmatpush1.msra.mxu0 0.0
        %2095 = vmatprep.subr.mxu0 0.0
        %2096 = vmatpush1.msra.mxu0 0.0
        %2097 = vmatprep.mubr.f32.mxu0 0.0
        %2098 = vmatmul.mubr.f32.gmra.mrb[0].mxu0 %v2031
        %v2099 = vpop.f32.mrb[0].mxu0
        %v2100 = vadd.f32 0.0, %v2099
        %v2101 = vpop.f32.mrb[0].mxu0
        %2102 = vdwg.mxu0
        %v2104 = vsel %vm703, %v1807, 0
        %2106 = vmatprep.subr.mxu0 0.0
        %2107 = vmatpush1.msra.mxu0 %v1025
        %2108 = vmatprep.subr.mxu0 0.0
        %2109 = vmatpush1.msra.mxu0 0.0
        %2110 = vmatprep.subr.mxu0 0.0
        %2111 = vmatpush1.msra.mxu0 0.0
        %2112 = vmatprep.subr.mxu0 0.0
        %2113 = vmatpush1.msra.mxu0 0.0
        %2114 = vmatprep.subr.mxu0 0.0
        %2115 = vmatpush1.msra.mxu0 0.0
        %2116 = vmatprep.subr.mxu0 0.0
        %2117 = vmatpush1.msra.mxu0 0.0
        %2118 = vmatprep.subr.mxu0 0.0
        %2119 = vmatpush1.msra.mxu0 0.0
        %2120 = vmatprep.subr.mxu0 0.0
        %2121 = vmatpush1.msra.mxu0 0.0
        %2122 = vmatprep.subr.mxu0 0.0
        %2123 = vmatpush1.msra.mxu0 0.0
        %2124 = vmatprep.subr.mxu0 0.0
        %2125 = vmatpush1.msra.mxu0 0.0
        %2126 = vmatprep.subr.mxu0 0.0
        %2127 = vmatpush1.msra.mxu0 0.0
        %2128 = vmatprep.subr.mxu0 0.0
        %2129 = vmatpush1.msra.mxu0 0.0
        %2130 = vmatprep.subr.mxu0 0.0
        %2131 = vmatpush1.msra.mxu0 0.0
        %2132 = vmatprep.subr.mxu0 0.0
        %2133 = vmatpush1.msra.mxu0 0.0
        %2134 = vmatprep.subr.mxu0 0.0
        %2135 = vmatpush1.msra.mxu0 0.0
        %2136 = vmatprep.subr.mxu0 0.0
        %2137 = vmatpush1.msra.mxu0 0.0
        %2138 = vmatprep.subr.mxu0 0.0
        %2139 = vmatpush1.msra.mxu0 0.0
        %2140 = vmatprep.subr.mxu0 0.0
        %2141 = vmatpush1.msra.mxu0 0.0
        %2142 = vmatprep.subr.mxu0 0.0
        %2143 = vmatpush1.msra.mxu0 0.0
        %2144 = vmatprep.subr.mxu0 0.0
        %2145 = vmatpush1.msra.mxu0 0.0
        %2146 = vmatprep.subr.mxu0 0.0
        %2147 = vmatpush1.msra.mxu0 0.0
        %2148 = vmatprep.subr.mxu0 0.0
        %2149 = vmatpush1.msra.mxu0 0.0
        %2150 = vmatprep.subr.mxu0 0.0
        %2151 = vmatpush1.msra.mxu0 0.0
        %2152 = vmatprep.subr.mxu0 0.0
        %2153 = vmatpush1.msra.mxu0 0.0
        %2154 = vmatprep.subr.mxu0 0.0
        %2155 = vmatpush1.msra.mxu0 0.0
        %2156 = vmatprep.subr.mxu0 0.0
        %2157 = vmatpush1.msra.mxu0 0.0
        %2158 = vmatprep.subr.mxu0 0.0
        %2159 = vmatpush1.msra.mxu0 0.0
        %2160 = vmatprep.subr.mxu0 0.0
        %2161 = vmatpush1.msra.mxu0 0.0
        %2162 = vmatprep.subr.mxu0 0.0
        %2163 = vmatpush1.msra.mxu0 0.0
        %2164 = vmatprep.subr.mxu0 0.0
        %2165 = vmatpush1.msra.mxu0 0.0
        %2166 = vmatprep.subr.mxu0 0.0
        %2167 = vmatpush1.msra.mxu0 0.0
        %2168 = vmatprep.subr.mxu0 0.0
        %2169 = vmatpush1.msra.mxu0 0.0
        %2170 = vmatprep.mubr.f32.mxu0 0.0
        %2171 = vmatmul.mubr.f32.gmra.mrb[0].mxu0 %v2104
        %v2172 = vpop.f32.mrb[0].mxu0
        %v2173 = vadd.f32 0.0, %v2172
        %v2174 = vpop.f32.mrb[0].mxu0
        %2175 = vdwg.mxu0
        %v2177 = vsel %vm703, %v1808, 0
        %2179 = vmatprep.subr.mxu0 0.0
        %2180 = vmatpush1.msra.mxu0 %v1030
        %2181 = vmatprep.subr.mxu0 0.0
        %2182 = vmatpush1.msra.mxu0 0.0
        %2183 = vmatprep.subr.mxu0 0.0
        %2184 = vmatpush1.msra.mxu0 0.0
        %2185 = vmatprep.subr.mxu0 0.0
        %2186 = vmatpush1.msra.mxu0 0.0
        %2187 = vmatprep.subr.mxu0 0.0
        %2188 = vmatpush1.msra.mxu0 0.0
        %2189 = vmatprep.subr.mxu0 0.0
        %2190 = vmatpush1.msra.mxu0 0.0
        %2191 = vmatprep.subr.mxu0 0.0
        %2192 = vmatpush1.msra.mxu0 0.0
        %2193 = vmatprep.subr.mxu0 0.0
        %2194 = vmatpush1.msra.mxu0 0.0
        %2195 = vmatprep.subr.mxu0 0.0
        %2196 = vmatpush1.msra.mxu0 0.0
        %2197 = vmatprep.subr.mxu0 0.0
        %2198 = vmatpush1.msra.mxu0 0.0
        %2199 = vmatprep.subr.mxu0 0.0
        %2200 = vmatpush1.msra.mxu0 0.0
        %2201 = vmatprep.subr.mxu0 0.0
        %2202 = vmatpush1.msra.mxu0 0.0
        %2203 = vmatprep.subr.mxu0 0.0
        %2204 = vmatpush1.msra.mxu0 0.0
        %2205 = vmatprep.subr.mxu0 0.0
        %2206 = vmatpush1.msra.mxu0 0.0
        %2207 = vmatprep.subr.mxu0 0.0
        %2208 = vmatpush1.msra.mxu0 0.0
        %2209 = vmatprep.subr.mxu0 0.0
        %2210 = vmatpush1.msra.mxu0 0.0
        %2211 = vmatprep.subr.mxu0 0.0
        %2212 = vmatpush1.msra.mxu0 0.0
        %2213 = vmatprep.subr.mxu0 0.0
        %2214 = vmatpush1.msra.mxu0 0.0
        %2215 = vmatprep.subr.mxu0 0.0
        %2216 = vmatpush1.msra.mxu0 0.0
        %2217 = vmatprep.subr.mxu0 0.0
        %2218 = vmatpush1.msra.mxu0 0.0
        %2219 = vmatprep.subr.mxu0 0.0
        %2220 = vmatpush1.msra.mxu0 0.0
        %2221 = vmatprep.subr.mxu0 0.0
        %2222 = vmatpush1.msra.mxu0 0.0
        %2223 = vmatprep.subr.mxu0 0.0
        %2224 = vmatpush1.msra.mxu0 0.0
        %2225 = vmatprep.subr.mxu0 0.0
        %2226 = vmatpush1.msra.mxu0 0.0
        %2227 = vmatprep.subr.mxu0 0.0
        %2228 = vmatpush1.msra.mxu0 0.0
        %2229 = vmatprep.subr.mxu0 0.0
        %2230 = vmatpush1.msra.mxu0 0.0
        %2231 = vmatprep.subr.mxu0 0.0
        %2232 = vmatpush1.msra.mxu0 0.0
        %2233 = vmatprep.subr.mxu0 0.0
        %2234 = vmatpush1.msra.mxu0 0.0
        %2235 = vmatprep.subr.mxu0 0.0
        %2236 = vmatpush1.msra.mxu0 0.0
        %2237 = vmatprep.subr.mxu0 0.0
        %2238 = vmatpush1.msra.mxu0 0.0
        %2239 = vmatprep.subr.mxu0 0.0
        %2240 = vmatpush1.msra.mxu0 0.0
        %2241 = vmatprep.subr.mxu0 0.0
        %2242 = vmatpush1.msra.mxu0 0.0
        %2243 = vmatprep.mubr.f32.mxu0 0.0
        %2244 = vmatmul.mubr.f32.gmra.mrb[0].mxu0 %v2177
        %v2245 = vpop.f32.mrb[0].mxu0
        %v2246 = vadd.f32 0.0, %v2245
        %v2247 = vpop.f32.mrb[0].mxu0
        %2248 = vdwg.mxu0
        %v2250 = vsel %vm703, %v1809, 0
        %2252 = vmatprep.subr.mxu0 0.0
        %2253 = vmatpush1.msra.mxu0 %v1035
        %2254 = vmatprep.subr.mxu0 0.0
        %2255 = vmatpush1.msra.mxu0 0.0
        %2256 = vmatprep.subr.mxu0 0.0
        %2257 = vmatpush1.msra.mxu0 0.0
        %2258 = vmatprep.subr.mxu0 0.0
        %2259 = vmatpush1.msra.mxu0 0.0
        %2260 = vmatprep.subr.mxu0 0.0
        %2261 = vmatpush1.msra.mxu0 0.0
        %2262 = vmatprep.subr.mxu0 0.0
        %2263 = vmatpush1.msra.mxu0 0.0
        %2264 = vmatprep.subr.mxu0 0.0
        %2265 = vmatpush1.msra.mxu0 0.0
        %2266 = vmatprep.subr.mxu0 0.0
        %2267 = vmatpush1.msra.mxu0 0.0
        %2268 = vmatprep.subr.mxu0 0.0
        %2269 = vmatpush1.msra.mxu0 0.0
        %2270 = vmatprep.subr.mxu0 0.0
        %2271 = vmatpush1.msra.mxu0 0.0
        %2272 = vmatprep.subr.mxu0 0.0
        %2273 = vmatpush1.msra.mxu0 0.0
        %2274 = vmatprep.subr.mxu0 0.0
        %2275 = vmatpush1.msra.mxu0 0.0
        %2276 = vmatprep.subr.mxu0 0.0
        %2277 = vmatpush1.msra.mxu0 0.0
        %2278 = vmatprep.subr.mxu0 0.0
        %2279 = vmatpush1.msra.mxu0 0.0
        %2280 = vmatprep.subr.mxu0 0.0
        %2281 = vmatpush1.msra.mxu0 0.0
        %2282 = vmatprep.subr.mxu0 0.0
        %2283 = vmatpush1.msra.mxu0 0.0
        %2284 = vmatprep.subr.mxu0 0.0
        %2285 = vmatpush1.msra.mxu0 0.0
        %2286 = vmatprep.subr.mxu0 0.0
        %2287 = vmatpush1.msra.mxu0 0.0
        %2288 = vmatprep.subr.mxu0 0.0
        %2289 = vmatpush1.msra.mxu0 0.0
        %2290 = vmatprep.subr.mxu0 0.0
        %2291 = vmatpush1.msra.mxu0 0.0
        %2292 = vmatprep.subr.mxu0 0.0
        %2293 = vmatpush1.msra.mxu0 0.0
        %2294 = vmatprep.subr.mxu0 0.0
        %2295 = vmatpush1.msra.mxu0 0.0
        %2296 = vmatprep.subr.mxu0 0.0
        %2297 = vmatpush1.msra.mxu0 0.0
        %2298 = vmatprep.subr.mxu0 0.0
        %2299 = vmatpush1.msra.mxu0 0.0
        %2300 = vmatprep.subr.mxu0 0.0
        %2301 = vmatpush1.msra.mxu0 0.0
        %2302 = vmatprep.subr.mxu0 0.0
        %2303 = vmatpush1.msra.mxu0 0.0
        %2304 = vmatprep.subr.mxu0 0.0
        %2305 = vmatpush1.msra.mxu0 0.0
        %2306 = vmatprep.subr.mxu0 0.0
        %2307 = vmatpush1.msra.mxu0 0.0
        %2308 = vmatprep.subr.mxu0 0.0
        %2309 = vmatpush1.msra.mxu0 0.0
        %2310 = vmatprep.subr.mxu0 0.0
        %2311 = vmatpush1.msra.mxu0 0.0
        %2312 = vmatprep.subr.mxu0 0.0
        %2313 = vmatpush1.msra.mxu0 0.0
        %2314 = vmatprep.subr.mxu0 0.0
        %2315 = vmatpush1.msra.mxu0 0.0
        %2316 = vmatprep.mubr.f32.mxu0 0.0
        %2317 = vmatmul.mubr.f32.gmra.mrb[0].mxu0 %v2250
        %v2318 = vpop.f32.mrb[0].mxu0
        %v2319 = vadd.f32 0.0, %v2318
        %v2320 = vpop.f32.mrb[0].mxu0
        %2321 = vdwg.mxu0
        %v2323 = vsel %vm703, %v1810, 0
        %2325 = vmatprep.subr.mxu0 0.0
        %2326 = vmatpush1.msra.mxu0 %v1040
        %2327 = vmatprep.subr.mxu0 0.0
        %2328 = vmatpush1.msra.mxu0 0.0
        %2329 = vmatprep.subr.mxu0 0.0
        %2330 = vmatpush1.msra.mxu0 0.0
        %2331 = vmatprep.subr.mxu0 0.0
        %2332 = vmatpush1.msra.mxu0 0.0
        %2333 = vmatprep.subr.mxu0 0.0
        %2334 = vmatpush1.msra.mxu0 0.0
        %2335 = vmatprep.subr.mxu0 0.0
        %2336 = vmatpush1.msra.mxu0 0.0
        %2337 = vmatprep.subr.mxu0 0.0
        %2338 = vmatpush1.msra.mxu0 0.0
        %2339 = vmatprep.subr.mxu0 0.0
        %2340 = vmatpush1.msra.mxu0 0.0
        %2341 = vmatprep.subr.mxu0 0.0
        %2342 = vmatpush1.msra.mxu0 0.0
        %2343 = vmatprep.subr.mxu0 0.0
        %2344 = vmatpush1.msra.mxu0 0.0
        %2345 = vmatprep.subr.mxu0 0.0
        %2346 = vmatpush1.msra.mxu0 0.0
        %2347 = vmatprep.subr.mxu0 0.0
        %2348 = vmatpush1.msra.mxu0 0.0
        %2349 = vmatprep.subr.mxu0 0.0
        %2350 = vmatpush1.msra.mxu0 0.0
        %2351 = vmatprep.subr.mxu0 0.0
        %2352 = vmatpush1.msra.mxu0 0.0
        %2353 = vmatprep.subr.mxu0 0.0
        %2354 = vmatpush1.msra.mxu0 0.0
        %2355 = vmatprep.subr.mxu0 0.0
        %2356 = vmatpush1.msra.mxu0 0.0
        %2357 = vmatprep.subr.mxu0 0.0
        %2358 = vmatpush1.msra.mxu0 0.0
        %2359 = vmatprep.subr.mxu0 0.0
        %2360 = vmatpush1.msra.mxu0 0.0
        %2361 = vmatprep.subr.mxu0 0.0
        %2362 = vmatpush1.msra.mxu0 0.0
        %2363 = vmatprep.subr.mxu0 0.0
        %2364 = vmatpush1.msra.mxu0 0.0
        %2365 = vmatprep.subr.mxu0 0.0
        %2366 = vmatpush1.msra.mxu0 0.0
        %2367 = vmatprep.subr.mxu0 0.0
        %2368 = vmatpush1.msra.mxu0 0.0
        %2369 = vmatprep.subr.mxu0 0.0
        %2370 = vmatpush1.msra.mxu0 0.0
        %2371 = vmatprep.subr.mxu0 0.0
        %2372 = vmatpush1.msra.mxu0 0.0
        %2373 = vmatprep.subr.mxu0 0.0
        %2374 = vmatpush1.msra.mxu0 0.0
        %2375 = vmatprep.subr.mxu0 0.0
        %2376 = vmatpush1.msra.mxu0 0.0
        %2377 = vmatprep.subr.mxu0 0.0
        %2378 = vmatpush1.msra.mxu0 0.0
        %2379 = vmatprep.subr.mxu0 0.0
        %2380 = vmatpush1.msra.mxu0 0.0
        %2381 = vmatprep.subr.mxu0 0.0
        %2382 = vmatpush1.msra.mxu0 0.0
        %2383 = vmatprep.subr.mxu0 0.0
        %2384 = vmatpush1.msra.mxu0 0.0
        %2385 = vmatprep.subr.mxu0 0.0
        %2386 = vmatpush1.msra.mxu0 0.0
        %2387 = vmatprep.subr.mxu0 0.0
        %2388 = vmatpush1.msra.mxu0 0.0
        %2389 = vmatprep.mubr.f32.mxu0 0.0
        %2390 = vmatmul.mubr.f32.gmra.mrb[0].mxu0 %v2323
        %v2391 = vpop.f32.mrb[0].mxu0
        %v2392 = vadd.f32 0.0, %v2391
        %v2393 = vpop.f32.mrb[0].mxu0
        %2394 = vdwg.mxu0
        %v2396 = vsel %vm703, %v1881, 0
        %v2399 = vsel %vm703, %v1954, 0
        %2401 = vmatprep.subr.mxu0 0.0
        %2402 = vmatpush1.msra.mxu0 %v684
        %2403 = vmatprep.subr.mxu0 0.0
        %2404 = vmatpush1.msra.mxu0 0.0
        %2405 = vmatprep.subr.mxu0 0.0
        %2406 = vmatpush1.msra.mxu0 0.0
        %2407 = vmatprep.subr.mxu0 0.0
        %2408 = vmatpush1.msra.mxu0 0.0
        %2409 = vmatprep.subr.mxu0 0.0
        %2410 = vmatpush1.msra.mxu0 0.0
        %2411 = vmatprep.subr.mxu0 0.0
        %2412 = vmatpush1.msra.mxu0 0.0
        %2413 = vmatprep.subr.mxu0 0.0
        %2414 = vmatpush1.msra.mxu0 0.0
        %2415 = vmatprep.subr.mxu0 0.0
        %2416 = vmatpush1.msra.mxu0 0.0
        %2417 = vmatprep.subr.mxu0 0.0
        %2418 = vmatpush1.msra.mxu0 0.0
        %2419 = vmatprep.subr.mxu0 0.0
        %2420 = vmatpush1.msra.mxu0 0.0
        %2421 = vmatprep.subr.mxu0 0.0
        %2422 = vmatpush1.msra.mxu0 0.0
        %2423 = vmatprep.subr.mxu0 0.0
        %2424 = vmatpush1.msra.mxu0 0.0
        %2425 = vmatprep.subr.mxu0 0.0
        %2426 = vmatpush1.msra.mxu0 0.0
        %2427 = vmatprep.subr.mxu0 0.0
        %2428 = vmatpush1.msra.mxu0 0.0
        %2429 = vmatprep.subr.mxu0 0.0
        %2430 = vmatpush1.msra.mxu0 0.0
        %2431 = vmatprep.subr.mxu0 0.0
        %2432 = vmatpush1.msra.mxu0 0.0
        %2433 = vmatprep.subr.mxu0 0.0
        %2434 = vmatpush1.msra.mxu0 0.0
        %2435 = vmatprep.subr.mxu0 0.0
        %2436 = vmatpush1.msra.mxu0 0.0
        %2437 = vmatprep.subr.mxu0 0.0
        %2438 = vmatpush1.msra.mxu0 0.0
        %2439 = vmatprep.subr.mxu0 0.0
        %2440 = vmatpush1.msra.mxu0 0.0
        %2441 = vmatprep.subr.mxu0 0.0
        %2442 = vmatpush1.msra.mxu0 0.0
        %2443 = vmatprep.subr.mxu0 0.0
        %2444 = vmatpush1.msra.mxu0 0.0
        %2445 = vmatprep.subr.mxu0 0.0
        %2446 = vmatpush1.msra.mxu0 0.0
        %2447 = vmatprep.subr.mxu0 0.0
        %2448 = vmatpush1.msra.mxu0 0.0
        %2449 = vmatprep.subr.mxu0 0.0
        %2450 = vmatpush1.msra.mxu0 0.0
        %2451 = vmatprep.subr.mxu0 0.0
        %2452 = vmatpush1.msra.mxu0 0.0
        %2453 = vmatprep.subr.mxu0 0.0
        %2454 = vmatpush1.msra.mxu0 0.0
        %2455 = vmatprep.subr.mxu0 0.0
        %2456 = vmatpush1.msra.mxu0 0.0
        %2457 = vmatprep.subr.mxu0 0.0
        %2458 = vmatpush1.msra.mxu0 0.0
        %2459 = vmatprep.subr.mxu0 0.0
        %2460 = vmatpush1.msra.mxu0 0.0
        %2461 = vmatprep.subr.mxu0 0.0
        %2462 = vmatpush1.msra.mxu0 0.0
        %2463 = vmatprep.subr.mxu0 0.0
        %2464 = vmatpush1.msra.mxu0 0.0
        %2465 = vmatprep.mubr.f32.mxu0 0.0
        %2466 = vmatmul.mubr.f32.gmra.mrb[0].mxu0 %v2396
        %v2467 = vpop.f32.mrb[0].mxu0
        %v2468 = vadd.f32 0.0, %v2467
        %v2469 = vpop.f32.mrb[0].mxu0
        %2470 = vmatprep.mubr.f32.mxu0 0.0
        %2471 = vmatmul.mubr.f32.gmra.mrb[0].mxu0 %v2399
        %v2472 = vpop.f32.mrb[0].mxu0
        %v2473 = vadd.f32 0.0, %v2472
        %v2474 = vpop.f32.mrb[0].mxu0
        %2475 = vdwg.mxu0
        %v2477 = vsel %vm703, %v2027, 0
        %v2480 = vsel %vm703, %v2100, 0
        %2482 = vmatprep.subr.mxu0 0.0
        %2483 = vmatpush1.msra.mxu0 %v685
        %2484 = vmatprep.subr.mxu0 0.0
        %2485 = vmatpush1.msra.mxu0 0.0
        %2486 = vmatprep.subr.mxu0 0.0
        %2487 = vmatpush1.msra.mxu0 0.0
        %2488 = vmatprep.subr.mxu0 0.0
        %2489 = vmatpush1.msra.mxu0 0.0
        %2490 = vmatprep.subr.mxu0 0.0
        %2491 = vmatpush1.msra.mxu0 0.0
        %2492 = vmatprep.subr.mxu0 0.0
        %2493 = vmatpush1.msra.mxu0 0.0
        %2494 = vmatprep.subr.mxu0 0.0
        %2495 = vmatpush1.msra.mxu0 0.0
        %2496 = vmatprep.subr.mxu0 0.0
        %2497 = vmatpush1.msra.mxu0 0.0
        %2498 = vmatprep.subr.mxu0 0.0
        %2499 = vmatpush1.msra.mxu0 0.0
        %2500 = vmatprep.subr.mxu0 0.0
        %2501 = vmatpush1.msra.mxu0 0.0
        %2502 = vmatprep.subr.mxu0 0.0
        %2503 = vmatpush1.msra.mxu0 0.0
        %2504 = vmatprep.subr.mxu0 0.0
        %2505 = vmatpush1.msra.mxu0 0.0
        %2506 = vmatprep.subr.mxu0 0.0
        %2507 = vmatpush1.msra.mxu0 0.0
        %2508 = vmatprep.subr.mxu0 0.0
        %2509 = vmatpush1.msra.mxu0 0.0
        %2510 = vmatprep.subr.mxu0 0.0
        %2511 = vmatpush1.msra.mxu0 0.0
        %2512 = vmatprep.subr.mxu0 0.0
        %2513 = vmatpush1.msra.mxu0 0.0
        %2514 = vmatprep.subr.mxu0 0.0
        %2515 = vmatpush1.msra.mxu0 0.0
        %2516 = vmatprep.subr.mxu0 0.0
        %2517 = vmatpush1.msra.mxu0 0.0
        %2518 = vmatprep.subr.mxu0 0.0
        %2519 = vmatpush1.msra.mxu0 0.0
        %2520 = vmatprep.subr.mxu0 0.0
        %2521 = vmatpush1.msra.mxu0 0.0
        %2522 = vmatprep.subr.mxu0 0.0
        %2523 = vmatpush1.msra.mxu0 0.0
        %2524 = vmatprep.subr.mxu0 0.0
        %2525 = vmatpush1.msra.mxu0 0.0
        %2526 = vmatprep.subr.mxu0 0.0
        %2527 = vmatpush1.msra.mxu0 0.0
        %2528 = vmatprep.subr.mxu0 0.0
        %2529 = vmatpush1.msra.mxu0 0.0
        %2530 = vmatprep.subr.mxu0 0.0
        %2531 = vmatpush1.msra.mxu0 0.0
        %2532 = vmatprep.subr.mxu0 0.0
        %2533 = vmatpush1.msra.mxu0 0.0
        %2534 = vmatprep.subr.mxu0 0.0
        %2535 = vmatpush1.msra.mxu0 0.0
        %2536 = vmatprep.subr.mxu0 0.0
        %2537 = vmatpush1.msra.mxu0 0.0
        %2538 = vmatprep.subr.mxu0 0.0
        %2539 = vmatpush1.msra.mxu0 0.0
        %2540 = vmatprep.subr.mxu0 0.0
        %2541 = vmatpush1.msra.mxu0 0.0
        %2542 = vmatprep.subr.mxu0 0.0
        %2543 = vmatpush1.msra.mxu0 0.0
        %2544 = vmatprep.subr.mxu0 0.0
        %2545 = vmatpush1.msra.mxu0 0.0
        %2546 = vmatprep.mubr.f32.mxu0 0.0
        %2547 = vmatmul.mubr.f32.gmra.mrb[0].mxu0 %v2477
        %v2548 = vpop.f32.mrb[0].mxu0
        %v2549 = vadd.f32 0.0, %v2548
        %v2550 = vpop.f32.mrb[0].mxu0
        %2551 = vmatprep.mubr.f32.mxu0 0.0
        %2552 = vmatmul.mubr.f32.gmra.mrb[0].mxu0 %v2480
        %v2553 = vpop.f32.mrb[0].mxu0
        %v2554 = vadd.f32 0.0, %v2553
        %v2555 = vpop.f32.mrb[0].mxu0
        %2556 = vdwg.mxu0
        %v2558 = vsel %vm703, %v2173, 0
        %v2561 = vsel %vm703, %v2246, 0
        %2563 = vmatprep.subr.mxu0 0.0
        %2564 = vmatpush1.msra.mxu0 %v686
        %2565 = vmatprep.subr.mxu0 0.0
        %2566 = vmatpush1.msra.mxu0 0.0
        %2567 = vmatprep.subr.mxu0 0.0
        %2568 = vmatpush1.msra.mxu0 0.0
        %2569 = vmatprep.subr.mxu0 0.0
        %2570 = vmatpush1.msra.mxu0 0.0
        %2571 = vmatprep.subr.mxu0 0.0
        %2572 = vmatpush1.msra.mxu0 0.0
        %2573 = vmatprep.subr.mxu0 0.0
        %2574 = vmatpush1.msra.mxu0 0.0
        %2575 = vmatprep.subr.mxu0 0.0
        %2576 = vmatpush1.msra.mxu0 0.0
        %2577 = vmatprep.subr.mxu0 0.0
        %2578 = vmatpush1.msra.mxu0 0.0
        %2579 = vmatprep.subr.mxu0 0.0
        %2580 = vmatpush1.msra.mxu0 0.0
        %2581 = vmatprep.subr.mxu0 0.0
        %2582 = vmatpush1.msra.mxu0 0.0
        %2583 = vmatprep.subr.mxu0 0.0
        %2584 = vmatpush1.msra.mxu0 0.0
        %2585 = vmatprep.subr.mxu0 0.0
        %2586 = vmatpush1.msra.mxu0 0.0
        %2587 = vmatprep.subr.mxu0 0.0
        %2588 = vmatpush1.msra.mxu0 0.0
        %2589 = vmatprep.subr.mxu0 0.0
        %2590 = vmatpush1.msra.mxu0 0.0
        %2591 = vmatprep.subr.mxu0 0.0
        %2592 = vmatpush1.msra.mxu0 0.0
        %2593 = vmatprep.subr.mxu0 0.0
        %2594 = vmatpush1.msra.mxu0 0.0
        %2595 = vmatprep.subr.mxu0 0.0
        %2596 = vmatpush1.msra.mxu0 0.0
        %2597 = vmatprep.subr.mxu0 0.0
        %2598 = vmatpush1.msra.mxu0 0.0
        %2599 = vmatprep.subr.mxu0 0.0
        %2600 = vmatpush1.msra.mxu0 0.0
        %2601 = vmatprep.subr.mxu0 0.0
        %2602 = vmatpush1.msra.mxu0 0.0
        %2603 = vmatprep.subr.mxu0 0.0
        %2604 = vmatpush1.msra.mxu0 0.0
        %2605 = vmatprep.subr.mxu0 0.0
        %2606 = vmatpush1.msra.mxu0 0.0
        %2607 = vmatprep.subr.mxu0 0.0
        %2608 = vmatpush1.msra.mxu0 0.0
        %2609 = vmatprep.subr.mxu0 0.0
        %2610 = vmatpush1.msra.mxu0 0.0
        %2611 = vmatprep.subr.mxu0 0.0
        %2612 = vmatpush1.msra.mxu0 0.0
        %2613 = vmatprep.subr.mxu0 0.0
        %2614 = vmatpush1.msra.mxu0 0.0
        %2615 = vmatprep.subr.mxu0 0.0
        %2616 = vmatpush1.msra.mxu0 0.0
        %2617 = vmatprep.subr.mxu0 0.0
        %2618 = vmatpush1.msra.mxu0 0.0
        %2619 = vmatprep.subr.mxu0 0.0
        %2620 = vmatpush1.msra.mxu0 0.0
        %2621 = vmatprep.subr.mxu0 0.0
        %2622 = vmatpush1.msra.mxu0 0.0
        %2623 = vmatprep.subr.mxu0 0.0
        %2624 = vmatpush1.msra.mxu0 0.0
        %2625 = vmatprep.subr.mxu0 0.0
        %2626 = vmatpush1.msra.mxu0 0.0
        %2627 = vmatprep.mubr.f32.mxu0 0.0
        %2628 = vmatmul.mubr.f32.gmra.mrb[0].mxu0 %v2558
        %v2629 = vpop.f32.mrb[0].mxu0
        %v2630 = vadd.f32 0.0, %v2629
        %v2631 = vpop.f32.mrb[0].mxu0
        %2632 = vmatprep.mubr.f32.mxu0 0.0
        %2633 = vmatmul.mubr.f32.gmra.mrb[0].mxu0 %v2561
        %v2634 = vpop.f32.mrb[0].mxu0
        %v2635 = vadd.f32 0.0, %v2634
        %v2636 = vpop.f32.mrb[0].mxu0
        %2637 = vdwg.mxu0
        %v2639 = vsel %vm703, %v2319, 0
        %v2642 = vsel %vm703, %v2392, 0
        %2644 = vmatprep.subr.mxu0 0.0
        %2645 = vmatpush1.msra.mxu0 %v687
        %2646 = vmatprep.subr.mxu0 0.0
        %2647 = vmatpush1.msra.mxu0 0.0
        %2648 = vmatprep.subr.mxu0 0.0
        %2649 = vmatpush1.msra.mxu0 0.0
        %2650 = vmatprep.subr.mxu0 0.0
        %2651 = vmatpush1.msra.mxu0 0.0
        %2652 = vmatprep.subr.mxu0 0.0
        %2653 = vmatpush1.msra.mxu0 0.0
        %2654 = vmatprep.subr.mxu0 0.0
        %2655 = vmatpush1.msra.mxu0 0.0
        %2656 = vmatprep.subr.mxu0 0.0
        %2657 = vmatpush1.msra.mxu0 0.0
        %2658 = vmatprep.subr.mxu0 0.0
        %2659 = vmatpush1.msra.mxu0 0.0
        %2660 = vmatprep.subr.mxu0 0.0
        %2661 = vmatpush1.msra.mxu0 0.0
        %2662 = vmatprep.subr.mxu0 0.0
        %2663 = vmatpush1.msra.mxu0 0.0
        %2664 = vmatprep.subr.mxu0 0.0
        %2665 = vmatpush1.msra.mxu0 0.0
        %2666 = vmatprep.subr.mxu0 0.0
        %2667 = vmatpush1.msra.mxu0 0.0
        %2668 = vmatprep.subr.mxu0 0.0
        %2669 = vmatpush1.msra.mxu0 0.0
        %2670 = vmatprep.subr.mxu0 0.0
        %2671 = vmatpush1.msra.mxu0 0.0
        %2672 = vmatprep.subr.mxu0 0.0
        %2673 = vmatpush1.msra.mxu0 0.0
        %2674 = vmatprep.subr.mxu0 0.0
        %2675 = vmatpush1.msra.mxu0 0.0
        %2676 = vmatprep.subr.mxu0 0.0
        %2677 = vmatpush1.msra.mxu0 0.0
        %2678 = vmatprep.subr.mxu0 0.0
        %2679 = vmatpush1.msra.mxu0 0.0
        %2680 = vmatprep.subr.mxu0 0.0
        %2681 = vmatpush1.msra.mxu0 0.0
        %2682 = vmatprep.subr.mxu0 0.0
        %2683 = vmatpush1.msra.mxu0 0.0
        %2684 = vmatprep.subr.mxu0 0.0
        %2685 = vmatpush1.msra.mxu0 0.0
        %2686 = vmatprep.subr.mxu0 0.0
        %2687 = vmatpush1.msra.mxu0 0.0
        %2688 = vmatprep.subr.mxu0 0.0
        %2689 = vmatpush1.msra.mxu0 0.0
        %2690 = vmatprep.subr.mxu0 0.0
        %2691 = vmatpush1.msra.mxu0 0.0
        %2692 = vmatprep.subr.mxu0 0.0
        %2693 = vmatpush1.msra.mxu0 0.0
        %2694 = vmatprep.subr.mxu0 0.0
        %2695 = vmatpush1.msra.mxu0 0.0
        %2696 = vmatprep.subr.mxu0 0.0
        %2697 = vmatpush1.msra.mxu0 0.0
        %2698 = vmatprep.subr.mxu0 0.0
        %2699 = vmatpush1.msra.mxu0 0.0
        %2700 = vmatprep.subr.mxu0 0.0
        %2701 = vmatpush1.msra.mxu0 0.0
        %2702 = vmatprep.subr.mxu0 0.0
        %2703 = vmatpush1.msra.mxu0 0.0
        %2704 = vmatprep.subr.mxu0 0.0
        %2705 = vmatpush1.msra.mxu0 0.0
        %2706 = vmatprep.subr.mxu0 0.0
        %2707 = vmatpush1.msra.mxu0 0.0
        %2708 = vmatprep.mubr.f32.mxu0 0.0
        %2709 = vmatmul.mubr.f32.gmra.mrb[0].mxu0 %v2639
        %v2710 = vpop.f32.mrb[0].mxu0
        %v2711 = vadd.f32 0.0, %v2710
        %v2712 = vpop.f32.mrb[0].mxu0
        %2713 = vmatprep.mubr.f32.mxu0 0.0
        %2714 = vmatmul.mubr.f32.gmra.mrb[0].mxu0 %v2642
        %v2715 = vpop.f32.mrb[0].mxu0
        %v2716 = vadd.f32 0.0, %v2715
        %v2717 = vpop.f32.mrb[0].mxu0
        %2718 = vdwg.mxu0
        %vm2719 = vcmask 261120
        %v2720 = vsel %vm2719, %v2468, 0.0
        %v2721 = vsel %vm2719, %v2549, 0.0
        %v2722 = vadd.f32 %v2720, %v2721
        %v2723 = vsel %vm2719, %v2630, 0.0
        %v2724 = vadd.f32 %v2722, %v2723
        %v2725 = vsel %vm2719, %v2711, 0.0
        %v2726 = vadd.f32 %v2724, %v2725
        %v2727 = vsel %vm2719, %v2473, 0.0
        %v2728 = vsel %vm2719, %v2554, 0.0
        %v2729 = vadd.f32 %v2727, %v2728
        %v2730 = vsel %vm2719, %v2635, 0.0
        %v2731 = vadd.f32 %v2729, %v2730
        %v2732 = vsel %vm2719, %v2716, 0.0
        %v2733 = vadd.f32 %v2731, %v2732
        %v2735 = vlaneseq
        %v2736 = vshrl.u32 %v2735, 7
        %v2737 = vsub.s32 0, %v2736
        %v2738 = vrot.slane %v688, %v2737
        %v2740 = vadd.f32 %v2726, %v2738
        %v2741 = vadd.f32 %v2733, %v2738
        %v2742 = vadd.f32 %v2740, %v679
        %v2743 = vadd.f32 %v2741, %v680
        %v2744 = vsel %vm2719, %v2742, 0.0
        %2745 = vadd.xlane.f32.xlu0 %v2744
        %v2746 = vpop.xlane.xlu0 %2745
        %v2747 = vsel %vm2719, %v2743, 0.0
        %2748 = vadd.xlane.f32.xlu0 %v2747
        %v2749 = vpop.xlane.xlu0 %2748
        %v2750 = vrcp.pop 32.0
        %v2751 = vmul.f32 %v2746, %v2750
        %v2752 = vmul.f32 %v2749, %v2750
        %v2753 = vsub.f32 %v2742, %v2751
        %v2754 = vsub.f32 %v2743, %v2752
        %v2755 = vmul.f32 %v2753, %v2753
        %v2756 = vmul.f32 %v2754, %v2754
        %v2757 = vsel %vm2719, %v2755, 0.0
        %2758 = vadd.xlane.f32.xlu0 %v2757
        %v2759 = vpop.xlane.xlu0 %2758
        %v2760 = vsel %vm2719, %v2756, 0.0
        %2761 = vadd.xlane.f32.xlu0 %v2760
        %v2762 = vpop.xlane.xlu0 %2761
        %v2763 = vmul.f32 %v2759, %v2750
        %v2764 = vmul.f32 %v2762, %v2750
        %v2765 = vadd.f32 %v2763, 1e-05
        %v2766 = vadd.f32 %v2764, 1e-05
        %v2767 = vrsqrt.pop %v2765
        %v2768 = vrsqrt.pop %v2766
        %v2769 = vmul.f32 %v2753, %v2767
        %v2770 = vmul.f32 %v2754, %v2768
        %v2771 = vld [vmem:[%s644] sm:$0x1]
        %v2773 = vlaneseq
        %v2774 = vshrl.u32 %v2773, 7
        %v2775 = vsub.s32 0, %v2774
        %v2776 = vrot.slane %v2771, %v2775
        %v2778 = vmul.f32 %v2769, %v2776
        %v2779 = vmul.f32 %v2770, %v2776
        %v2780 = vld [vmem:[%s647] sm:$0x1]
        %v2782 = vlaneseq
        %v2783 = vshrl.u32 %v2782, 7
        %v2784 = vsub.s32 0, %v2783
        %v2785 = vrot.slane %v2780, %v2784
        %v2787 = vadd.f32 %v2778, %v2785
        %v2788 = vadd.f32 %v2779, %v2785
        %v2789 = vld [vmem:[%s652] sm:$0xff]
        %v2790 = vld [vmem:[%s652 + $0x8] sm:$0xff]
        %v2791 = vld [vmem:[%s652 + $0x10] sm:$0xff]
        %v2792 = vld [vmem:[%s652 + $0x18] sm:$0xff]
        %v2793 = vld [vmem:[%s655] sm:$0x1]
        %v2795 = vlaneseq
        %v2796 = vshrl.u32 %v2795, 7
        %v2797 = vsub.s32 0, %v2796
        %v2798 = vrot.slane %v2793, %v2797
        %v2801 = vsel %vm2719, %v2787, 0
        %v2804 = vsel %vm2719, %v2788, 0
        %2806 = vmatprep.subr.mxu0 0.0
        %2807 = vmatpush1.msra.mxu0 %v2789
        %2808 = vmatprep.subr.mxu0 0.0
        %2809 = vmatpush1.msra.mxu0 %v2790
        %2810 = vmatprep.subr.mxu0 0.0
        %2811 = vmatpush1.msra.mxu0 %v2791
        %2812 = vmatprep.subr.mxu0 0.0
        %2813 = vmatpush1.msra.mxu0 %v2792
        %2814 = vmatprep.subr.mxu0 0.0
        %2815 = vmatpush1.msra.mxu0 0.0
        %2816 = vmatprep.subr.mxu0 0.0
        %2817 = vmatpush1.msra.mxu0 0.0
        %2818 = vmatprep.subr.mxu0 0.0
        %2819 = vmatpush1.msra.mxu0 0.0
        %2820 = vmatprep.subr.mxu0 0.0
        %2821 = vmatpush1.msra.mxu0 0.0
        %2822 = vmatprep.subr.mxu0 0.0
        %2823 = vmatpush1.msra.mxu0 0.0
        %2824 = vmatprep.subr.mxu0 0.0
        %2825 = vmatpush1.msra.mxu0 0.0
        %2826 = vmatprep.subr.mxu0 0.0
        %2827 = vmatpush1.msra.mxu0 0.0
        %2828 = vmatprep.subr.mxu0 0.0
        %2829 = vmatpush1.msra.mxu0 0.0
        %2830 = vmatprep.subr.mxu0 0.0
        %2831 = vmatpush1.msra.mxu0 0.0
        %2832 = vmatprep.subr.mxu0 0.0
        %2833 = vmatpush1.msra.mxu0 0.0
        %2834 = vmatprep.subr.mxu0 0.0
        %2835 = vmatpush1.msra.mxu0 0.0
        %2836 = vmatprep.subr.mxu0 0.0
        %2837 = vmatpush1.msra.mxu0 0.0
        %2838 = vmatprep.subr.mxu0 0.0
        %2839 = vmatpush1.msra.mxu0 0.0
        %2840 = vmatprep.subr.mxu0 0.0
        %2841 = vmatpush1.msra.mxu0 0.0
        %2842 = vmatprep.subr.mxu0 0.0
        %2843 = vmatpush1.msra.mxu0 0.0
        %2844 = vmatprep.subr.mxu0 0.0
        %2845 = vmatpush1.msra.mxu0 0.0
        %2846 = vmatprep.subr.mxu0 0.0
        %2847 = vmatpush1.msra.mxu0 0.0
        %2848 = vmatprep.subr.mxu0 0.0
        %2849 = vmatpush1.msra.mxu0 0.0
        %2850 = vmatprep.subr.mxu0 0.0
        %2851 = vmatpush1.msra.mxu0 0.0
        %2852 = vmatprep.subr.mxu0 0.0
        %2853 = vmatpush1.msra.mxu0 0.0
        %2854 = vmatprep.subr.mxu0 0.0
        %2855 = vmatpush1.msra.mxu0 0.0
        %2856 = vmatprep.subr.mxu0 0.0
        %2857 = vmatpush1.msra.mxu0 0.0
        %2858 = vmatprep.subr.mxu0 0.0
        %2859 = vmatpush1.msra.mxu0 0.0
        %2860 = vmatprep.subr.mxu0 0.0
        %2861 = vmatpush1.msra.mxu0 0.0
        %2862 = vmatprep.subr.mxu0 0.0
        %2863 = vmatpush1.msra.mxu0 0.0
        %2864 = vmatprep.subr.mxu0 0.0
        %2865 = vmatpush1.msra.mxu0 0.0
        %2866 = vmatprep.subr.mxu0 0.0
        %2867 = vmatpush1.msra.mxu0 0.0
        %2868 = vmatprep.subr.mxu0 0.0
        %2869 = vmatpush1.msra.mxu0 0.0
        %2870 = vmatprep.mubr.f32.mxu0 0.0
        %2871 = vmatmul.mubr.f32.gmra.mrb[0].mxu0 %v2801
        %v2872 = vpop.f32.mrb[0].mxu0
        %v2873 = vadd.f32 %v2798, %v2872
        %v2874 = vpop.f32.mrb[0].mxu0
        %2875 = vmatprep.mubr.f32.mxu0 0.0
        %2876 = vmatmul.mubr.f32.gmra.mrb[0].mxu0 %v2804
        %v2877 = vpop.f32.mrb[0].mxu0
        %v2878 = vadd.f32 %v2798, %v2877
        %v2879 = vpop.f32.mrb[0].mxu0
        %2880 = vdwg.mxu0
        %v2881 = vmax.f32 %v2873, 0.0
        %v2882 = vmax.f32 %v2878, 0.0
        %v2883 = vld [vmem:[%s660] sm:$0xff]
        %v2884 = vld [vmem:[%s660 + $0x8] sm:$0xff]
        %v2885 = vld [vmem:[%s660 + $0x10] sm:$0xff]
        %v2886 = vld [vmem:[%s660 + $0x18] sm:$0xff]
        %v2887 = vld [vmem:[%s660 + $0x20] sm:$0xff]
        %v2888 = vld [vmem:[%s660 + $0x28] sm:$0xff]
        %v2889 = vld [vmem:[%s660 + $0x30] sm:$0xff]
        %v2890 = vld [vmem:[%s660 + $0x38] sm:$0xff]
        %v2891 = vld [vmem:[%s660 + $0x40] sm:$0xff]
        %v2892 = vld [vmem:[%s660 + $0x48] sm:$0xff]
        %v2893 = vld [vmem:[%s660 + $0x50] sm:$0xff]
        %v2894 = vld [vmem:[%s660 + $0x58] sm:$0xff]
        %v2895 = vld [vmem:[%s660 + $0x60] sm:$0xff]
        %v2896 = vld [vmem:[%s660 + $0x68] sm:$0xff]
        %v2897 = vld [vmem:[%s660 + $0x70] sm:$0xff]
        %v2898 = vld [vmem:[%s660 + $0x78] sm:$0xff]
        %v2899 = vld [vmem:[%s663] sm:$0x1]
        %v2901 = vlaneseq
        %v2902 = vshrl.u32 %v2901, 7
        %v2903 = vsub.s32 0, %v2902
        %v2904 = vrot.slane %v2899, %v2903
        %2906 = vmatprep.subr.mxu0 0.0
        %2907 = vmatpush1.msra.mxu0 %v2883
        %2908 = vmatprep.subr.mxu0 0.0
        %2909 = vmatpush1.msra.mxu0 %v2884
        %2910 = vmatprep.subr.mxu0 0.0
        %2911 = vmatpush1.msra.mxu0 %v2885
        %2912 = vmatprep.subr.mxu0 0.0
        %2913 = vmatpush1.msra.mxu0 %v2886
        %2914 = vmatprep.subr.mxu0 0.0
        %2915 = vmatpush1.msra.mxu0 %v2887
        %2916 = vmatprep.subr.mxu0 0.0
        %2917 = vmatpush1.msra.mxu0 %v2888
        %2918 = vmatprep.subr.mxu0 0.0
        %2919 = vmatpush1.msra.mxu0 %v2889
        %2920 = vmatprep.subr.mxu0 0.0
        %2921 = vmatpush1.msra.mxu0 %v2890
        %2922 = vmatprep.subr.mxu0 0.0
        %2923 = vmatpush1.msra.mxu0 %v2891
        %2924 = vmatprep.subr.mxu0 0.0
        %2925 = vmatpush1.msra.mxu0 %v2892
        %2926 = vmatprep.subr.mxu0 0.0
        %2927 = vmatpush1.msra.mxu0 %v2893
        %2928 = vmatprep.subr.mxu0 0.0
        %2929 = vmatpush1.msra.mxu0 %v2894
        %2930 = vmatprep.subr.mxu0 0.0
        %2931 = vmatpush1.msra.mxu0 %v2895
        %2932 = vmatprep.subr.mxu0 0.0
        %2933 = vmatpush1.msra.mxu0 %v2896
        %2934 = vmatprep.subr.mxu0 0.0
        %2935 = vmatpush1.msra.mxu0 %v2897
        %2936 = vmatprep.subr.mxu0 0.0
        %2937 = vmatpush1.msra.mxu0 %v2898
        %2938 = vmatprep.subr.mxu0 0.0
        %2939 = vmatpush1.msra.mxu0 0.0
        %2940 = vmatprep.subr.mxu0 0.0
        %2941 = vmatpush1.msra.mxu0 0.0
        %2942 = vmatprep.subr.mxu0 0.0
        %2943 = vmatpush1.msra.mxu0 0.0
        %2944 = vmatprep.subr.mxu0 0.0
        %2945 = vmatpush1.msra.mxu0 0.0
        %2946 = vmatprep.subr.mxu0 0.0
        %2947 = vmatpush1.msra.mxu0 0.0
        %2948 = vmatprep.subr.mxu0 0.0
        %2949 = vmatpush1.msra.mxu0 0.0
        %2950 = vmatprep.subr.mxu0 0.0
        %2951 = vmatpush1.msra.mxu0 0.0
        %2952 = vmatprep.subr.mxu0 0.0
        %2953 = vmatpush1.msra.mxu0 0.0
        %2954 = vmatprep.subr.mxu0 0.0
        %2955 = vmatpush1.msra.mxu0 0.0
        %2956 = vmatprep.subr.mxu0 0.0
        %2957 = vmatpush1.msra.mxu0 0.0
        %2958 = vmatprep.subr.mxu0 0.0
        %2959 = vmatpush1.msra.mxu0 0.0
        %2960 = vmatprep.subr.mxu0 0.0
        %2961 = vmatpush1.msra.mxu0 0.0
        %2962 = vmatprep.subr.mxu0 0.0
        %2963 = vmatpush1.msra.mxu0 0.0
        %2964 = vmatprep.subr.mxu0 0.0
        %2965 = vmatpush1.msra.mxu0 0.0
        %2966 = vmatprep.subr.mxu0 0.0
        %2967 = vmatpush1.msra.mxu0 0.0
        %2968 = vmatprep.subr.mxu0 0.0
        %2969 = vmatpush1.msra.mxu0 0.0
        %2970 = vmatprep.mubr.f32.mxu0 0.0
        %2971 = vmatmul.mubr.f32.gmra.mrb[0].mxu0 %v2881
        %v2972 = vpop.f32.mrb[0].mxu0
        %v2973 = vadd.f32 %v2904, %v2972
        %v2974 = vpop.f32.mrb[0].mxu0
        %2975 = vmatprep.mubr.f32.mxu0 0.0
        %2976 = vmatmul.mubr.f32.gmra.mrb[0].mxu0 %v2882
        %v2977 = vpop.f32.mrb[0].mxu0
        %v2978 = vadd.f32 %v2904, %v2977
        %v2979 = vpop.f32.mrb[0].mxu0
        %2980 = vdwg.mxu0
        %v2981 = vadd.f32 %v2973, %v2787
        %v2982 = vadd.f32 %v2978, %v2788
        %v2983 = vsel %vm2719, %v2981, 0.0
        %2984 = vadd.xlane.f32.xlu0 %v2983
        %v2985 = vpop.xlane.xlu0 %2984
        %v2986 = vsel %vm2719, %v2982, 0.0
        %2987 = vadd.xlane.f32.xlu0 %v2986
        %v2988 = vpop.xlane.xlu0 %2987
        %v2989 = vmul.f32 %v2985, %v2750
        %v2990 = vmul.f32 %v2988, %v2750
        %v2991 = vsub.f32 %v2981, %v2989
        %v2992 = vsub.f32 %v2982, %v2990
        %v2993 = vmul.f32 %v2991, %v2991
        %v2994 = vmul.f32 %v2992, %v2992
        %v2995 = vsel %vm2719, %v2993, 0.0
        %2996 = vadd.xlane.f32.xlu0 %v2995
        %v2997 = vpop.xlane.xlu0 %2996
        %v2998 = vsel %vm2719, %v2994, 0.0
        %2999 = vadd.xlane.f32.xlu0 %v2998
        %v3000 = vpop.xlane.xlu0 %2999
        %v3001 = vmul.f32 %v2997, %v2750
        %v3002 = vmul.f32 %v3000, %v2750
        %v3003 = vadd.f32 %v3001, 1e-05
        %v3004 = vadd.f32 %v3002, 1e-05
        %v3005 = vrsqrt.pop %v3003
        %v3006 = vrsqrt.pop %v3004
        %v3007 = vmul.f32 %v2991, %v3005
        %v3008 = vmul.f32 %v2992, %v3006
        %v3009 = vld [vmem:[%s666] sm:$0x1]
        %v3011 = vlaneseq
        %v3012 = vshrl.u32 %v3011, 7
        %v3013 = vsub.s32 0, %v3012
        %v3014 = vrot.slane %v3009, %v3013
        %v3016 = vmul.f32 %v3007, %v3014
        %v3017 = vmul.f32 %v3008, %v3014
        %v3018 = vld [vmem:[%s669] sm:$0x1]
        %v3020 = vlaneseq
        %v3021 = vshrl.u32 %v3020, 7
        %v3022 = vsub.s32 0, %v3021
        %v3023 = vrot.slane %v3018, %v3022
        %v3025 = vadd.f32 %v3016, %v3023
        %v3026 = vadd.f32 %v3017, %v3023
        %3027 = vst.msk [vmem:[#allocation2] sm:$0xff] %vm2719, %v3025
        %3028 = vst.msk [vmem:[#allocation2 + $0x8] sm:$0xff] %vm2719, %v3026
        // Predicated region
        $region85: #{tpu_custom_call.1} parent=79 // pred_check
          %p3029 = pneg %p420
        $region86: #{tpu_custom_call.1} parent=79 // pred_check_branch
          %3031 = sbr.rel (%p3029) target = $region88
        $region87: #{tpu_custom_call.1} parent=79 // pred_region
          %s3033 = ssub.s32 256, 256
          %3034 = vsyncadd [#allocation3], %s3033
          %s3035 = sshll.u32 [#allocation2], 4
          %s3036 = int_to_ptr.vmem [resolvable:$true] %s3035
          %3041 = dma.vmem_to_hbm [thread:$0]  %s3036, 256, %s15, [#allocation3], 128, 128, 8
        $region88: #{tpu_custom_call.1} parent=79 // pred_fallthru
          _
        // Predicated region
        $region89: #{tpu_custom_call.1} parent=79 // pred_check
          %p3042 = pneg %p420
        $region90: #{tpu_custom_call.1} parent=79 // pred_check_branch
          %3044 = sbr.rel (%p3042) target = $region92
        $region91: #{tpu_custom_call.1} parent=79 // pred_region
          %3045 = dma.done [#allocation3], 256
        $region92: #{tpu_custom_call.1} parent=79 // pred_fallthru
          _
      $region80: #{tpu_custom_call.1} parent=5 // pred_fallthru
        _
      %p3046 = scmp.le.s32.totalorder 2, %s22
      // Predicated region
      $region93: #{tpu_custom_call.1} parent=5 // pred_check
        %p3047 = pneg %p3046
      $region94: #{tpu_custom_call.1} parent=5 // pred_check_branch
        %3049 = sbr.rel (%p3047) target = $region96
      $region95: #{tpu_custom_call.1} parent=5 // pred_region
        %s3050 = ssub.s32 %s22, 2
      $region96: #{tpu_custom_call.1} parent=5 // pred_fallthru
        _
    $region6: #{tpu_custom_call.1} parent=1 // loop_footer
      %s26 = sadd.s32 1, %s22
    $region7: #{tpu_custom_call.1} parent=1 // loop_footer_branch
      %21 = sbr.rel target = $region3
    $region8: #{tpu_custom_call.1} parent=1 // loop_exit
      _
    %3051 = vsyncpa [#allocation3], 1
    %s3052 = scalar_lea.sflag [#allocation3], 1
    %3053 = vsyncpa %s3052, 1

</llo_original>
